<compile_context>
chip_gen: v7x
topology: tpu7x:2x2x1
jax: 0.10.0
libtpu: 0.0.40
codegen_flags: <defaults>
</compile_context>

<pallas_src>
import functools
import math

import jax
import jax.numpy as jnp
from jax.experimental import pallas as pl
from jax.experimental.pallas import tpu as pltpu

NEG = -1e9
LN_EPS = 1e-5


# ------------------------------ in-kernel helpers ------------------------------

def _ln(x, g, b, eps=LN_EPS):
    """LayerNorm over the last axis. x: (S, D) f32; g/b: (1, D) f32."""
    mu = jnp.mean(x, axis=-1, keepdims=True)
    var = jnp.mean((x - mu) ** 2, axis=-1, keepdims=True)
    return (x - mu) * jax.lax.rsqrt(var + eps) * g + b


def _attn(q, k, v, wo, bo, bias, attn_scr, num_heads):
    """Multi-head attention.  q/k/v: (S, D) f32 (already projected), wo: (D, D) bf16,
    bo: (1, D) f32, bias: full (Sq, Sk) f32 additive mask (hoisted out of the head loop),
    attn_scr: (Sq, D) f32 VMEM scratch used as the per-head output accumulator."""
    _, D = q.shape
    hd = D // num_heads
    scale = 1.0 / math.sqrt(hd)
    for h in range(num_heads):                              # static unroll over heads
        sl = slice(h * hd, (h + 1) * hd)
        qh = (q[:, sl] * scale).astype(jnp.bfloat16)
        kh = k[:, sl].astype(jnp.bfloat16)
        vh = v[:, sl].astype(jnp.bfloat16)
        s = jax.lax.dot_general(qh, kh, (((1,), (1,)), ((), ())),
                                preferred_element_type=jnp.float32)   # q @ k^T, f32 acc
        s = s + bias
        s = s - jnp.max(s, axis=-1, keepdims=True)
        p = jnp.exp(s)
        p = p * pl.reciprocal(jnp.sum(p, axis=-1, keepdims=True), approx=True)
        # write at a static lane offset (no concatenate / lane relayout chain)
        attn_scr[:, h * hd:(h + 1) * hd] = jnp.dot(
            p.astype(jnp.bfloat16), vh, preferred_element_type=jnp.float32)
    return jnp.dot(attn_scr[...].astype(jnp.bfloat16), wo,
                   preferred_element_type=jnp.float32) + bo


def _ffn(h, g, b, w1, b1, w2, b2):
    x = _ln(h, g, b)
    y = jnp.dot(x.astype(jnp.bfloat16), w1, preferred_element_type=jnp.float32) + b1
    # TODO(synk): HF mBART uses exact (erf) gelu; tanh-approx gelu kept for robust lowering.
    y = jax.nn.gelu(y)
    y = jnp.dot(y.astype(jnp.bfloat16), w2, preferred_element_type=jnp.float32) + b2
    return h + y


# ------------------------------ fused stack kernels ------------------------------

def _enc_stack_kernel(len_ref, x_ref, emb_g, emb_b,
                      ln1_g, ln1_b, wqkv, bqkv, wo, bo,
                      ln2_g, ln2_b, w1, b1, w2, b2,
                      fin_g, fin_b,
                      o_ref, h_scr, attn_scr, *, num_heads):
    b = pl.program_id(0)
    l = pl.program_id(1)
    num_l = pl.num_programs(1)
    S, D = h_scr.shape

    @pl.when(l == 0)
    def _():  # embedding layernorm once, load activation into resident VMEM scratch
        h_scr[...] = _ln(x_ref[0].astype(jnp.float32), emb_g[...], emb_b[...])

    # key-side padding bias from the per-example length in SMEM (no HBM mask DMA)
    col = jax.lax.broadcasted_iota(jnp.int32, (S, S), 1)
    pad_bias = jnp.where(col < len_ref[b], 0.0, NEG).astype(jnp.float32)

    h = h_scr[...]
    # self-attention (pre-LN, fused QKV)
    x = _ln(h, ln1_g[0], ln1_b[0])
    qkv = jnp.dot(x.astype(jnp.bfloat16), wqkv[0],
                  preferred_element_type=jnp.float32) + bqkv[0]
    h = h + _attn(qkv[:, :D], qkv[:, D:2 * D], qkv[:, 2 * D:],
                  wo[0], bo[0], pad_bias, attn_scr, num_heads)
    # feed-forward (pre-LN)
    h = _ffn(h, ln2_g[0], ln2_b[0], w1[0], b1[0], w2[0], b2[0])
    h_scr[...] = h

    @pl.when(l == num_l - 1)
    def _():  # final layernorm + single writeback per batch element
        o_ref[0] = _ln(h_scr[...], fin_g[...], fin_b[...]).astype(o_ref.dtype)


def _dec_stack_kernel(len_ref, x_ref, enc_ref, emb_g, emb_b,
                      ln1_g, ln1_b, s_wqkv, s_bqkv, s_wo, s_bo,
                      ln2_g, ln2_b, c_wq, c_bq, c_wkv, c_bkv, c_wo, c_bo,
                      ln3_g, ln3_b, w1, b1, w2, b2,
                      fin_g, fin_b,
                      o_ref, h_scr, attn_scr, *, num_heads):
    b = pl.program_id(0)
    l = pl.program_id(1)
    num_l = pl.num_programs(1)
    S, D = h_scr.shape

    @pl.when(l == 0)
    def _():
        h_scr[...] = _ln(x_ref[0].astype(jnp.float32), emb_g[...], emb_b[...])

    # masks built in-kernel (no HBM mask traffic); full (S,S) so the head loop reuses them
    row = jax.lax.broadcasted_iota(jnp.int32, (S, S), 0)
    col = jax.lax.broadcasted_iota(jnp.int32, (S, S), 1)
    causal_bias = jnp.where(col <= row, 0.0, NEG).astype(jnp.float32)
    pad_bias = jnp.where(col < len_ref[b], 0.0, NEG).astype(jnp.float32)

    enc = enc_ref[0].astype(jnp.float32)

    h = h_scr[...]
    # decoder self-attention (pre-LN, fused QKV, causal; no decoder padding mask -> HF default)
    x = _ln(h, ln1_g[0], ln1_b[0])
    qkv = jnp.dot(x.astype(jnp.bfloat16), s_wqkv[0],
                  preferred_element_type=jnp.float32) + s_bqkv[0]
    h = h + _attn(qkv[:, :D], qkv[:, D:2 * D], qkv[:, 2 * D:],
                  s_wo[0], s_bo[0], causal_bias, attn_scr, num_heads)
    # cross-attention (pre-LN, fused KV on encoder states, encoder padding mask)
    x = _ln(h, ln2_g[0], ln2_b[0])
    q = jnp.dot(x.astype(jnp.bfloat16), c_wq[0],
                preferred_element_type=jnp.float32) + c_bq[0]
    kv = jnp.dot(enc.astype(jnp.bfloat16), c_wkv[0],
                 preferred_element_type=jnp.float32) + c_bkv[0]
    h = h + _attn(q, kv[:, :D], kv[:, D:],
                  c_wo[0], c_bo[0], pad_bias, attn_scr, num_heads)
    # feed-forward (pre-LN)
    h = _ffn(h, ln3_g[0], ln3_b[0], w1[0], b1[0], w2[0], b2[0])
    h_scr[...] = h

    @pl.when(l == num_l - 1)
    def _():
        o_ref[0] = _ln(h_scr[...], fin_g[...], fin_b[...]).astype(o_ref.dtype)


# ------------------------------ pallas_call wrappers ------------------------------

def _act_spec(S, D):
    return pl.BlockSpec((1, S, D), lambda b, l, lens: (b, 0, 0))


def _layer_spec(arr):
    nd = arr.ndim
    return pl.BlockSpec((1,) + arr.shape[1:], lambda b, l, lens: (l,) + (0,) * (nd - 1))


def _shared_spec(arr):
    nd = arr.ndim
    return pl.BlockSpec(arr.shape, lambda b, l, lens: (0,) * nd)


def encoder_stack(x_emb, lengths, p, *, num_heads):
    B, S, D = x_emb.shape
    L = p["ln1_g"].shape[0]
    layer_keys = ["ln1_g", "ln1_b", "wqkv", "bqkv", "wo", "bo",
                  "ln2_g", "ln2_b", "w1", "b1", "w2", "b2"]
    layer_arrs = [p[k] for k in layer_keys]
    in_specs = ([_act_spec(S, D), _shared_spec(p["emb_g"]), _shared_spec(p["emb_b"])]
                + [_layer_spec(a) for a in layer_arrs]
                + [_shared_spec(p["fin_g"]), _shared_spec(p["fin_b"])])
    return pl.pallas_call(
        functools.partial(_enc_stack_kernel, num_heads=num_heads),
        out_shape=jax.ShapeDtypeStruct((B, S, D), jnp.float32),
        grid_spec=pltpu.PrefetchScalarGridSpec(
            num_scalar_prefetch=1,
            grid=(B, L),
            in_specs=in_specs,
            out_specs=_act_spec(S, D),
            scratch_shapes=[pltpu.VMEM((S, D), jnp.float32),    # resident hidden state
                            pltpu.VMEM((S, D), jnp.float32)]),  # per-head attn accumulator
        compiler_params=pltpu.CompilerParams(
            dimension_semantics=("parallel", "arbitrary")),
    )(lengths, x_emb, p["emb_g"], p["emb_b"], *layer_arrs, p["fin_g"], p["fin_b"])


def decoder_stack(x_emb, enc_h, lengths, p, *, num_heads):
    B, S, D = x_emb.shape
    L = p["ln1_g"].shape[0]
    layer_keys = ["ln1_g", "ln1_b", "s_wqkv", "s_bqkv", "s_wo", "s_bo",
                  "ln2_g", "ln2_b", "c_wq", "c_bq", "c_wkv", "c_bkv", "c_wo", "c_bo",
                  "ln3_g", "ln3_b", "w1", "b1", "w2", "b2"]
    layer_arrs = [p[k] for k in layer_keys]
    in_specs = ([_act_spec(S, D), _act_spec(S, D),
                 _shared_spec(p["emb_g"]), _shared_spec(p["emb_b"])]
                + [_layer_spec(a) for a in layer_arrs]
                + [_shared_spec(p["fin_g"]), _shared_spec(p["fin_b"])])
    return pl.pallas_call(
        functools.partial(_dec_stack_kernel, num_heads=num_heads),
        out_shape=jax.ShapeDtypeStruct((B, S, D), jnp.float32),
        grid_spec=pltpu.PrefetchScalarGridSpec(
            num_scalar_prefetch=1,
            grid=(B, L),
            in_specs=in_specs,
            out_specs=_act_spec(S, D),
            scratch_shapes=[pltpu.VMEM((S, D), jnp.float32),
                            pltpu.VMEM((S, D), jnp.float32)]),
        compiler_params=pltpu.CompilerParams(
            dimension_semantics=("parallel", "arbitrary")),
    )(lengths, x_emb, enc_h, p["emb_g"], p["emb_b"], *layer_arrs,
      p["fin_g"], p["fin_b"])


# --------------------------------- model forward ---------------------------------

def shift_tokens_right(input_ids, pad_token_id):
    """mBART shift: last non-pad token (LID/eos) wraps to position 0."""
    idx_of_eos = jnp.sum((input_ids != pad_token_id).astype(jnp.int32), axis=1) - 1
    dec_start = jnp.take_along_axis(input_ids, idx_of_eos[:, None], axis=1)  # (B, 1)
    prev = jnp.zeros_like(input_ids)
    prev = prev.at[:, 1:].set(input_ids[:, :-1])
    prev = prev.at[:, 0:1].set(dec_start)
    return prev


def mbart_forward(params, input_ids, attention_mask, labels, cfg):
    B, S = input_ids.shape
    D, H = cfg["d_model"], cfg["heads"]

    dec_ids = shift_tokens_right(input_ids, cfg["pad_id"])

    emb_scale = math.sqrt(D)                    # scale_embedding=True in mbart-large-50
    pos = jnp.arange(S) + 2                     # learned positional embedding offset of 2
    # TODO(synk): assumes right-padded attention_mask (standard HF batches); arbitrary
    # hole masks would need the full mask streamed instead of a length scalar.
    lengths = jnp.sum(attention_mask, axis=1).astype(jnp.int32)

    # -------- encoder: embedding gather + pos add in XLA; whole stack is ONE Pallas call --------
    enc_emb = params["embed_tokens"][input_ids] * emb_scale + params["enc_pos"][pos][None]
    enc_h = encoder_stack(enc_emb, lengths, params["encoder"], num_heads=H)

    # ------------------------------------ decoder ------------------------------------
    dec_emb = params["embed_tokens"][dec_ids] * emb_scale + params["dec_pos"][pos][None]
    dec_h = decoder_stack(dec_emb, enc_h, lengths, params["decoder"], num_heads=H)

    # --------- classification (regression) head: decoder state at last EOS token ---------
    # Tiny (B x D x 1) matmuls stay in plain XLA (a Pallas kernel there is pure overhead).
    eos_mask = input_ids == cfg["eos_id"]
    last_eos = jnp.argmax(jnp.where(eos_mask, jnp.arange(S)[None, :], -1), axis=1)
    sent = dec_h[jnp.arange(B), last_eos]                               # (B, D)
    x = jnp.tanh(sent @ params["cls_dense"]["w"] + params["cls_dense"]["b"])
    logits = x @ params["cls_out"]["w"] + params["cls_out"]["b"]        # (B, num_labels)

    # num_labels == 1 -> HF regression path: MSE loss
    loss = jnp.mean((logits.reshape(-1) - labels.reshape(-1).astype(jnp.float32)) ** 2)
    return loss, logits


# ---------------------------------- parameter init ----------------------------------

def init_params(key, cfg):
    D, F, V = cfg["d_model"], cfg["ffn"], cfg["vocab"]
    Le, Ld = cfg["enc_layers"], cfg["dec_layers"]
    keys = iter(jax.random.split(key, 64))

    def nrm(shape, dtype=jnp.float32):
        return (jax.random.normal(next(keys), shape, jnp.float32) * 0.02).astype(dtype)

    def ones(shape):
        return jnp.ones(shape, jnp.float32)

    def zeros(shape):
        return jnp.zeros(shape, jnp.float32)

    # matmul weights stored in bf16 (MXU-native); biases/LN params stay f32
    def enc_stack_params(L):
        return {
            "emb_g": ones((1, D)), "emb_b": zeros((1, D)),
            "ln1_g": ones((L, 1, D)), "ln1_b": zeros((L, 1, D)),
            "wqkv": nrm((L, D, 3 * D), jnp.bfloat16), "bqkv": zeros((L, 1, 3 * D)),
            "wo": nrm((L, D, D), jnp.bfloat16), "bo": zeros((L, 1, D)),
            "ln2_g": ones((L, 1, D)), "ln2_b": zeros((L, 1, D)),
            "w1": nrm((L, D, F), jnp.bfloat16), "b1": zeros((L, 1, F)),
            "w2": nrm((L, F, D), jnp.bfloat16), "b2": zeros((L, 1, D)),
            "fin_g": ones((1, D)), "fin_b": zeros((1, D)),
        }

    def dec_stack_params(L):
        return {
            "emb_g": ones((1, D)), "emb_b": zeros((1, D)),
            "ln1_g": ones((L, 1, D)), "ln1_b": zeros((L, 1, D)),
            "s_wqkv": nrm((L, D, 3 * D), jnp.bfloat16), "s_bqkv": zeros((L, 1, 3 * D)),
            "s_wo": nrm((L, D, D), jnp.bfloat16), "s_bo": zeros((L, 1, D)),
            "ln2_g": ones((L, 1, D)), "ln2_b": zeros((L, 1, D)),
            "c_wq": nrm((L, D, D), jnp.bfloat16), "c_bq": zeros((L, 1, D)),
            "c_wkv": nrm((L, D, 2 * D), jnp.bfloat16), "c_bkv": zeros((L, 1, 2 * D)),
            "c_wo": nrm((L, D, D), jnp.bfloat16), "c_bo": zeros((L, 1, D)),
            "ln3_g": ones((L, 1, D)), "ln3_b": zeros((L, 1, D)),
            "w1": nrm((L, D, F), jnp.bfloat16), "b1": zeros((L, 1, F)),
            "w2": nrm((L, F, D), jnp.bfloat16), "b2": zeros((L, 1, D)),
            "fin_g": ones((1, D)), "fin_b": zeros((1, D)),
        }

    return {
        "embed_tokens": nrm((V, D)),                     # shared enc/dec token embedding
        "enc_pos": nrm((cfg["max_pos"] + 2, D)),
        "dec_pos": nrm((cfg["max_pos"] + 2, D)),
        "encoder": enc_stack_params(Le),
        "decoder": dec_stack_params(Ld),
        "cls_dense": {"w": nrm((D, D)), "b": zeros((D,))},
        "cls_out": {"w": nrm((D, cfg["num_labels"])),
                    "b": zeros((cfg["num_labels"],))},
    }


# --------------------------------------- main ---------------------------------------

if __name__ == "__main__":
    cfg = dict(vocab=64, d_model=32, heads=4, ffn=64, enc_layers=2, dec_layers=2,
               max_pos=32, pad_id=1, eos_id=2, num_labels=1)

    key = jax.random.PRNGKey(0)
    k_param, k_ids, k_lbl = jax.random.split(key, 3)

    params = init_params(k_param, cfg)

    B, S = 2, 8
    input_ids = jax.random.randint(k_ids, (B, S), 3, cfg["vocab"], dtype=jnp.int32)
    input_ids = input_ids.at[:, -1].set(cfg["eos_id"])          # EOS at sequence end
    attention_mask = jnp.ones((B, S), jnp.int32)
    labels = jax.random.normal(k_lbl, (B,), jnp.float32)        # regression targets

    # TODO(synk): pretrained facebook/mbart-large-50 weights are not loaded; synthetic init only.
    fwd = jax.jit(lambda p, ids, mask, lbl: mbart_forward(p, ids, mask, lbl, cfg))
    loss, logits = fwd(params, input_ids, attention_mask, labels)
    jax.block_until_ready((loss, logits))

    assert logits.shape == (B, cfg["num_labels"])
    assert loss.shape == ()
    assert bool(jnp.isfinite(loss))
    print("KERNEL_OK")
</pallas_src>

<mosaic_0001>
module attributes {stable_mosaic.version = 11 : i64} {
  func.func @_enc_stack_kernel(%arg0: i32, %arg1: i32, %arg2: memref<2xi32, #tpu.memory_space<smem>>, %arg3: memref<1x8x32xf32, #tpu.memory_space<vmem>>, %arg4: memref<1x32xf32, #tpu.memory_space<vmem>>, %arg5: memref<1x32xf32, #tpu.memory_space<vmem>>, %arg6: memref<1x1x32xf32, #tpu.memory_space<vmem>>, %arg7: memref<1x1x32xf32, #tpu.memory_space<vmem>>, %arg8: memref<1x32x96xbf16, #tpu.memory_space<vmem>>, %arg9: memref<1x1x96xf32, #tpu.memory_space<vmem>>, %arg10: memref<1x32x32xbf16, #tpu.memory_space<vmem>>, %arg11: memref<1x1x32xf32, #tpu.memory_space<vmem>>, %arg12: memref<1x1x32xf32, #tpu.memory_space<vmem>>, %arg13: memref<1x1x32xf32, #tpu.memory_space<vmem>>, %arg14: memref<1x32x64xbf16, #tpu.memory_space<vmem>>, %arg15: memref<1x1x64xf32, #tpu.memory_space<vmem>>, %arg16: memref<1x64x32xbf16, #tpu.memory_space<vmem>>, %arg17: memref<1x1x32xf32, #tpu.memory_space<vmem>>, %arg18: memref<1x32xf32, #tpu.memory_space<vmem>>, %arg19: memref<1x32xf32, #tpu.memory_space<vmem>>, %arg20: memref<1x8x32xf32, #tpu.memory_space<vmem>>, %arg21: memref<8x32xf32, #tpu.memory_space<vmem>>, %arg22: memref<8x32xf32, #tpu.memory_space<vmem>>) attributes {dimension_semantics = [#tpu.dimension_semantics<parallel>, #tpu.dimension_semantics<arbitrary>], iteration_bounds = array<i64: 2, 2>, scalar_prefetch = 1 : i64, scratch_operands = 2 : i64, tpu.core_type = #tpu.core_type<tc>, window_params = [{transform_indices = @transform_0, window_bounds = array<i64: 1, 8, 32>}, {pipeline_mode = #tpu.pipeline_mode<synchronous>, transform_indices = @transform_1, window_bounds = array<i64: 1, 32>}, {pipeline_mode = #tpu.pipeline_mode<synchronous>, transform_indices = @transform_2, window_bounds = array<i64: 1, 32>}, {transform_indices = @transform_3, window_bounds = array<i64: 1, 1, 32>}, {transform_indices = @transform_4, window_bounds = array<i64: 1, 1, 32>}, {transform_indices = @transform_5, window_bounds = array<i64: 1, 32, 96>}, {transform_indices = @transform_6, window_bounds = array<i64: 1, 1, 96>}, {transform_indices = @transform_7, window_bounds = array<i64: 1, 32, 32>}, {transform_indices = @transform_8, window_bounds = array<i64: 1, 1, 32>}, {transform_indices = @transform_9, window_bounds = array<i64: 1, 1, 32>}, {transform_indices = @transform_10, window_bounds = array<i64: 1, 1, 32>}, {transform_indices = @transform_11, window_bounds = array<i64: 1, 32, 64>}, {transform_indices = @transform_12, window_bounds = array<i64: 1, 1, 64>}, {transform_indices = @transform_13, window_bounds = array<i64: 1, 64, 32>}, {transform_indices = @transform_14, window_bounds = array<i64: 1, 1, 32>}, {pipeline_mode = #tpu.pipeline_mode<synchronous>, transform_indices = @transform_15, window_bounds = array<i64: 1, 32>}, {pipeline_mode = #tpu.pipeline_mode<synchronous>, transform_indices = @transform_16, window_bounds = array<i64: 1, 32>}, {transform_indices = @transform_17, window_bounds = array<i64: 1, 8, 32>}]} {
    %c0_i32 = arith.constant 0 : i32
    %0 = arith.cmpi eq, %arg1, %c0_i32 : i32
    %1 = arith.extui %0 : i1 to i32
    %c0_i32_0 = arith.constant 0 : i32
    %2 = arith.cmpi ne, %1, %c0_i32_0 : i32
    scf.if %2 {
      %c0_87 = arith.constant 0 : index
      %c0_88 = arith.constant 0 : index
      %c0_89 = arith.constant 0 : index
      %211 = vector.load %arg3[%c0_87, %c0_88, %c0_89] : memref<1x8x32xf32, #tpu.memory_space<vmem>>, vector<1x8x32xf32>
      %212 = vector.shape_cast %211 : vector<1x8x32xf32> to vector<8x32xf32>
      %c0_90 = arith.constant 0 : index
      %c0_91 = arith.constant 0 : index
      %213 = vector.load %arg4[%c0_90, %c0_91] : memref<1x32xf32, #tpu.memory_space<vmem>>, vector<1x32xf32>
      %c0_92 = arith.constant 0 : index
      %c0_93 = arith.constant 0 : index
      %214 = vector.load %arg5[%c0_92, %c0_93] : memref<1x32xf32, #tpu.memory_space<vmem>>, vector<1x32xf32>
      %cst_94 = arith.constant dense<0.000000e+00> : vector<8xf32>
      %215 = vector.multi_reduction <add>, %212, %cst_94 [1] : vector<8x32xf32> to vector<8xf32>
      %216 = vector.shape_cast %215 : vector<8xf32> to vector<8x1xf32>
      %cst_95 = arith.constant 3.200000e+01 : f32
      %217 = vector.broadcast %cst_95 : f32 to vector<8x1xf32>
      %218 = arith.divf %216, %217 : vector<8x1xf32>
      %219 = vector.broadcast %218 : vector<8x1xf32> to vector<8x32xf32>
      %220 = arith.subf %212, %219 : vector<8x32xf32>
      %221 = arith.mulf %220, %220 : vector<8x32xf32>
      %cst_96 = arith.constant dense<0.000000e+00> : vector<8xf32>
      %222 = vector.multi_reduction <add>, %221, %cst_96 [1] : vector<8x32xf32> to vector<8xf32>
      %223 = vector.shape_cast %222 : vector<8xf32> to vector<8x1xf32>
      %cst_97 = arith.constant 3.200000e+01 : f32
      %224 = vector.broadcast %cst_97 : f32 to vector<8x1xf32>
      %225 = arith.divf %223, %224 : vector<8x1xf32>
      %226 = vector.broadcast %218 : vector<8x1xf32> to vector<8x32xf32>
      %227 = arith.subf %212, %226 : vector<8x32xf32>
      %cst_98 = arith.constant 9.99999974E-6 : f32
      %228 = vector.broadcast %cst_98 : f32 to vector<8x1xf32>
      %229 = arith.addf %225, %228 : vector<8x1xf32>
      %230 = math.rsqrt %229 : vector<8x1xf32>
      %231 = vector.broadcast %230 : vector<8x1xf32> to vector<8x32xf32>
      %232 = arith.mulf %227, %231 : vector<8x32xf32>
      %233 = vector.broadcast %213 : vector<1x32xf32> to vector<8x32xf32>
      %234 = arith.mulf %232, %233 : vector<8x32xf32>
      %235 = vector.broadcast %214 : vector<1x32xf32> to vector<8x32xf32>
      %236 = arith.addf %234, %235 : vector<8x32xf32>
      %c0_99 = arith.constant 0 : index
      %c0_100 = arith.constant 0 : index
      %237 = vector.load %arg21[%c0_99, %c0_100] : memref<8x32xf32, #tpu.memory_space<vmem>>, vector<8x32xf32>
      tpu.vector_store %arg21[%c0_99, %c0_100], %236 {strides = array<i32>} : memref<8x32xf32, #tpu.memory_space<vmem>>, vector<8x32xf32>,
    } else {
    }
    %3 = tpu.iota {dimensions = array<i32: 1>} : vector<8x8xi32>
    %4 = arith.index_cast %arg0 : i32 to index
    %5 = memref.load %arg2[%4] : memref<2xi32, #tpu.memory_space<smem>>
    %6 = vector.broadcast %5 : i32 to vector<8x8xi32>
    %7 = arith.cmpi slt, %3, %6 : vector<8x8xi32>
    %cst = arith.constant 0.000000e+00 : f32
    %cst_1 = arith.constant -1.000000e+09 : f32
    %8 = vector.broadcast %cst : f32 to vector<8x8xf32>
    %9 = vector.broadcast %cst_1 : f32 to vector<8x8xf32>
    %10 = arith.select %7, %8, %9 : vector<8x8xi1>, vector<8x8xf32>
    %c0 = arith.constant 0 : index
    %c0_2 = arith.constant 0 : index
    %11 = vector.load %arg21[%c0, %c0_2] : memref<8x32xf32, #tpu.memory_space<vmem>>, vector<8x32xf32>
    %c0_3 = arith.constant 0 : index
    %c0_4 = arith.constant 0 : index
    %c0_5 = arith.constant 0 : index
    %12 = vector.load %arg6[%c0_3, %c0_4, %c0_5] : memref<1x1x32xf32, #tpu.memory_space<vmem>>, vector<1x1x32xf32>
    %13 = vector.shape_cast %12 : vector<1x1x32xf32> to vector<1x32xf32>
    %c0_6 = arith.constant 0 : index
    %c0_7 = arith.constant 0 : index
    %c0_8 = arith.constant 0 : index
    %14 = vector.load %arg7[%c0_6, %c0_7, %c0_8] : memref<1x1x32xf32, #tpu.memory_space<vmem>>, vector<1x1x32xf32>
    %15 = vector.shape_cast %14 : vector<1x1x32xf32> to vector<1x32xf32>
    %cst_9 = arith.constant dense<0.000000e+00> : vector<8xf32>
    %16 = vector.multi_reduction <add>, %11, %cst_9 [1] : vector<8x32xf32> to vector<8xf32>
    %17 = vector.shape_cast %16 : vector<8xf32> to vector<8x1xf32>
    %cst_10 = arith.constant 3.200000e+01 : f32
    %18 = vector.broadcast %cst_10 : f32 to vector<8x1xf32>
    %19 = arith.divf %17, %18 : vector<8x1xf32>
    %20 = vector.broadcast %19 : vector<8x1xf32> to vector<8x32xf32>
    %21 = arith.subf %11, %20 : vector<8x32xf32>
    %22 = arith.mulf %21, %21 : vector<8x32xf32>
    %cst_11 = arith.constant dense<0.000000e+00> : vector<8xf32>
    %23 = vector.multi_reduction <add>, %22, %cst_11 [1] : vector<8x32xf32> to vector<8xf32>
    %24 = vector.shape_cast %23 : vector<8xf32> to vector<8x1xf32>
    %cst_12 = arith.constant 3.200000e+01 : f32
    %25 = vector.broadcast %cst_12 : f32 to vector<8x1xf32>
    %26 = arith.divf %24, %25 : vector<8x1xf32>
    %27 = vector.broadcast %19 : vector<8x1xf32> to vector<8x32xf32>
    %28 = arith.subf %11, %27 : vector<8x32xf32>
    %cst_13 = arith.constant 9.99999974E-6 : f32
    %29 = vector.broadcast %cst_13 : f32 to vector<8x1xf32>
    %30 = arith.addf %26, %29 : vector<8x1xf32>
    %31 = math.rsqrt %30 : vector<8x1xf32>
    %32 = vector.broadcast %31 : vector<8x1xf32> to vector<8x32xf32>
    %33 = arith.mulf %28, %32 : vector<8x32xf32>
    %34 = vector.broadcast %13 : vector<1x32xf32> to vector<8x32xf32>
    %35 = arith.mulf %33, %34 : vector<8x32xf32>
    %36 = vector.broadcast %15 : vector<1x32xf32> to vector<8x32xf32>
    %37 = arith.addf %35, %36 : vector<8x32xf32>
    %38 = arith.truncf %37 : vector<8x32xf32> to vector<8x32xbf16>
    %c0_14 = arith.constant 0 : index
    %c0_15 = arith.constant 0 : index
    %c0_16 = arith.constant 0 : index
    %39 = vector.load %arg8[%c0_14, %c0_15, %c0_16] : memref<1x32x96xbf16, #tpu.memory_space<vmem>>, vector<1x32x96xbf16>
    %40 = vector.shape_cast %39 : vector<1x32x96xbf16> to vector<32x96xbf16>
    %cst_17 = arith.constant dense<0.000000e+00> : vector<8x96xf32>
    %41 = tpu.matmul %38, %40, %cst_17 {dimension_numbers = #tpu.dot_dimension_numbers<[1], [0], [0], [1], [0, 0, 1, 1], [], []>} : vector<8x32xbf16>, vector<32x96xbf16>, vector<8x96xf32> -> vector<8x96xf32>
    %c0_18 = arith.constant 0 : index
    %c0_19 = arith.constant 0 : index
    %c0_20 = arith.constant 0 : index
    %42 = vector.load %arg9[%c0_18, %c0_19, %c0_20] : memref<1x1x96xf32, #tpu.memory_space<vmem>>, vector<1x1x96xf32>
    %43 = vector.shape_cast %42 : vector<1x1x96xf32> to vector<1x96xf32>
    %44 = vector.broadcast %43 : vector<1x96xf32> to vector<8x96xf32>
    %45 = arith.addf %41, %44 : vector<8x96xf32>
    %46 = vector.extract_strided_slice %45 {offsets = [0, 0], sizes = [8, 32], strides = [1, 1]} : vector<8x96xf32> to vector<8x32xf32>
    %47 = vector.extract_strided_slice %45 {offsets = [0, 32], sizes = [8, 32], strides = [1, 1]} : vector<8x96xf32> to vector<8x32xf32>
    %48 = vector.extract_strided_slice %45 {offsets = [0, 64], sizes = [8, 32], strides = [1, 1]} : vector<8x96xf32> to vector<8x32xf32>
    %c0_21 = arith.constant 0 : index
    %c0_22 = arith.constant 0 : index
    %c0_23 = arith.constant 0 : index
    %49 = vector.load %arg10[%c0_21, %c0_22, %c0_23] : memref<1x32x32xbf16, #tpu.memory_space<vmem>>, vector<1x32x32xbf16>
    %50 = vector.shape_cast %49 : vector<1x32x32xbf16> to vector<32x32xbf16>
    %c0_24 = arith.constant 0 : index
    %c0_25 = arith.constant 0 : index
    %c0_26 = arith.constant 0 : index
    %51 = vector.load %arg11[%c0_24, %c0_25, %c0_26] : memref<1x1x32xf32, #tpu.memory_space<vmem>>, vector<1x1x32xf32>
    %52 = vector.shape_cast %51 : vector<1x1x32xf32> to vector<1x32xf32>
    %53 = vector.extract_strided_slice %46 {offsets = [0, 0], sizes = [8, 8], strides = [1, 1]} : vector<8x32xf32> to vector<8x8xf32>
    %cst_27 = arith.constant 0.353553385 : f32
    %54 = vector.broadcast %cst_27 : f32 to vector<8x8xf32>
    %55 = arith.mulf %53, %54 : vector<8x8xf32>
    %56 = arith.truncf %55 : vector<8x8xf32> to vector<8x8xbf16>
    %57 = vector.extract_strided_slice %47 {offsets = [0, 0], sizes = [8, 8], strides = [1, 1]} : vector<8x32xf32> to vector<8x8xf32>
    %58 = arith.truncf %57 : vector<8x8xf32> to vector<8x8xbf16>
    %59 = vector.extract_strided_slice %48 {offsets = [0, 0], sizes = [8, 8], strides = [1, 1]} : vector<8x32xf32> to vector<8x8xf32>
    %60 = arith.truncf %59 : vector<8x8xf32> to vector<8x8xbf16>
    %cst_28 = arith.constant dense<0.000000e+00> : vector<8x8xf32>
    %61 = tpu.matmul %56, %58, %cst_28 {dimension_numbers = #tpu.dot_dimension_numbers<[1], [1], [0], [0], [0, 0, 1, 0], [], []>} : vector<8x8xbf16>, vector<8x8xbf16>, vector<8x8xf32> -> vector<8x8xf32>
    %62 = arith.addf %61, %10 : vector<8x8xf32>
    %cst_29 = arith.constant dense<0xFF800000> : vector<8xf32>
    %63 = vector.multi_reduction <maximumf>, %62, %cst_29 [1] : vector<8x8xf32> to vector<8xf32>
    %64 = vector.shape_cast %63 : vector<8xf32> to vector<8x1xf32>
    %65 = vector.broadcast %64 : vector<8x1xf32> to vector<8x8xf32>
    %66 = arith.subf %62, %65 : vector<8x8xf32>
    %67 = math.exp %66 : vector<8x8xf32>
    %cst_30 = arith.constant dense<0.000000e+00> : vector<8xf32>
    %68 = vector.multi_reduction <add>, %67, %cst_30 [1] : vector<8x8xf32> to vector<8xf32>
    %69 = vector.shape_cast %68 : vector<8xf32> to vector<8x1xf32>
    %70 = tpu.reciprocal %69 {approx = true} : vector<8x1xf32> -> vector<8x1xf32>
    %71 = vector.broadcast %70 : vector<8x1xf32> to vector<8x8xf32>
    %72 = arith.mulf %67, %71 : vector<8x8xf32>
    %73 = arith.truncf %72 : vector<8x8xf32> to vector<8x8xbf16>
    %cst_31 = arith.constant dense<0.000000e+00> : vector<8x8xf32>
    %74 = tpu.matmul %73, %60, %cst_31 {dimension_numbers = #tpu.dot_dimension_numbers<[1], [0], [0], [1], [0, 0, 1, 1], [], []>} : vector<8x8xbf16>, vector<8x8xbf16>, vector<8x8xf32> -> vector<8x8xf32>
    %c0_32 = arith.constant 0 : index
    %c0_33 = arith.constant 0 : index
    %75 = vector.load %arg22[%c0_32, %c0_33] : memref<8x32xf32, #tpu.memory_space<vmem>>, vector<8x8xf32>
    tpu.vector_store %arg22[%c0_32, %c0_33], %74 {strides = array<i32>} : memref<8x32xf32, #tpu.memory_space<vmem>>, vector<8x8xf32>,
    %76 = vector.extract_strided_slice %46 {offsets = [0, 8], sizes = [8, 8], strides = [1, 1]} : vector<8x32xf32> to vector<8x8xf32>
    %cst_34 = arith.constant 0.353553385 : f32
    %77 = vector.broadcast %cst_34 : f32 to vector<8x8xf32>
    %78 = arith.mulf %76, %77 : vector<8x8xf32>
    %79 = arith.truncf %78 : vector<8x8xf32> to vector<8x8xbf16>
    %80 = vector.extract_strided_slice %47 {offsets = [0, 8], sizes = [8, 8], strides = [1, 1]} : vector<8x32xf32> to vector<8x8xf32>
    %81 = arith.truncf %80 : vector<8x8xf32> to vector<8x8xbf16>
    %82 = vector.extract_strided_slice %48 {offsets = [0, 8], sizes = [8, 8], strides = [1, 1]} : vector<8x32xf32> to vector<8x8xf32>
    %83 = arith.truncf %82 : vector<8x8xf32> to vector<8x8xbf16>
    %cst_35 = arith.constant dense<0.000000e+00> : vector<8x8xf32>
    %84 = tpu.matmul %79, %81, %cst_35 {dimension_numbers = #tpu.dot_dimension_numbers<[1], [1], [0], [0], [0, 0, 1, 0], [], []>} : vector<8x8xbf16>, vector<8x8xbf16>, vector<8x8xf32> -> vector<8x8xf32>
    %85 = arith.addf %84, %10 : vector<8x8xf32>
    %cst_36 = arith.constant dense<0xFF800000> : vector<8xf32>
    %86 = vector.multi_reduction <maximumf>, %85, %cst_36 [1] : vector<8x8xf32> to vector<8xf32>
    %87 = vector.shape_cast %86 : vector<8xf32> to vector<8x1xf32>
    %88 = vector.broadcast %87 : vector<8x1xf32> to vector<8x8xf32>
    %89 = arith.subf %85, %88 : vector<8x8xf32>
    %90 = math.exp %89 : vector<8x8xf32>
    %cst_37 = arith.constant dense<0.000000e+00> : vector<8xf32>
    %91 = vector.multi_reduction <add>, %90, %cst_37 [1] : vector<8x8xf32> to vector<8xf32>
    %92 = vector.shape_cast %91 : vector<8xf32> to vector<8x1xf32>
    %93 = tpu.reciprocal %92 {approx = true} : vector<8x1xf32> -> vector<8x1xf32>
    %94 = vector.broadcast %93 : vector<8x1xf32> to vector<8x8xf32>
    %95 = arith.mulf %90, %94 : vector<8x8xf32>
    %96 = arith.truncf %95 : vector<8x8xf32> to vector<8x8xbf16>
    %cst_38 = arith.constant dense<0.000000e+00> : vector<8x8xf32>
    %97 = tpu.matmul %96, %83, %cst_38 {dimension_numbers = #tpu.dot_dimension_numbers<[1], [0], [0], [1], [0, 0, 1, 1], [], []>} : vector<8x8xbf16>, vector<8x8xbf16>, vector<8x8xf32> -> vector<8x8xf32>
    %c0_39 = arith.constant 0 : index
    %c8 = arith.constant 8 : index
    %98 = vector.load %arg22[%c0_39, %c8] : memref<8x32xf32, #tpu.memory_space<vmem>>, vector<8x8xf32>
    tpu.vector_store %arg22[%c0_39, %c8], %97 {strides = array<i32>} : memref<8x32xf32, #tpu.memory_space<vmem>>, vector<8x8xf32>,
    %99 = vector.extract_strided_slice %46 {offsets = [0, 16], sizes = [8, 8], strides = [1, 1]} : vector<8x32xf32> to vector<8x8xf32>
    %cst_40 = arith.constant 0.353553385 : f32
    %100 = vector.broadcast %cst_40 : f32 to vector<8x8xf32>
    %101 = arith.mulf %99, %100 : vector<8x8xf32>
    %102 = arith.truncf %101 : vector<8x8xf32> to vector<8x8xbf16>
    %103 = vector.extract_strided_slice %47 {offsets = [0, 16], sizes = [8, 8], strides = [1, 1]} : vector<8x32xf32> to vector<8x8xf32>
    %104 = arith.truncf %103 : vector<8x8xf32> to vector<8x8xbf16>
    %105 = vector.extract_strided_slice %48 {offsets = [0, 16], sizes = [8, 8], strides = [1, 1]} : vector<8x32xf32> to vector<8x8xf32>
    %106 = arith.truncf %105 : vector<8x8xf32> to vector<8x8xbf16>
    %cst_41 = arith.constant dense<0.000000e+00> : vector<8x8xf32>
    %107 = tpu.matmul %102, %104, %cst_41 {dimension_numbers = #tpu.dot_dimension_numbers<[1], [1], [0], [0], [0, 0, 1, 0], [], []>} : vector<8x8xbf16>, vector<8x8xbf16>, vector<8x8xf32> -> vector<8x8xf32>
    %108 = arith.addf %107, %10 : vector<8x8xf32>
    %cst_42 = arith.constant dense<0xFF800000> : vector<8xf32>
    %109 = vector.multi_reduction <maximumf>, %108, %cst_42 [1] : vector<8x8xf32> to vector<8xf32>
    %110 = vector.shape_cast %109 : vector<8xf32> to vector<8x1xf32>
    %111 = vector.broadcast %110 : vector<8x1xf32> to vector<8x8xf32>
    %112 = arith.subf %108, %111 : vector<8x8xf32>
    %113 = math.exp %112 : vector<8x8xf32>
    %cst_43 = arith.constant dense<0.000000e+00> : vector<8xf32>
    %114 = vector.multi_reduction <add>, %113, %cst_43 [1] : vector<8x8xf32> to vector<8xf32>
    %115 = vector.shape_cast %114 : vector<8xf32> to vector<8x1xf32>
    %116 = tpu.reciprocal %115 {approx = true} : vector<8x1xf32> -> vector<8x1xf32>
    %117 = vector.broadcast %116 : vector<8x1xf32> to vector<8x8xf32>
    %118 = arith.mulf %113, %117 : vector<8x8xf32>
    %119 = arith.truncf %118 : vector<8x8xf32> to vector<8x8xbf16>
    %cst_44 = arith.constant dense<0.000000e+00> : vector<8x8xf32>
    %120 = tpu.matmul %119, %106, %cst_44 {dimension_numbers = #tpu.dot_dimension_numbers<[1], [0], [0], [1], [0, 0, 1, 1], [], []>} : vector<8x8xbf16>, vector<8x8xbf16>, vector<8x8xf32> -> vector<8x8xf32>
    %c0_45 = arith.constant 0 : index
    %c16 = arith.constant 16 : index
    %121 = vector.load %arg22[%c0_45, %c16] : memref<8x32xf32, #tpu.memory_space<vmem>>, vector<8x8xf32>
    tpu.vector_store %arg22[%c0_45, %c16], %120 {strides = array<i32>} : memref<8x32xf32, #tpu.memory_space<vmem>>, vector<8x8xf32>,
    %122 = vector.extract_strided_slice %46 {offsets = [0, 24], sizes = [8, 8], strides = [1, 1]} : vector<8x32xf32> to vector<8x8xf32>
    %cst_46 = arith.constant 0.353553385 : f32
    %123 = vector.broadcast %cst_46 : f32 to vector<8x8xf32>
    %124 = arith.mulf %122, %123 : vector<8x8xf32>
    %125 = arith.truncf %124 : vector<8x8xf32> to vector<8x8xbf16>
    %126 = vector.extract_strided_slice %47 {offsets = [0, 24], sizes = [8, 8], strides = [1, 1]} : vector<8x32xf32> to vector<8x8xf32>
    %127 = arith.truncf %126 : vector<8x8xf32> to vector<8x8xbf16>
    %128 = vector.extract_strided_slice %48 {offsets = [0, 24], sizes = [8, 8], strides = [1, 1]} : vector<8x32xf32> to vector<8x8xf32>
    %129 = arith.truncf %128 : vector<8x8xf32> to vector<8x8xbf16>
    %cst_47 = arith.constant dense<0.000000e+00> : vector<8x8xf32>
    %130 = tpu.matmul %125, %127, %cst_47 {dimension_numbers = #tpu.dot_dimension_numbers<[1], [1], [0], [0], [0, 0, 1, 0], [], []>} : vector<8x8xbf16>, vector<8x8xbf16>, vector<8x8xf32> -> vector<8x8xf32>
    %131 = arith.addf %130, %10 : vector<8x8xf32>
    %cst_48 = arith.constant dense<0xFF800000> : vector<8xf32>
    %132 = vector.multi_reduction <maximumf>, %131, %cst_48 [1] : vector<8x8xf32> to vector<8xf32>
    %133 = vector.shape_cast %132 : vector<8xf32> to vector<8x1xf32>
    %134 = vector.broadcast %133 : vector<8x1xf32> to vector<8x8xf32>
    %135 = arith.subf %131, %134 : vector<8x8xf32>
    %136 = math.exp %135 : vector<8x8xf32>
    %cst_49 = arith.constant dense<0.000000e+00> : vector<8xf32>
    %137 = vector.multi_reduction <add>, %136, %cst_49 [1] : vector<8x8xf32> to vector<8xf32>
    %138 = vector.shape_cast %137 : vector<8xf32> to vector<8x1xf32>
    %139 = tpu.reciprocal %138 {approx = true} : vector<8x1xf32> -> vector<8x1xf32>
    %140 = vector.broadcast %139 : vector<8x1xf32> to vector<8x8xf32>
    %141 = arith.mulf %136, %140 : vector<8x8xf32>
    %142 = arith.truncf %141 : vector<8x8xf32> to vector<8x8xbf16>
    %cst_50 = arith.constant dense<0.000000e+00> : vector<8x8xf32>
    %143 = tpu.matmul %142, %129, %cst_50 {dimension_numbers = #tpu.dot_dimension_numbers<[1], [0], [0], [1], [0, 0, 1, 1], [], []>} : vector<8x8xbf16>, vector<8x8xbf16>, vector<8x8xf32> -> vector<8x8xf32>
    %c0_51 = arith.constant 0 : index
    %c24 = arith.constant 24 : index
    %144 = vector.load %arg22[%c0_51, %c24] : memref<8x32xf32, #tpu.memory_space<vmem>>, vector<8x8xf32>
    tpu.vector_store %arg22[%c0_51, %c24], %143 {strides = array<i32>} : memref<8x32xf32, #tpu.memory_space<vmem>>, vector<8x8xf32>,
    %c0_52 = arith.constant 0 : index
    %c0_53 = arith.constant 0 : index
    %145 = vector.load %arg22[%c0_52, %c0_53] : memref<8x32xf32, #tpu.memory_space<vmem>>, vector<8x32xf32>
    %146 = arith.truncf %145 : vector<8x32xf32> to vector<8x32xbf16>
    %cst_54 = arith.constant dense<0.000000e+00> : vector<8x32xf32>
    %147 = tpu.matmul %146, %50, %cst_54 {dimension_numbers = #tpu.dot_dimension_numbers<[1], [0], [0], [1], [0, 0, 1, 1], [], []>} : vector<8x32xbf16>, vector<32x32xbf16>, vector<8x32xf32> -> vector<8x32xf32>
    %148 = vector.broadcast %52 : vector<1x32xf32> to vector<8x32xf32>
    %149 = arith.addf %147, %148 : vector<8x32xf32>
    %150 = arith.addf %11, %149 : vector<8x32xf32>
    %c0_55 = arith.constant 0 : index
    %c0_56 = arith.constant 0 : index
    %c0_57 = arith.constant 0 : index
    %151 = vector.load %arg12[%c0_55, %c0_56, %c0_57] : memref<1x1x32xf32, #tpu.memory_space<vmem>>, vector<1x1x32xf32>
    %152 = vector.shape_cast %151 : vector<1x1x32xf32> to vector<1x32xf32>
    %c0_58 = arith.constant 0 : index
    %c0_59 = arith.constant 0 : index
    %c0_60 = arith.constant 0 : index
    %153 = vector.load %arg13[%c0_58, %c0_59, %c0_60] : memref<1x1x32xf32, #tpu.memory_space<vmem>>, vector<1x1x32xf32>
    %154 = vector.shape_cast %153 : vector<1x1x32xf32> to vector<1x32xf32>
    %c0_61 = arith.constant 0 : index
    %c0_62 = arith.constant 0 : index
    %c0_63 = arith.constant 0 : index
    %155 = vector.load %arg14[%c0_61, %c0_62, %c0_63] : memref<1x32x64xbf16, #tpu.memory_space<vmem>>, vector<1x32x64xbf16>
    %156 = vector.shape_cast %155 : vector<1x32x64xbf16> to vector<32x64xbf16>
    %c0_64 = arith.constant 0 : index
    %c0_65 = arith.constant 0 : index
    %c0_66 = arith.constant 0 : index
    %157 = vector.load %arg15[%c0_64, %c0_65, %c0_66] : memref<1x1x64xf32, #tpu.memory_space<vmem>>, vector<1x1x64xf32>
    %158 = vector.shape_cast %157 : vector<1x1x64xf32> to vector<1x64xf32>
    %c0_67 = arith.constant 0 : index
    %c0_68 = arith.constant 0 : index
    %c0_69 = arith.constant 0 : index
    %159 = vector.load %arg16[%c0_67, %c0_68, %c0_69] : memref<1x64x32xbf16, #tpu.memory_space<vmem>>, vector<1x64x32xbf16>
    %160 = vector.shape_cast %159 : vector<1x64x32xbf16> to vector<64x32xbf16>
    %c0_70 = arith.constant 0 : index
    %c0_71 = arith.constant 0 : index
    %c0_72 = arith.constant 0 : index
    %161 = vector.load %arg17[%c0_70, %c0_71, %c0_72] : memref<1x1x32xf32, #tpu.memory_space<vmem>>, vector<1x1x32xf32>
    %162 = vector.shape_cast %161 : vector<1x1x32xf32> to vector<1x32xf32>
    %cst_73 = arith.constant dense<0.000000e+00> : vector<8xf32>
    %163 = vector.multi_reduction <add>, %150, %cst_73 [1] : vector<8x32xf32> to vector<8xf32>
    %164 = vector.shape_cast %163 : vector<8xf32> to vector<8x1xf32>
    %cst_74 = arith.constant 3.200000e+01 : f32
    %165 = vector.broadcast %cst_74 : f32 to vector<8x1xf32>
    %166 = arith.divf %164, %165 : vector<8x1xf32>
    %167 = vector.broadcast %166 : vector<8x1xf32> to vector<8x32xf32>
    %168 = arith.subf %150, %167 : vector<8x32xf32>
    %169 = arith.mulf %168, %168 : vector<8x32xf32>
    %cst_75 = arith.constant dense<0.000000e+00> : vector<8xf32>
    %170 = vector.multi_reduction <add>, %169, %cst_75 [1] : vector<8x32xf32> to vector<8xf32>
    %171 = vector.shape_cast %170 : vector<8xf32> to vector<8x1xf32>
    %cst_76 = arith.constant 3.200000e+01 : f32
    %172 = vector.broadcast %cst_76 : f32 to vector<8x1xf32>
    %173 = arith.divf %171, %172 : vector<8x1xf32>
    %174 = vector.broadcast %166 : vector<8x1xf32> to vector<8x32xf32>
    %175 = arith.subf %150, %174 : vector<8x32xf32>
    %cst_77 = arith.constant 9.99999974E-6 : f32
    %176 = vector.broadcast %cst_77 : f32 to vector<8x1xf32>
    %177 = arith.addf %173, %176 : vector<8x1xf32>
    %178 = math.rsqrt %177 : vector<8x1xf32>
    %179 = vector.broadcast %178 : vector<8x1xf32> to vector<8x32xf32>
    %180 = arith.mulf %175, %179 : vector<8x32xf32>
    %181 = vector.broadcast %152 : vector<1x32xf32> to vector<8x32xf32>
    %182 = arith.mulf %180, %181 : vector<8x32xf32>
    %183 = vector.broadcast %154 : vector<1x32xf32> to vector<8x32xf32>
    %184 = arith.addf %182, %183 : vector<8x32xf32>
    %185 = arith.truncf %184 : vector<8x32xf32> to vector<8x32xbf16>
    %cst_78 = arith.constant dense<0.000000e+00> : vector<8x64xf32>
    %186 = tpu.matmul %185, %156, %cst_78 {dimension_numbers = #tpu.dot_dimension_numbers<[1], [0], [0], [1], [0, 0, 1, 1], [], []>} : vector<8x32xbf16>, vector<32x64xbf16>, vector<8x64xf32> -> vector<8x64xf32>
    %187 = vector.broadcast %158 : vector<1x64xf32> to vector<8x64xf32>
    %188 = arith.addf %186, %187 : vector<8x64xf32>
    %189 = arith.mulf %188, %188 : vector<8x64xf32>
    %190 = arith.mulf %188, %189 : vector<8x64xf32>
    %cst_79 = arith.constant 4.471500e-02 : f32
    %191 = vector.broadcast %cst_79 : f32 to vector<8x64xf32>
    %192 = arith.mulf %191, %190 : vector<8x64xf32>
    %193 = arith.addf %188, %192 : vector<8x64xf32>
    %cst_80 = arith.constant 0.797884583 : f32
    %194 = vector.broadcast %cst_80 : f32 to vector<8x64xf32>
    %195 = arith.mulf %194, %193 : vector<8x64xf32>
    %196 = math.tanh %195 : vector<8x64xf32>
    %cst_81 = arith.constant 1.000000e+00 : f32
    %197 = vector.broadcast %cst_81 : f32 to vector<8x64xf32>
    %198 = arith.addf %197, %196 : vector<8x64xf32>
    %cst_82 = arith.constant 5.000000e-01 : f32
    %199 = vector.broadcast %cst_82 : f32 to vector<8x64xf32>
    %200 = arith.mulf %199, %198 : vector<8x64xf32>
    %201 = arith.mulf %188, %200 : vector<8x64xf32>
    %202 = arith.truncf %201 : vector<8x64xf32> to vector<8x64xbf16>
    %cst_83 = arith.constant dense<0.000000e+00> : vector<8x32xf32>
    %203 = tpu.matmul %202, %160, %cst_83 {dimension_numbers = #tpu.dot_dimension_numbers<[1], [0], [0], [1], [0, 0, 1, 1], [], []>} : vector<8x64xbf16>, vector<64x32xbf16>, vector<8x32xf32> -> vector<8x32xf32>
    %204 = vector.broadcast %162 : vector<1x32xf32> to vector<8x32xf32>
    %205 = arith.addf %203, %204 : vector<8x32xf32>
    %206 = arith.addf %150, %205 : vector<8x32xf32>
    %c0_84 = arith.constant 0 : index
    %c0_85 = arith.constant 0 : index
    %207 = vector.load %arg21[%c0_84, %c0_85] : memref<8x32xf32, #tpu.memory_space<vmem>>, vector<8x32xf32>
    tpu.vector_store %arg21[%c0_84, %c0_85], %206 {strides = array<i32>} : memref<8x32xf32, #tpu.memory_space<vmem>>, vector<8x32xf32>,
    %c1_i32 = arith.constant 1 : i32
    %208 = arith.cmpi eq, %arg1, %c1_i32 : i32
    %209 = arith.extui %208 : i1 to i32
    %c0_i32_86 = arith.constant 0 : i32
    %210 = arith.cmpi ne, %209, %c0_i32_86 : i32
    scf.if %210 {
      %c0_87 = arith.constant 0 : index
      %c0_88 = arith.constant 0 : index
      %211 = vector.load %arg21[%c0_87, %c0_88] : memref<8x32xf32, #tpu.memory_space<vmem>>, vector<8x32xf32>
      %c0_89 = arith.constant 0 : index
      %c0_90 = arith.constant 0 : index
      %212 = vector.load %arg18[%c0_89, %c0_90] : memref<1x32xf32, #tpu.memory_space<vmem>>, vector<1x32xf32>
      %c0_91 = arith.constant 0 : index
      %c0_92 = arith.constant 0 : index
      %213 = vector.load %arg19[%c0_91, %c0_92] : memref<1x32xf32, #tpu.memory_space<vmem>>, vector<1x32xf32>
      %cst_93 = arith.constant dense<0.000000e+00> : vector<8xf32>
      %214 = vector.multi_reduction <add>, %211, %cst_93 [1] : vector<8x32xf32> to vector<8xf32>
      %215 = vector.shape_cast %214 : vector<8xf32> to vector<8x1xf32>
      %cst_94 = arith.constant 3.200000e+01 : f32
      %216 = vector.broadcast %cst_94 : f32 to vector<8x1xf32>
      %217 = arith.divf %215, %216 : vector<8x1xf32>
      %218 = vector.broadcast %217 : vector<8x1xf32> to vector<8x32xf32>
      %219 = arith.subf %211, %218 : vector<8x32xf32>
      %220 = arith.mulf %219, %219 : vector<8x32xf32>
      %cst_95 = arith.constant dense<0.000000e+00> : vector<8xf32>
      %221 = vector.multi_reduction <add>, %220, %cst_95 [1] : vector<8x32xf32> to vector<8xf32>
      %222 = vector.shape_cast %221 : vector<8xf32> to vector<8x1xf32>
      %cst_96 = arith.constant 3.200000e+01 : f32
      %223 = vector.broadcast %cst_96 : f32 to vector<8x1xf32>
      %224 = arith.divf %222, %223 : vector<8x1xf32>
      %225 = vector.broadcast %217 : vector<8x1xf32> to vector<8x32xf32>
      %226 = arith.subf %211, %225 : vector<8x32xf32>
      %cst_97 = arith.constant 9.99999974E-6 : f32
      %227 = vector.broadcast %cst_97 : f32 to vector<8x1xf32>
      %228 = arith.addf %224, %227 : vector<8x1xf32>
      %229 = math.rsqrt %228 : vector<8x1xf32>
      %230 = vector.broadcast %229 : vector<8x1xf32> to vector<8x32xf32>
      %231 = arith.mulf %226, %230 : vector<8x32xf32>
      %232 = vector.broadcast %212 : vector<1x32xf32> to vector<8x32xf32>
      %233 = arith.mulf %231, %232 : vector<8x32xf32>
      %234 = vector.broadcast %213 : vector<1x32xf32> to vector<8x32xf32>
      %235 = arith.addf %233, %234 : vector<8x32xf32>
      %c0_98 = arith.constant 0 : index
      %c0_99 = arith.constant 0 : index
      %c0_100 = arith.constant 0 : index
      %236 = vector.load %arg20[%c0_98, %c0_99, %c0_100] : memref<1x8x32xf32, #tpu.memory_space<vmem>>, vector<1x8x32xf32>
      %237 = vector.shape_cast %236 : vector<1x8x32xf32> to vector<8x32xf32>
      %238 = vector.shape_cast %235 : vector<8x32xf32> to vector<1x8x32xf32>
      tpu.vector_store %arg20[%c0_98, %c0_99, %c0_100], %238 {strides = array<i32>} : memref<1x8x32xf32, #tpu.memory_space<vmem>>, vector<1x8x32xf32>,
    } else {
    }
    return
  }
  func.func @transform_0(%arg0: i32, %arg1: i32, %arg2: memref<2xi32, #tpu.memory_space<smem>>) -> (i32, i32, i32) {
    %c0_i32 = arith.constant 0 : i32
    %c0_i32_0 = arith.constant 0 : i32
    %c0_i32_1 = arith.constant 0 : i32
    return %arg0, %c0_i32, %c0_i32_0 : i32, i32, i32
  }
  func.func @transform_1(%arg0: i32, %arg1: i32, %arg2: memref<2xi32, #tpu.memory_space<smem>>) -> (i32, i32) {
    %c0_i32 = arith.constant 0 : i32
    %c0_i32_0 = arith.constant 0 : i32
    %c0_i32_1 = arith.constant 0 : i32
    return %c0_i32, %c0_i32_0 : i32, i32
  }
  func.func @transform_2(%arg0: i32, %arg1: i32, %arg2: memref<2xi32, #tpu.memory_space<smem>>) -> (i32, i32) {
    %c0_i32 = arith.constant 0 : i32
    %c0_i32_0 = arith.constant 0 : i32
    %c0_i32_1 = arith.constant 0 : i32
    return %c0_i32, %c0_i32_0 : i32, i32
  }
  func.func @transform_3(%arg0: i32, %arg1: i32, %arg2: memref<2xi32, #tpu.memory_space<smem>>) -> (i32, i32, i32) {
    %c0_i32 = arith.constant 0 : i32
    %c0_i32_0 = arith.constant 0 : i32
    %c0_i32_1 = arith.constant 0 : i32
    return %arg1, %c0_i32, %c0_i32_0 : i32, i32, i32
  }
  func.func @transform_4(%arg0: i32, %arg1: i32, %arg2: memref<2xi32, #tpu.memory_space<smem>>) -> (i32, i32, i32) {
    %c0_i32 = arith.constant 0 : i32
    %c0_i32_0 = arith.constant 0 : i32
    %c0_i32_1 = arith.constant 0 : i32
    return %arg1, %c0_i32, %c0_i32_0 : i32, i32, i32
  }
  func.func @transform_5(%arg0: i32, %arg1: i32, %arg2: memref<2xi32, #tpu.memory_space<smem>>) -> (i32, i32, i32) {
    %c0_i32 = arith.constant 0 : i32
    %c0_i32_0 = arith.constant 0 : i32
    %c0_i32_1 = arith.constant 0 : i32
    return %arg1, %c0_i32, %c0_i32_0 : i32, i32, i32
  }
  func.func @transform_6(%arg0: i32, %arg1: i32, %arg2: memref<2xi32, #tpu.memory_space<smem>>) -> (i32, i32, i32) {
    %c0_i32 = arith.constant 0 : i32
    %c0_i32_0 = arith.constant 0 : i32
    %c0_i32_1 = arith.constant 0 : i32
    return %arg1, %c0_i32, %c0_i32_0 : i32, i32, i32
  }
  func.func @transform_7(%arg0: i32, %arg1: i32, %arg2: memref<2xi32, #tpu.memory_space<smem>>) -> (i32, i32, i32) {
    %c0_i32 = arith.constant 0 : i32
    %c0_i32_0 = arith.constant 0 : i32
    %c0_i32_1 = arith.constant 0 : i32
    return %arg1, %c0_i32, %c0_i32_0 : i32, i32, i32
  }
  func.func @transform_8(%arg0: i32, %arg1: i32, %arg2: memref<2xi32, #tpu.memory_space<smem>>) -> (i32, i32, i32) {
    %c0_i32 = arith.constant 0 : i32
    %c0_i32_0 = arith.constant 0 : i32
    %c0_i32_1 = arith.constant 0 : i32
    return %arg1, %c0_i32, %c0_i32_0 : i32, i32, i32
  }
  func.func @transform_9(%arg0: i32, %arg1: i32, %arg2: memref<2xi32, #tpu.memory_space<smem>>) -> (i32, i32, i32) {
    %c0_i32 = arith.constant 0 : i32
    %c0_i32_0 = arith.constant 0 : i32
    %c0_i32_1 = arith.constant 0 : i32
    return %arg1, %c0_i32, %c0_i32_0 : i32, i32, i32
  }
  func.func @transform_10(%arg0: i32, %arg1: i32, %arg2: memref<2xi32, #tpu.memory_space<smem>>) -> (i32, i32, i32) {
    %c0_i32 = arith.constant 0 : i32
    %c0_i32_0 = arith.constant 0 : i32
    %c0_i32_1 = arith.constant 0 : i32
    return %arg1, %c0_i32, %c0_i32_0 : i32, i32, i32
  }
  func.func @transform_11(%arg0: i32, %arg1: i32, %arg2: memref<2xi32, #tpu.memory_space<smem>>) -> (i32, i32, i32) {
    %c0_i32 = arith.constant 0 : i32
    %c0_i32_0 = arith.constant 0 : i32
    %c0_i32_1 = arith.constant 0 : i32
    return %arg1, %c0_i32, %c0_i32_0 : i32, i32, i32
  }
  func.func @transform_12(%arg0: i32, %arg1: i32, %arg2: memref<2xi32, #tpu.memory_space<smem>>) -> (i32, i32, i32) {
    %c0_i32 = arith.constant 0 : i32
    %c0_i32_0 = arith.constant 0 : i32
    %c0_i32_1 = arith.constant 0 : i32
    return %arg1, %c0_i32, %c0_i32_0 : i32, i32, i32
  }
  func.func @transform_13(%arg0: i32, %arg1: i32, %arg2: memref<2xi32, #tpu.memory_space<smem>>) -> (i32, i32, i32) {
    %c0_i32 = arith.constant 0 : i32
    %c0_i32_0 = arith.constant 0 : i32
    %c0_i32_1 = arith.constant 0 : i32
    return %arg1, %c0_i32, %c0_i32_0 : i32, i32, i32
  }
  func.func @transform_14(%arg0: i32, %arg1: i32, %arg2: memref<2xi32, #tpu.memory_space<smem>>) -> (i32, i32, i32) {
    %c0_i32 = arith.constant 0 : i32
    %c0_i32_0 = arith.constant 0 : i32
    %c0_i32_1 = arith.constant 0 : i32
    return %arg1, %c0_i32, %c0_i32_0 : i32, i32, i32
  }
  func.func @transform_15(%arg0: i32, %arg1: i32, %arg2: memref<2xi32, #tpu.memory_space<smem>>) -> (i32, i32) {
    %c0_i32 = arith.constant 0 : i32
    %c0_i32_0 = arith.constant 0 : i32
    %c0_i32_1 = arith.constant 0 : i32
    return %c0_i32, %c0_i32_0 : i32, i32
  }
  func.func @transform_16(%arg0: i32, %arg1: i32, %arg2: memref<2xi32, #tpu.memory_space<smem>>) -> (i32, i32) {
    %c0_i32 = arith.constant 0 : i32
    %c0_i32_0 = arith.constant 0 : i32
    %c0_i32_1 = arith.constant 0 : i32
    return %c0_i32, %c0_i32_0 : i32, i32
  }
  func.func @transform_17(%arg0: i32, %arg1: i32, %arg2: memref<2xi32, #tpu.memory_space<smem>>) -> (i32, i32, i32) {
    %c0_i32 = arith.constant 0 : i32
    %c0_i32_0 = arith.constant 0 : i32
    %c0_i32_1 = arith.constant 0 : i32
    return %arg0, %c0_i32, %c0_i32_0 : i32, i32, i32
  }
}

module attributes {stable_mosaic.version = 11 : i64} {
  func.func @_dec_stack_kernel(%arg0: i32, %arg1: i32, %arg2: memref<2xi32, #tpu.memory_space<smem>>, %arg3: memref<1x8x32xf32, #tpu.memory_space<vmem>>, %arg4: memref<1x8x32xf32, #tpu.memory_space<vmem>>, %arg5: memref<1x32xf32, #tpu.memory_space<vmem>>, %arg6: memref<1x32xf32, #tpu.memory_space<vmem>>, %arg7: memref<1x1x32xf32, #tpu.memory_space<vmem>>, %arg8: memref<1x1x32xf32, #tpu.memory_space<vmem>>, %arg9: memref<1x32x96xbf16, #tpu.memory_space<vmem>>, %arg10: memref<1x1x96xf32, #tpu.memory_space<vmem>>, %arg11: memref<1x32x32xbf16, #tpu.memory_space<vmem>>, %arg12: memref<1x1x32xf32, #tpu.memory_space<vmem>>, %arg13: memref<1x1x32xf32, #tpu.memory_space<vmem>>, %arg14: memref<1x1x32xf32, #tpu.memory_space<vmem>>, %arg15: memref<1x32x32xbf16, #tpu.memory_space<vmem>>, %arg16: memref<1x1x32xf32, #tpu.memory_space<vmem>>, %arg17: memref<1x32x64xbf16, #tpu.memory_space<vmem>>, %arg18: memref<1x1x64xf32, #tpu.memory_space<vmem>>, %arg19: memref<1x32x32xbf16, #tpu.memory_space<vmem>>, %arg20: memref<1x1x32xf32, #tpu.memory_space<vmem>>, %arg21: memref<1x1x32xf32, #tpu.memory_space<vmem>>, %arg22: memref<1x1x32xf32, #tpu.memory_space<vmem>>, %arg23: memref<1x32x64xbf16, #tpu.memory_space<vmem>>, %arg24: memref<1x1x64xf32, #tpu.memory_space<vmem>>, %arg25: memref<1x64x32xbf16, #tpu.memory_space<vmem>>, %arg26: memref<1x1x32xf32, #tpu.memory_space<vmem>>, %arg27: memref<1x32xf32, #tpu.memory_space<vmem>>, %arg28: memref<1x32xf32, #tpu.memory_space<vmem>>, %arg29: memref<1x8x32xf32, #tpu.memory_space<vmem>>, %arg30: memref<8x32xf32, #tpu.memory_space<vmem>>, %arg31: memref<8x32xf32, #tpu.memory_space<vmem>>) attributes {dimension_semantics = [#tpu.dimension_semantics<parallel>, #tpu.dimension_semantics<arbitrary>], iteration_bounds = array<i64: 2, 2>, scalar_prefetch = 1 : i64, scratch_operands = 2 : i64, tpu.core_type = #tpu.core_type<tc>, window_params = [{transform_indices = @transform_0, window_bounds = array<i64: 1, 8, 32>}, {transform_indices = @transform_1, window_bounds = array<i64: 1, 8, 32>}, {pipeline_mode = #tpu.pipeline_mode<synchronous>, transform_indices = @transform_2, window_bounds = array<i64: 1, 32>}, {pipeline_mode = #tpu.pipeline_mode<synchronous>, transform_indices = @transform_3, window_bounds = array<i64: 1, 32>}, {transform_indices = @transform_4, window_bounds = array<i64: 1, 1, 32>}, {transform_indices = @transform_5, window_bounds = array<i64: 1, 1, 32>}, {transform_indices = @transform_6, window_bounds = array<i64: 1, 32, 96>}, {transform_indices = @transform_7, window_bounds = array<i64: 1, 1, 96>}, {transform_indices = @transform_8, window_bounds = array<i64: 1, 32, 32>}, {transform_indices = @transform_9, window_bounds = array<i64: 1, 1, 32>}, {transform_indices = @transform_10, window_bounds = array<i64: 1, 1, 32>}, {transform_indices = @transform_11, window_bounds = array<i64: 1, 1, 32>}, {transform_indices = @transform_12, window_bounds = array<i64: 1, 32, 32>}, {transform_indices = @transform_13, window_bounds = array<i64: 1, 1, 32>}, {transform_indices = @transform_14, window_bounds = array<i64: 1, 32, 64>}, {transform_indices = @transform_15, window_bounds = array<i64: 1, 1, 64>}, {transform_indices = @transform_16, window_bounds = array<i64: 1, 32, 32>}, {transform_indices = @transform_17, window_bounds = array<i64: 1, 1, 32>}, {transform_indices = @transform_18, window_bounds = array<i64: 1, 1, 32>}, {transform_indices = @transform_19, window_bounds = array<i64: 1, 1, 32>}, {transform_indices = @transform_20, window_bounds = array<i64: 1, 32, 64>}, {transform_indices = @transform_21, window_bounds = array<i64: 1, 1, 64>}, {transform_indices = @transform_22, window_bounds = array<i64: 1, 64, 32>}, {transform_indices = @transform_23, window_bounds = array<i64: 1, 1, 32>}, {pipeline_mode = #tpu.pipeline_mode<synchronous>, transform_indices = @transform_24, window_bounds = array<i64: 1, 32>}, {pipeline_mode = #tpu.pipeline_mode<synchronous>, transform_indices = @transform_25, window_bounds = array<i64: 1, 32>}, {transform_indices = @transform_26, window_bounds = array<i64: 1, 8, 32>}]} {
    %c0_i32 = arith.constant 0 : i32
    %0 = arith.cmpi eq, %arg1, %c0_i32 : i32
    %1 = arith.extui %0 : i1 to i32
    %c0_i32_0 = arith.constant 0 : i32
    %2 = arith.cmpi ne, %1, %c0_i32_0 : i32
    scf.if %2 {
      %c0_154 = arith.constant 0 : index
      %c0_155 = arith.constant 0 : index
      %c0_156 = arith.constant 0 : index
      %364 = vector.load %arg3[%c0_154, %c0_155, %c0_156] : memref<1x8x32xf32, #tpu.memory_space<vmem>>, vector<1x8x32xf32>
      %365 = vector.shape_cast %364 : vector<1x8x32xf32> to vector<8x32xf32>
      %c0_157 = arith.constant 0 : index
      %c0_158 = arith.constant 0 : index
      %366 = vector.load %arg5[%c0_157, %c0_158] : memref<1x32xf32, #tpu.memory_space<vmem>>, vector<1x32xf32>
      %c0_159 = arith.constant 0 : index
      %c0_160 = arith.constant 0 : index
      %367 = vector.load %arg6[%c0_159, %c0_160] : memref<1x32xf32, #tpu.memory_space<vmem>>, vector<1x32xf32>
      %cst_161 = arith.constant dense<0.000000e+00> : vector<8xf32>
      %368 = vector.multi_reduction <add>, %365, %cst_161 [1] : vector<8x32xf32> to vector<8xf32>
      %369 = vector.shape_cast %368 : vector<8xf32> to vector<8x1xf32>
      %cst_162 = arith.constant 3.200000e+01 : f32
      %370 = vector.broadcast %cst_162 : f32 to vector<8x1xf32>
      %371 = arith.divf %369, %370 : vector<8x1xf32>
      %372 = vector.broadcast %371 : vector<8x1xf32> to vector<8x32xf32>
      %373 = arith.subf %365, %372 : vector<8x32xf32>
      %374 = arith.mulf %373, %373 : vector<8x32xf32>
      %cst_163 = arith.constant dense<0.000000e+00> : vector<8xf32>
      %375 = vector.multi_reduction <add>, %374, %cst_163 [1] : vector<8x32xf32> to vector<8xf32>
      %376 = vector.shape_cast %375 : vector<8xf32> to vector<8x1xf32>
      %cst_164 = arith.constant 3.200000e+01 : f32
      %377 = vector.broadcast %cst_164 : f32 to vector<8x1xf32>
      %378 = arith.divf %376, %377 : vector<8x1xf32>
      %379 = vector.broadcast %371 : vector<8x1xf32> to vector<8x32xf32>
      %380 = arith.subf %365, %379 : vector<8x32xf32>
      %cst_165 = arith.constant 9.99999974E-6 : f32
      %381 = vector.broadcast %cst_165 : f32 to vector<8x1xf32>
      %382 = arith.addf %378, %381 : vector<8x1xf32>
      %383 = math.rsqrt %382 : vector<8x1xf32>
      %384 = vector.broadcast %383 : vector<8x1xf32> to vector<8x32xf32>
      %385 = arith.mulf %380, %384 : vector<8x32xf32>
      %386 = vector.broadcast %366 : vector<1x32xf32> to vector<8x32xf32>
      %387 = arith.mulf %385, %386 : vector<8x32xf32>
      %388 = vector.broadcast %367 : vector<1x32xf32> to vector<8x32xf32>
      %389 = arith.addf %387, %388 : vector<8x32xf32>
      %c0_166 = arith.constant 0 : index
      %c0_167 = arith.constant 0 : index
      %390 = vector.load %arg30[%c0_166, %c0_167] : memref<8x32xf32, #tpu.memory_space<vmem>>, vector<8x32xf32>
      tpu.vector_store %arg30[%c0_166, %c0_167], %389 {strides = array<i32>} : memref<8x32xf32, #tpu.memory_space<vmem>>, vector<8x32xf32>,
    } else {
    }
    %3 = tpu.iota {dimensions = array<i32: 0>} : vector<8x8xi32>
    %4 = tpu.iota {dimensions = array<i32: 1>} : vector<8x8xi32>
    %5 = arith.cmpi sle, %4, %3 : vector<8x8xi32>
    %cst = arith.constant 0.000000e+00 : f32
    %cst_1 = arith.constant -1.000000e+09 : f32
    %6 = vector.broadcast %cst : f32 to vector<8x8xf32>
    %7 = vector.broadcast %cst_1 : f32 to vector<8x8xf32>
    %8 = arith.select %5, %6, %7 : vector<8x8xi1>, vector<8x8xf32>
    %9 = arith.index_cast %arg0 : i32 to index
    %10 = memref.load %arg2[%9] : memref<2xi32, #tpu.memory_space<smem>>
    %11 = vector.broadcast %10 : i32 to vector<8x8xi32>
    %12 = arith.cmpi slt, %4, %11 : vector<8x8xi32>
    %cst_2 = arith.constant 0.000000e+00 : f32
    %cst_3 = arith.constant -1.000000e+09 : f32
    %13 = vector.broadcast %cst_2 : f32 to vector<8x8xf32>
    %14 = vector.broadcast %cst_3 : f32 to vector<8x8xf32>
    %15 = arith.select %12, %13, %14 : vector<8x8xi1>, vector<8x8xf32>
    %c0 = arith.constant 0 : index
    %c0_4 = arith.constant 0 : index
    %c0_5 = arith.constant 0 : index
    %16 = vector.load %arg4[%c0, %c0_4, %c0_5] : memref<1x8x32xf32, #tpu.memory_space<vmem>>, vector<1x8x32xf32>
    %17 = vector.shape_cast %16 : vector<1x8x32xf32> to vector<8x32xf32>
    %c0_6 = arith.constant 0 : index
    %c0_7 = arith.constant 0 : index
    %18 = vector.load %arg30[%c0_6, %c0_7] : memref<8x32xf32, #tpu.memory_space<vmem>>, vector<8x32xf32>
    %c0_8 = arith.constant 0 : index
    %c0_9 = arith.constant 0 : index
    %c0_10 = arith.constant 0 : index
    %19 = vector.load %arg7[%c0_8, %c0_9, %c0_10] : memref<1x1x32xf32, #tpu.memory_space<vmem>>, vector<1x1x32xf32>
    %20 = vector.shape_cast %19 : vector<1x1x32xf32> to vector<1x32xf32>
    %c0_11 = arith.constant 0 : index
    %c0_12 = arith.constant 0 : index
    %c0_13 = arith.constant 0 : index
    %21 = vector.load %arg8[%c0_11, %c0_12, %c0_13] : memref<1x1x32xf32, #tpu.memory_space<vmem>>, vector<1x1x32xf32>
    %22 = vector.shape_cast %21 : vector<1x1x32xf32> to vector<1x32xf32>
    %cst_14 = arith.constant dense<0.000000e+00> : vector<8xf32>
    %23 = vector.multi_reduction <add>, %18, %cst_14 [1] : vector<8x32xf32> to vector<8xf32>
    %24 = vector.shape_cast %23 : vector<8xf32> to vector<8x1xf32>
    %cst_15 = arith.constant 3.200000e+01 : f32
    %25 = vector.broadcast %cst_15 : f32 to vector<8x1xf32>
    %26 = arith.divf %24, %25 : vector<8x1xf32>
    %27 = vector.broadcast %26 : vector<8x1xf32> to vector<8x32xf32>
    %28 = arith.subf %18, %27 : vector<8x32xf32>
    %29 = arith.mulf %28, %28 : vector<8x32xf32>
    %cst_16 = arith.constant dense<0.000000e+00> : vector<8xf32>
    %30 = vector.multi_reduction <add>, %29, %cst_16 [1] : vector<8x32xf32> to vector<8xf32>
    %31 = vector.shape_cast %30 : vector<8xf32> to vector<8x1xf32>
    %cst_17 = arith.constant 3.200000e+01 : f32
    %32 = vector.broadcast %cst_17 : f32 to vector<8x1xf32>
    %33 = arith.divf %31, %32 : vector<8x1xf32>
    %34 = vector.broadcast %26 : vector<8x1xf32> to vector<8x32xf32>
    %35 = arith.subf %18, %34 : vector<8x32xf32>
    %cst_18 = arith.constant 9.99999974E-6 : f32
    %36 = vector.broadcast %cst_18 : f32 to vector<8x1xf32>
    %37 = arith.addf %33, %36 : vector<8x1xf32>
    %38 = math.rsqrt %37 : vector<8x1xf32>
    %39 = vector.broadcast %38 : vector<8x1xf32> to vector<8x32xf32>
    %40 = arith.mulf %35, %39 : vector<8x32xf32>
    %41 = vector.broadcast %20 : vector<1x32xf32> to vector<8x32xf32>
    %42 = arith.mulf %40, %41 : vector<8x32xf32>
    %43 = vector.broadcast %22 : vector<1x32xf32> to vector<8x32xf32>
    %44 = arith.addf %42, %43 : vector<8x32xf32>
    %45 = arith.truncf %44 : vector<8x32xf32> to vector<8x32xbf16>
    %c0_19 = arith.constant 0 : index
    %c0_20 = arith.constant 0 : index
    %c0_21 = arith.constant 0 : index
    %46 = vector.load %arg9[%c0_19, %c0_20, %c0_21] : memref<1x32x96xbf16, #tpu.memory_space<vmem>>, vector<1x32x96xbf16>
    %47 = vector.shape_cast %46 : vector<1x32x96xbf16> to vector<32x96xbf16>
    %cst_22 = arith.constant dense<0.000000e+00> : vector<8x96xf32>
    %48 = tpu.matmul %45, %47, %cst_22 {dimension_numbers = #tpu.dot_dimension_numbers<[1], [0], [0], [1], [0, 0, 1, 1], [], []>} : vector<8x32xbf16>, vector<32x96xbf16>, vector<8x96xf32> -> vector<8x96xf32>
    %c0_23 = arith.constant 0 : index
    %c0_24 = arith.constant 0 : index
    %c0_25 = arith.constant 0 : index
    %49 = vector.load %arg10[%c0_23, %c0_24, %c0_25] : memref<1x1x96xf32, #tpu.memory_space<vmem>>, vector<1x1x96xf32>
    %50 = vector.shape_cast %49 : vector<1x1x96xf32> to vector<1x96xf32>
    %51 = vector.broadcast %50 : vector<1x96xf32> to vector<8x96xf32>
    %52 = arith.addf %48, %51 : vector<8x96xf32>
    %53 = vector.extract_strided_slice %52 {offsets = [0, 0], sizes = [8, 32], strides = [1, 1]} : vector<8x96xf32> to vector<8x32xf32>
    %54 = vector.extract_strided_slice %52 {offsets = [0, 32], sizes = [8, 32], strides = [1, 1]} : vector<8x96xf32> to vector<8x32xf32>
    %55 = vector.extract_strided_slice %52 {offsets = [0, 64], sizes = [8, 32], strides = [1, 1]} : vector<8x96xf32> to vector<8x32xf32>
    %c0_26 = arith.constant 0 : index
    %c0_27 = arith.constant 0 : index
    %c0_28 = arith.constant 0 : index
    %56 = vector.load %arg11[%c0_26, %c0_27, %c0_28] : memref<1x32x32xbf16, #tpu.memory_space<vmem>>, vector<1x32x32xbf16>
    %57 = vector.shape_cast %56 : vector<1x32x32xbf16> to vector<32x32xbf16>
    %c0_29 = arith.constant 0 : index
    %c0_30 = arith.constant 0 : index
    %c0_31 = arith.constant 0 : index
    %58 = vector.load %arg12[%c0_29, %c0_30, %c0_31] : memref<1x1x32xf32, #tpu.memory_space<vmem>>, vector<1x1x32xf32>
    %59 = vector.shape_cast %58 : vector<1x1x32xf32> to vector<1x32xf32>
    %60 = vector.extract_strided_slice %53 {offsets = [0, 0], sizes = [8, 8], strides = [1, 1]} : vector<8x32xf32> to vector<8x8xf32>
    %cst_32 = arith.constant 0.353553385 : f32
    %61 = vector.broadcast %cst_32 : f32 to vector<8x8xf32>
    %62 = arith.mulf %60, %61 : vector<8x8xf32>
    %63 = arith.truncf %62 : vector<8x8xf32> to vector<8x8xbf16>
    %64 = vector.extract_strided_slice %54 {offsets = [0, 0], sizes = [8, 8], strides = [1, 1]} : vector<8x32xf32> to vector<8x8xf32>
    %65 = arith.truncf %64 : vector<8x8xf32> to vector<8x8xbf16>
    %66 = vector.extract_strided_slice %55 {offsets = [0, 0], sizes = [8, 8], strides = [1, 1]} : vector<8x32xf32> to vector<8x8xf32>
    %67 = arith.truncf %66 : vector<8x8xf32> to vector<8x8xbf16>
    %cst_33 = arith.constant dense<0.000000e+00> : vector<8x8xf32>
    %68 = tpu.matmul %63, %65, %cst_33 {dimension_numbers = #tpu.dot_dimension_numbers<[1], [1], [0], [0], [0, 0, 1, 0], [], []>} : vector<8x8xbf16>, vector<8x8xbf16>, vector<8x8xf32> -> vector<8x8xf32>
    %69 = arith.addf %68, %8 : vector<8x8xf32>
    %cst_34 = arith.constant dense<0xFF800000> : vector<8xf32>
    %70 = vector.multi_reduction <maximumf>, %69, %cst_34 [1] : vector<8x8xf32> to vector<8xf32>
    %71 = vector.shape_cast %70 : vector<8xf32> to vector<8x1xf32>
    %72 = vector.broadcast %71 : vector<8x1xf32> to vector<8x8xf32>
    %73 = arith.subf %69, %72 : vector<8x8xf32>
    %74 = math.exp %73 : vector<8x8xf32>
    %cst_35 = arith.constant dense<0.000000e+00> : vector<8xf32>
    %75 = vector.multi_reduction <add>, %74, %cst_35 [1] : vector<8x8xf32> to vector<8xf32>
    %76 = vector.shape_cast %75 : vector<8xf32> to vector<8x1xf32>
    %77 = tpu.reciprocal %76 {approx = true} : vector<8x1xf32> -> vector<8x1xf32>
    %78 = vector.broadcast %77 : vector<8x1xf32> to vector<8x8xf32>
    %79 = arith.mulf %74, %78 : vector<8x8xf32>
    %80 = arith.truncf %79 : vector<8x8xf32> to vector<8x8xbf16>
    %cst_36 = arith.constant dense<0.000000e+00> : vector<8x8xf32>
    %81 = tpu.matmul %80, %67, %cst_36 {dimension_numbers = #tpu.dot_dimension_numbers<[1], [0], [0], [1], [0, 0, 1, 1], [], []>} : vector<8x8xbf16>, vector<8x8xbf16>, vector<8x8xf32> -> vector<8x8xf32>
    %c0_37 = arith.constant 0 : index
    %c0_38 = arith.constant 0 : index
    %82 = vector.load %arg31[%c0_37, %c0_38] : memref<8x32xf32, #tpu.memory_space<vmem>>, vector<8x8xf32>
    tpu.vector_store %arg31[%c0_37, %c0_38], %81 {strides = array<i32>} : memref<8x32xf32, #tpu.memory_space<vmem>>, vector<8x8xf32>,
    %83 = vector.extract_strided_slice %53 {offsets = [0, 8], sizes = [8, 8], strides = [1, 1]} : vector<8x32xf32> to vector<8x8xf32>
    %cst_39 = arith.constant 0.353553385 : f32
    %84 = vector.broadcast %cst_39 : f32 to vector<8x8xf32>
    %85 = arith.mulf %83, %84 : vector<8x8xf32>
    %86 = arith.truncf %85 : vector<8x8xf32> to vector<8x8xbf16>
    %87 = vector.extract_strided_slice %54 {offsets = [0, 8], sizes = [8, 8], strides = [1, 1]} : vector<8x32xf32> to vector<8x8xf32>
    %88 = arith.truncf %87 : vector<8x8xf32> to vector<8x8xbf16>
    %89 = vector.extract_strided_slice %55 {offsets = [0, 8], sizes = [8, 8], strides = [1, 1]} : vector<8x32xf32> to vector<8x8xf32>
    %90 = arith.truncf %89 : vector<8x8xf32> to vector<8x8xbf16>
    %cst_40 = arith.constant dense<0.000000e+00> : vector<8x8xf32>
    %91 = tpu.matmul %86, %88, %cst_40 {dimension_numbers = #tpu.dot_dimension_numbers<[1], [1], [0], [0], [0, 0, 1, 0], [], []>} : vector<8x8xbf16>, vector<8x8xbf16>, vector<8x8xf32> -> vector<8x8xf32>
    %92 = arith.addf %91, %8 : vector<8x8xf32>
    %cst_41 = arith.constant dense<0xFF800000> : vector<8xf32>
    %93 = vector.multi_reduction <maximumf>, %92, %cst_41 [1] : vector<8x8xf32> to vector<8xf32>
    %94 = vector.shape_cast %93 : vector<8xf32> to vector<8x1xf32>
    %95 = vector.broadcast %94 : vector<8x1xf32> to vector<8x8xf32>
    %96 = arith.subf %92, %95 : vector<8x8xf32>
    %97 = math.exp %96 : vector<8x8xf32>
    %cst_42 = arith.constant dense<0.000000e+00> : vector<8xf32>
    %98 = vector.multi_reduction <add>, %97, %cst_42 [1] : vector<8x8xf32> to vector<8xf32>
    %99 = vector.shape_cast %98 : vector<8xf32> to vector<8x1xf32>
    %100 = tpu.reciprocal %99 {approx = true} : vector<8x1xf32> -> vector<8x1xf32>
    %101 = vector.broadcast %100 : vector<8x1xf32> to vector<8x8xf32>
    %102 = arith.mulf %97, %101 : vector<8x8xf32>
    %103 = arith.truncf %102 : vector<8x8xf32> to vector<8x8xbf16>
    %cst_43 = arith.constant dense<0.000000e+00> : vector<8x8xf32>
    %104 = tpu.matmul %103, %90, %cst_43 {dimension_numbers = #tpu.dot_dimension_numbers<[1], [0], [0], [1], [0, 0, 1, 1], [], []>} : vector<8x8xbf16>, vector<8x8xbf16>, vector<8x8xf32> -> vector<8x8xf32>
    %c0_44 = arith.constant 0 : index
    %c8 = arith.constant 8 : index
    %105 = vector.load %arg31[%c0_44, %c8] : memref<8x32xf32, #tpu.memory_space<vmem>>, vector<8x8xf32>
    tpu.vector_store %arg31[%c0_44, %c8], %104 {strides = array<i32>} : memref<8x32xf32, #tpu.memory_space<vmem>>, vector<8x8xf32>,
    %106 = vector.extract_strided_slice %53 {offsets = [0, 16], sizes = [8, 8], strides = [1, 1]} : vector<8x32xf32> to vector<8x8xf32>
    %cst_45 = arith.constant 0.353553385 : f32
    %107 = vector.broadcast %cst_45 : f32 to vector<8x8xf32>
    %108 = arith.mulf %106, %107 : vector<8x8xf32>
    %109 = arith.truncf %108 : vector<8x8xf32> to vector<8x8xbf16>
    %110 = vector.extract_strided_slice %54 {offsets = [0, 16], sizes = [8, 8], strides = [1, 1]} : vector<8x32xf32> to vector<8x8xf32>
    %111 = arith.truncf %110 : vector<8x8xf32> to vector<8x8xbf16>
    %112 = vector.extract_strided_slice %55 {offsets = [0, 16], sizes = [8, 8], strides = [1, 1]} : vector<8x32xf32> to vector<8x8xf32>
    %113 = arith.truncf %112 : vector<8x8xf32> to vector<8x8xbf16>
    %cst_46 = arith.constant dense<0.000000e+00> : vector<8x8xf32>
    %114 = tpu.matmul %109, %111, %cst_46 {dimension_numbers = #tpu.dot_dimension_numbers<[1], [1], [0], [0], [0, 0, 1, 0], [], []>} : vector<8x8xbf16>, vector<8x8xbf16>, vector<8x8xf32> -> vector<8x8xf32>
    %115 = arith.addf %114, %8 : vector<8x8xf32>
    %cst_47 = arith.constant dense<0xFF800000> : vector<8xf32>
    %116 = vector.multi_reduction <maximumf>, %115, %cst_47 [1] : vector<8x8xf32> to vector<8xf32>
    %117 = vector.shape_cast %116 : vector<8xf32> to vector<8x1xf32>
    %118 = vector.broadcast %117 : vector<8x1xf32> to vector<8x8xf32>
    %119 = arith.subf %115, %118 : vector<8x8xf32>
    %120 = math.exp %119 : vector<8x8xf32>
    %cst_48 = arith.constant dense<0.000000e+00> : vector<8xf32>
    %121 = vector.multi_reduction <add>, %120, %cst_48 [1] : vector<8x8xf32> to vector<8xf32>
    %122 = vector.shape_cast %121 : vector<8xf32> to vector<8x1xf32>
    %123 = tpu.reciprocal %122 {approx = true} : vector<8x1xf32> -> vector<8x1xf32>
    %124 = vector.broadcast %123 : vector<8x1xf32> to vector<8x8xf32>
    %125 = arith.mulf %120, %124 : vector<8x8xf32>
    %126 = arith.truncf %125 : vector<8x8xf32> to vector<8x8xbf16>
    %cst_49 = arith.constant dense<0.000000e+00> : vector<8x8xf32>
    %127 = tpu.matmul %126, %113, %cst_49 {dimension_numbers = #tpu.dot_dimension_numbers<[1], [0], [0], [1], [0, 0, 1, 1], [], []>} : vector<8x8xbf16>, vector<8x8xbf16>, vector<8x8xf32> -> vector<8x8xf32>
    %c0_50 = arith.constant 0 : index
    %c16 = arith.constant 16 : index
    %128 = vector.load %arg31[%c0_50, %c16] : memref<8x32xf32, #tpu.memory_space<vmem>>, vector<8x8xf32>
    tpu.vector_store %arg31[%c0_50, %c16], %127 {strides = array<i32>} : memref<8x32xf32, #tpu.memory_space<vmem>>, vector<8x8xf32>,
    %129 = vector.extract_strided_slice %53 {offsets = [0, 24], sizes = [8, 8], strides = [1, 1]} : vector<8x32xf32> to vector<8x8xf32>
    %cst_51 = arith.constant 0.353553385 : f32
    %130 = vector.broadcast %cst_51 : f32 to vector<8x8xf32>
    %131 = arith.mulf %129, %130 : vector<8x8xf32>
    %132 = arith.truncf %131 : vector<8x8xf32> to vector<8x8xbf16>
    %133 = vector.extract_strided_slice %54 {offsets = [0, 24], sizes = [8, 8], strides = [1, 1]} : vector<8x32xf32> to vector<8x8xf32>
    %134 = arith.truncf %133 : vector<8x8xf32> to vector<8x8xbf16>
    %135 = vector.extract_strided_slice %55 {offsets = [0, 24], sizes = [8, 8], strides = [1, 1]} : vector<8x32xf32> to vector<8x8xf32>
    %136 = arith.truncf %135 : vector<8x8xf32> to vector<8x8xbf16>
    %cst_52 = arith.constant dense<0.000000e+00> : vector<8x8xf32>
    %137 = tpu.matmul %132, %134, %cst_52 {dimension_numbers = #tpu.dot_dimension_numbers<[1], [1], [0], [0], [0, 0, 1, 0], [], []>} : vector<8x8xbf16>, vector<8x8xbf16>, vector<8x8xf32> -> vector<8x8xf32>
    %138 = arith.addf %137, %8 : vector<8x8xf32>
    %cst_53 = arith.constant dense<0xFF800000> : vector<8xf32>
    %139 = vector.multi_reduction <maximumf>, %138, %cst_53 [1] : vector<8x8xf32> to vector<8xf32>
    %140 = vector.shape_cast %139 : vector<8xf32> to vector<8x1xf32>
    %141 = vector.broadcast %140 : vector<8x1xf32> to vector<8x8xf32>
    %142 = arith.subf %138, %141 : vector<8x8xf32>
    %143 = math.exp %142 : vector<8x8xf32>
    %cst_54 = arith.constant dense<0.000000e+00> : vector<8xf32>
    %144 = vector.multi_reduction <add>, %143, %cst_54 [1] : vector<8x8xf32> to vector<8xf32>
    %145 = vector.shape_cast %144 : vector<8xf32> to vector<8x1xf32>
    %146 = tpu.reciprocal %145 {approx = true} : vector<8x1xf32> -> vector<8x1xf32>
    %147 = vector.broadcast %146 : vector<8x1xf32> to vector<8x8xf32>
    %148 = arith.mulf %143, %147 : vector<8x8xf32>
    %149 = arith.truncf %148 : vector<8x8xf32> to vector<8x8xbf16>
    %cst_55 = arith.constant dense<0.000000e+00> : vector<8x8xf32>
    %150 = tpu.matmul %149, %136, %cst_55 {dimension_numbers = #tpu.dot_dimension_numbers<[1], [0], [0], [1], [0, 0, 1, 1], [], []>} : vector<8x8xbf16>, vector<8x8xbf16>, vector<8x8xf32> -> vector<8x8xf32>
    %c0_56 = arith.constant 0 : index
    %c24 = arith.constant 24 : index
    %151 = vector.load %arg31[%c0_56, %c24] : memref<8x32xf32, #tpu.memory_space<vmem>>, vector<8x8xf32>
    tpu.vector_store %arg31[%c0_56, %c24], %150 {strides = array<i32>} : memref<8x32xf32, #tpu.memory_space<vmem>>, vector<8x8xf32>,
    %c0_57 = arith.constant 0 : index
    %c0_58 = arith.constant 0 : index
    %152 = vector.load %arg31[%c0_57, %c0_58] : memref<8x32xf32, #tpu.memory_space<vmem>>, vector<8x32xf32>
    %153 = arith.truncf %152 : vector<8x32xf32> to vector<8x32xbf16>
    %cst_59 = arith.constant dense<0.000000e+00> : vector<8x32xf32>
    %154 = tpu.matmul %153, %57, %cst_59 {dimension_numbers = #tpu.dot_dimension_numbers<[1], [0], [0], [1], [0, 0, 1, 1], [], []>} : vector<8x32xbf16>, vector<32x32xbf16>, vector<8x32xf32> -> vector<8x32xf32>
    %155 = vector.broadcast %59 : vector<1x32xf32> to vector<8x32xf32>
    %156 = arith.addf %154, %155 : vector<8x32xf32>
    %157 = arith.addf %18, %156 : vector<8x32xf32>
    %c0_60 = arith.constant 0 : index
    %c0_61 = arith.constant 0 : index
    %c0_62 = arith.constant 0 : index
    %158 = vector.load %arg13[%c0_60, %c0_61, %c0_62] : memref<1x1x32xf32, #tpu.memory_space<vmem>>, vector<1x1x32xf32>
    %159 = vector.shape_cast %158 : vector<1x1x32xf32> to vector<1x32xf32>
    %c0_63 = arith.constant 0 : index
    %c0_64 = arith.constant 0 : index
    %c0_65 = arith.constant 0 : index
    %160 = vector.load %arg14[%c0_63, %c0_64, %c0_65] : memref<1x1x32xf32, #tpu.memory_space<vmem>>, vector<1x1x32xf32>
    %161 = vector.shape_cast %160 : vector<1x1x32xf32> to vector<1x32xf32>
    %cst_66 = arith.constant dense<0.000000e+00> : vector<8xf32>
    %162 = vector.multi_reduction <add>, %157, %cst_66 [1] : vector<8x32xf32> to vector<8xf32>
    %163 = vector.shape_cast %162 : vector<8xf32> to vector<8x1xf32>
    %cst_67 = arith.constant 3.200000e+01 : f32
    %164 = vector.broadcast %cst_67 : f32 to vector<8x1xf32>
    %165 = arith.divf %163, %164 : vector<8x1xf32>
    %166 = vector.broadcast %165 : vector<8x1xf32> to vector<8x32xf32>
    %167 = arith.subf %157, %166 : vector<8x32xf32>
    %168 = arith.mulf %167, %167 : vector<8x32xf32>
    %cst_68 = arith.constant dense<0.000000e+00> : vector<8xf32>
    %169 = vector.multi_reduction <add>, %168, %cst_68 [1] : vector<8x32xf32> to vector<8xf32>
    %170 = vector.shape_cast %169 : vector<8xf32> to vector<8x1xf32>
    %cst_69 = arith.constant 3.200000e+01 : f32
    %171 = vector.broadcast %cst_69 : f32 to vector<8x1xf32>
    %172 = arith.divf %170, %171 : vector<8x1xf32>
    %173 = vector.broadcast %165 : vector<8x1xf32> to vector<8x32xf32>
    %174 = arith.subf %157, %173 : vector<8x32xf32>
    %cst_70 = arith.constant 9.99999974E-6 : f32
    %175 = vector.broadcast %cst_70 : f32 to vector<8x1xf32>
    %176 = arith.addf %172, %175 : vector<8x1xf32>
    %177 = math.rsqrt %176 : vector<8x1xf32>
    %178 = vector.broadcast %177 : vector<8x1xf32> to vector<8x32xf32>
    %179 = arith.mulf %174, %178 : vector<8x32xf32>
    %180 = vector.broadcast %159 : vector<1x32xf32> to vector<8x32xf32>
    %181 = arith.mulf %179, %180 : vector<8x32xf32>
    %182 = vector.broadcast %161 : vector<1x32xf32> to vector<8x32xf32>
    %183 = arith.addf %181, %182 : vector<8x32xf32>
    %184 = arith.truncf %183 : vector<8x32xf32> to vector<8x32xbf16>
    %c0_71 = arith.constant 0 : index
    %c0_72 = arith.constant 0 : index
    %c0_73 = arith.constant 0 : index
    %185 = vector.load %arg15[%c0_71, %c0_72, %c0_73] : memref<1x32x32xbf16, #tpu.memory_space<vmem>>, vector<1x32x32xbf16>
    %186 = vector.shape_cast %185 : vector<1x32x32xbf16> to vector<32x32xbf16>
    %cst_74 = arith.constant dense<0.000000e+00> : vector<8x32xf32>
    %187 = tpu.matmul %184, %186, %cst_74 {dimension_numbers = #tpu.dot_dimension_numbers<[1], [0], [0], [1], [0, 0, 1, 1], [], []>} : vector<8x32xbf16>, vector<32x32xbf16>, vector<8x32xf32> -> vector<8x32xf32>
    %c0_75 = arith.constant 0 : index
    %c0_76 = arith.constant 0 : index
    %c0_77 = arith.constant 0 : index
    %188 = vector.load %arg16[%c0_75, %c0_76, %c0_77] : memref<1x1x32xf32, #tpu.memory_space<vmem>>, vector<1x1x32xf32>
    %189 = vector.shape_cast %188 : vector<1x1x32xf32> to vector<1x32xf32>
    %190 = vector.broadcast %189 : vector<1x32xf32> to vector<8x32xf32>
    %191 = arith.addf %187, %190 : vector<8x32xf32>
    %192 = arith.truncf %17 : vector<8x32xf32> to vector<8x32xbf16>
    %c0_78 = arith.constant 0 : index
    %c0_79 = arith.constant 0 : index
    %c0_80 = arith.constant 0 : index
    %193 = vector.load %arg17[%c0_78, %c0_79, %c0_80] : memref<1x32x64xbf16, #tpu.memory_space<vmem>>, vector<1x32x64xbf16>
    %194 = vector.shape_cast %193 : vector<1x32x64xbf16> to vector<32x64xbf16>
    %cst_81 = arith.constant dense<0.000000e+00> : vector<8x64xf32>
    %195 = tpu.matmul %192, %194, %cst_81 {dimension_numbers = #tpu.dot_dimension_numbers<[1], [0], [0], [1], [0, 0, 1, 1], [], []>} : vector<8x32xbf16>, vector<32x64xbf16>, vector<8x64xf32> -> vector<8x64xf32>
    %c0_82 = arith.constant 0 : index
    %c0_83 = arith.constant 0 : index
    %c0_84 = arith.constant 0 : index
    %196 = vector.load %arg18[%c0_82, %c0_83, %c0_84] : memref<1x1x64xf32, #tpu.memory_space<vmem>>, vector<1x1x64xf32>
    %197 = vector.shape_cast %196 : vector<1x1x64xf32> to vector<1x64xf32>
    %198 = vector.broadcast %197 : vector<1x64xf32> to vector<8x64xf32>
    %199 = arith.addf %195, %198 : vector<8x64xf32>
    %200 = vector.extract_strided_slice %199 {offsets = [0, 0], sizes = [8, 32], strides = [1, 1]} : vector<8x64xf32> to vector<8x32xf32>
    %201 = vector.extract_strided_slice %199 {offsets = [0, 32], sizes = [8, 32], strides = [1, 1]} : vector<8x64xf32> to vector<8x32xf32>
    %c0_85 = arith.constant 0 : index
    %c0_86 = arith.constant 0 : index
    %c0_87 = arith.constant 0 : index
    %202 = vector.load %arg19[%c0_85, %c0_86, %c0_87] : memref<1x32x32xbf16, #tpu.memory_space<vmem>>, vector<1x32x32xbf16>
    %203 = vector.shape_cast %202 : vector<1x32x32xbf16> to vector<32x32xbf16>
    %c0_88 = arith.constant 0 : index
    %c0_89 = arith.constant 0 : index
    %c0_90 = arith.constant 0 : index
    %204 = vector.load %arg20[%c0_88, %c0_89, %c0_90] : memref<1x1x32xf32, #tpu.memory_space<vmem>>, vector<1x1x32xf32>
    %205 = vector.shape_cast %204 : vector<1x1x32xf32> to vector<1x32xf32>
    %206 = vector.extract_strided_slice %191 {offsets = [0, 0], sizes = [8, 8], strides = [1, 1]} : vector<8x32xf32> to vector<8x8xf32>
    %cst_91 = arith.constant 0.353553385 : f32
    %207 = vector.broadcast %cst_91 : f32 to vector<8x8xf32>
    %208 = arith.mulf %206, %207 : vector<8x8xf32>
    %209 = arith.truncf %208 : vector<8x8xf32> to vector<8x8xbf16>
    %210 = vector.extract_strided_slice %200 {offsets = [0, 0], sizes = [8, 8], strides = [1, 1]} : vector<8x32xf32> to vector<8x8xf32>
    %211 = arith.truncf %210 : vector<8x8xf32> to vector<8x8xbf16>
    %212 = vector.extract_strided_slice %201 {offsets = [0, 0], sizes = [8, 8], strides = [1, 1]} : vector<8x32xf32> to vector<8x8xf32>
    %213 = arith.truncf %212 : vector<8x8xf32> to vector<8x8xbf16>
    %cst_92 = arith.constant dense<0.000000e+00> : vector<8x8xf32>
    %214 = tpu.matmul %209, %211, %cst_92 {dimension_numbers = #tpu.dot_dimension_numbers<[1], [1], [0], [0], [0, 0, 1, 0], [], []>} : vector<8x8xbf16>, vector<8x8xbf16>, vector<8x8xf32> -> vector<8x8xf32>
    %215 = arith.addf %214, %15 : vector<8x8xf32>
    %cst_93 = arith.constant dense<0xFF800000> : vector<8xf32>
    %216 = vector.multi_reduction <maximumf>, %215, %cst_93 [1] : vector<8x8xf32> to vector<8xf32>
    %217 = vector.shape_cast %216 : vector<8xf32> to vector<8x1xf32>
    %218 = vector.broadcast %217 : vector<8x1xf32> to vector<8x8xf32>
    %219 = arith.subf %215, %218 : vector<8x8xf32>
    %220 = math.exp %219 : vector<8x8xf32>
    %cst_94 = arith.constant dense<0.000000e+00> : vector<8xf32>
    %221 = vector.multi_reduction <add>, %220, %cst_94 [1] : vector<8x8xf32> to vector<8xf32>
    %222 = vector.shape_cast %221 : vector<8xf32> to vector<8x1xf32>
    %223 = tpu.reciprocal %222 {approx = true} : vector<8x1xf32> -> vector<8x1xf32>
    %224 = vector.broadcast %223 : vector<8x1xf32> to vector<8x8xf32>
    %225 = arith.mulf %220, %224 : vector<8x8xf32>
    %226 = arith.truncf %225 : vector<8x8xf32> to vector<8x8xbf16>
    %cst_95 = arith.constant dense<0.000000e+00> : vector<8x8xf32>
    %227 = tpu.matmul %226, %213, %cst_95 {dimension_numbers = #tpu.dot_dimension_numbers<[1], [0], [0], [1], [0, 0, 1, 1], [], []>} : vector<8x8xbf16>, vector<8x8xbf16>, vector<8x8xf32> -> vector<8x8xf32>
    %c0_96 = arith.constant 0 : index
    %c0_97 = arith.constant 0 : index
    %228 = vector.load %arg31[%c0_96, %c0_97] : memref<8x32xf32, #tpu.memory_space<vmem>>, vector<8x8xf32>
    tpu.vector_store %arg31[%c0_96, %c0_97], %227 {strides = array<i32>} : memref<8x32xf32, #tpu.memory_space<vmem>>, vector<8x8xf32>,
    %229 = vector.extract_strided_slice %191 {offsets = [0, 8], sizes = [8, 8], strides = [1, 1]} : vector<8x32xf32> to vector<8x8xf32>
    %cst_98 = arith.constant 0.353553385 : f32
    %230 = vector.broadcast %cst_98 : f32 to vector<8x8xf32>
    %231 = arith.mulf %229, %230 : vector<8x8xf32>
    %232 = arith.truncf %231 : vector<8x8xf32> to vector<8x8xbf16>
    %233 = vector.extract_strided_slice %200 {offsets = [0, 8], sizes = [8, 8], strides = [1, 1]} : vector<8x32xf32> to vector<8x8xf32>
    %234 = arith.truncf %233 : vector<8x8xf32> to vector<8x8xbf16>
    %235 = vector.extract_strided_slice %201 {offsets = [0, 8], sizes = [8, 8], strides = [1, 1]} : vector<8x32xf32> to vector<8x8xf32>
    %236 = arith.truncf %235 : vector<8x8xf32> to vector<8x8xbf16>
    %cst_99 = arith.constant dense<0.000000e+00> : vector<8x8xf32>
    %237 = tpu.matmul %232, %234, %cst_99 {dimension_numbers = #tpu.dot_dimension_numbers<[1], [1], [0], [0], [0, 0, 1, 0], [], []>} : vector<8x8xbf16>, vector<8x8xbf16>, vector<8x8xf32> -> vector<8x8xf32>
    %238 = arith.addf %237, %15 : vector<8x8xf32>
    %cst_100 = arith.constant dense<0xFF800000> : vector<8xf32>
    %239 = vector.multi_reduction <maximumf>, %238, %cst_100 [1] : vector<8x8xf32> to vector<8xf32>
    %240 = vector.shape_cast %239 : vector<8xf32> to vector<8x1xf32>
    %241 = vector.broadcast %240 : vector<8x1xf32> to vector<8x8xf32>
    %242 = arith.subf %238, %241 : vector<8x8xf32>
    %243 = math.exp %242 : vector<8x8xf32>
    %cst_101 = arith.constant dense<0.000000e+00> : vector<8xf32>
    %244 = vector.multi_reduction <add>, %243, %cst_101 [1] : vector<8x8xf32> to vector<8xf32>
    %245 = vector.shape_cast %244 : vector<8xf32> to vector<8x1xf32>
    %246 = tpu.reciprocal %245 {approx = true} : vector<8x1xf32> -> vector<8x1xf32>
    %247 = vector.broadcast %246 : vector<8x1xf32> to vector<8x8xf32>
    %248 = arith.mulf %243, %247 : vector<8x8xf32>
    %249 = arith.truncf %248 : vector<8x8xf32> to vector<8x8xbf16>
    %cst_102 = arith.constant dense<0.000000e+00> : vector<8x8xf32>
    %250 = tpu.matmul %249, %236, %cst_102 {dimension_numbers = #tpu.dot_dimension_numbers<[1], [0], [0], [1], [0, 0, 1, 1], [], []>} : vector<8x8xbf16>, vector<8x8xbf16>, vector<8x8xf32> -> vector<8x8xf32>
    %c0_103 = arith.constant 0 : index
    %c8_104 = arith.constant 8 : index
    %251 = vector.load %arg31[%c0_103, %c8_104] : memref<8x32xf32, #tpu.memory_space<vmem>>, vector<8x8xf32>
    tpu.vector_store %arg31[%c0_103, %c8_104], %250 {strides = array<i32>} : memref<8x32xf32, #tpu.memory_space<vmem>>, vector<8x8xf32>,
    %252 = vector.extract_strided_slice %191 {offsets = [0, 16], sizes = [8, 8], strides = [1, 1]} : vector<8x32xf32> to vector<8x8xf32>
    %cst_105 = arith.constant 0.353553385 : f32
    %253 = vector.broadcast %cst_105 : f32 to vector<8x8xf32>
    %254 = arith.mulf %252, %253 : vector<8x8xf32>
    %255 = arith.truncf %254 : vector<8x8xf32> to vector<8x8xbf16>
    %256 = vector.extract_strided_slice %200 {offsets = [0, 16], sizes = [8, 8], strides = [1, 1]} : vector<8x32xf32> to vector<8x8xf32>
    %257 = arith.truncf %256 : vector<8x8xf32> to vector<8x8xbf16>
    %258 = vector.extract_strided_slice %201 {offsets = [0, 16], sizes = [8, 8], strides = [1, 1]} : vector<8x32xf32> to vector<8x8xf32>
    %259 = arith.truncf %258 : vector<8x8xf32> to vector<8x8xbf16>
    %cst_106 = arith.constant dense<0.000000e+00> : vector<8x8xf32>
    %260 = tpu.matmul %255, %257, %cst_106 {dimension_numbers = #tpu.dot_dimension_numbers<[1], [1], [0], [0], [0, 0, 1, 0], [], []>} : vector<8x8xbf16>, vector<8x8xbf16>, vector<8x8xf32> -> vector<8x8xf32>
    %261 = arith.addf %260, %15 : vector<8x8xf32>
    %cst_107 = arith.constant dense<0xFF800000> : vector<8xf32>
    %262 = vector.multi_reduction <maximumf>, %261, %cst_107 [1] : vector<8x8xf32> to vector<8xf32>
    %263 = vector.shape_cast %262 : vector<8xf32> to vector<8x1xf32>
    %264 = vector.broadcast %263 : vector<8x1xf32> to vector<8x8xf32>
    %265 = arith.subf %261, %264 : vector<8x8xf32>
    %266 = math.exp %265 : vector<8x8xf32>
    %cst_108 = arith.constant dense<0.000000e+00> : vector<8xf32>
    %267 = vector.multi_reduction <add>, %266, %cst_108 [1] : vector<8x8xf32> to vector<8xf32>
    %268 = vector.shape_cast %267 : vector<8xf32> to vector<8x1xf32>
    %269 = tpu.reciprocal %268 {approx = true} : vector<8x1xf32> -> vector<8x1xf32>
    %270 = vector.broadcast %269 : vector<8x1xf32> to vector<8x8xf32>
    %271 = arith.mulf %266, %270 : vector<8x8xf32>
    %272 = arith.truncf %271 : vector<8x8xf32> to vector<8x8xbf16>
    %cst_109 = arith.constant dense<0.000000e+00> : vector<8x8xf32>
    %273 = tpu.matmul %272, %259, %cst_109 {dimension_numbers = #tpu.dot_dimension_numbers<[1], [0], [0], [1], [0, 0, 1, 1], [], []>} : vector<8x8xbf16>, vector<8x8xbf16>, vector<8x8xf32> -> vector<8x8xf32>
    %c0_110 = arith.constant 0 : index
    %c16_111 = arith.constant 16 : index
    %274 = vector.load %arg31[%c0_110, %c16_111] : memref<8x32xf32, #tpu.memory_space<vmem>>, vector<8x8xf32>
    tpu.vector_store %arg31[%c0_110, %c16_111], %273 {strides = array<i32>} : memref<8x32xf32, #tpu.memory_space<vmem>>, vector<8x8xf32>,
    %275 = vector.extract_strided_slice %191 {offsets = [0, 24], sizes = [8, 8], strides = [1, 1]} : vector<8x32xf32> to vector<8x8xf32>
    %cst_112 = arith.constant 0.353553385 : f32
    %276 = vector.broadcast %cst_112 : f32 to vector<8x8xf32>
    %277 = arith.mulf %275, %276 : vector<8x8xf32>
    %278 = arith.truncf %277 : vector<8x8xf32> to vector<8x8xbf16>
    %279 = vector.extract_strided_slice %200 {offsets = [0, 24], sizes = [8, 8], strides = [1, 1]} : vector<8x32xf32> to vector<8x8xf32>
    %280 = arith.truncf %279 : vector<8x8xf32> to vector<8x8xbf16>
    %281 = vector.extract_strided_slice %201 {offsets = [0, 24], sizes = [8, 8], strides = [1, 1]} : vector<8x32xf32> to vector<8x8xf32>
    %282 = arith.truncf %281 : vector<8x8xf32> to vector<8x8xbf16>
    %cst_113 = arith.constant dense<0.000000e+00> : vector<8x8xf32>
    %283 = tpu.matmul %278, %280, %cst_113 {dimension_numbers = #tpu.dot_dimension_numbers<[1], [1], [0], [0], [0, 0, 1, 0], [], []>} : vector<8x8xbf16>, vector<8x8xbf16>, vector<8x8xf32> -> vector<8x8xf32>
    %284 = arith.addf %283, %15 : vector<8x8xf32>
    %cst_114 = arith.constant dense<0xFF800000> : vector<8xf32>
    %285 = vector.multi_reduction <maximumf>, %284, %cst_114 [1] : vector<8x8xf32> to vector<8xf32>
    %286 = vector.shape_cast %285 : vector<8xf32> to vector<8x1xf32>
    %287 = vector.broadcast %286 : vector<8x1xf32> to vector<8x8xf32>
    %288 = arith.subf %284, %287 : vector<8x8xf32>
    %289 = math.exp %288 : vector<8x8xf32>
    %cst_115 = arith.constant dense<0.000000e+00> : vector<8xf32>
    %290 = vector.multi_reduction <add>, %289, %cst_115 [1] : vector<8x8xf32> to vector<8xf32>
    %291 = vector.shape_cast %290 : vector<8xf32> to vector<8x1xf32>
    %292 = tpu.reciprocal %291 {approx = true} : vector<8x1xf32> -> vector<8x1xf32>
    %293 = vector.broadcast %292 : vector<8x1xf32> to vector<8x8xf32>
    %294 = arith.mulf %289, %293 : vector<8x8xf32>
    %295 = arith.truncf %294 : vector<8x8xf32> to vector<8x8xbf16>
    %cst_116 = arith.constant dense<0.000000e+00> : vector<8x8xf32>
    %296 = tpu.matmul %295, %282, %cst_116 {dimension_numbers = #tpu.dot_dimension_numbers<[1], [0], [0], [1], [0, 0, 1, 1], [], []>} : vector<8x8xbf16>, vector<8x8xbf16>, vector<8x8xf32> -> vector<8x8xf32>
    %c0_117 = arith.constant 0 : index
    %c24_118 = arith.constant 24 : index
    %297 = vector.load %arg31[%c0_117, %c24_118] : memref<8x32xf32, #tpu.memory_space<vmem>>, vector<8x8xf32>
    tpu.vector_store %arg31[%c0_117, %c24_118], %296 {strides = array<i32>} : memref<8x32xf32, #tpu.memory_space<vmem>>, vector<8x8xf32>,
    %c0_119 = arith.constant 0 : index
    %c0_120 = arith.constant 0 : index
    %298 = vector.load %arg31[%c0_119, %c0_120] : memref<8x32xf32, #tpu.memory_space<vmem>>, vector<8x32xf32>
    %299 = arith.truncf %298 : vector<8x32xf32> to vector<8x32xbf16>
    %cst_121 = arith.constant dense<0.000000e+00> : vector<8x32xf32>
    %300 = tpu.matmul %299, %203, %cst_121 {dimension_numbers = #tpu.dot_dimension_numbers<[1], [0], [0], [1], [0, 0, 1, 1], [], []>} : vector<8x32xbf16>, vector<32x32xbf16>, vector<8x32xf32> -> vector<8x32xf32>
    %301 = vector.broadcast %205 : vector<1x32xf32> to vector<8x32xf32>
    %302 = arith.addf %300, %301 : vector<8x32xf32>
    %303 = arith.addf %157, %302 : vector<8x32xf32>
    %c0_122 = arith.constant 0 : index
    %c0_123 = arith.constant 0 : index
    %c0_124 = arith.constant 0 : index
    %304 = vector.load %arg21[%c0_122, %c0_123, %c0_124] : memref<1x1x32xf32, #tpu.memory_space<vmem>>, vector<1x1x32xf32>
    %305 = vector.shape_cast %304 : vector<1x1x32xf32> to vector<1x32xf32>
    %c0_125 = arith.constant 0 : index
    %c0_126 = arith.constant 0 : index
    %c0_127 = arith.constant 0 : index
    %306 = vector.load %arg22[%c0_125, %c0_126, %c0_127] : memref<1x1x32xf32, #tpu.memory_space<vmem>>, vector<1x1x32xf32>
    %307 = vector.shape_cast %306 : vector<1x1x32xf32> to vector<1x32xf32>
    %c0_128 = arith.constant 0 : index
    %c0_129 = arith.constant 0 : index
    %c0_130 = arith.constant 0 : index
    %308 = vector.load %arg23[%c0_128, %c0_129, %c0_130] : memref<1x32x64xbf16, #tpu.memory_space<vmem>>, vector<1x32x64xbf16>
    %309 = vector.shape_cast %308 : vector<1x32x64xbf16> to vector<32x64xbf16>
    %c0_131 = arith.constant 0 : index
    %c0_132 = arith.constant 0 : index
    %c0_133 = arith.constant 0 : index
    %310 = vector.load %arg24[%c0_131, %c0_132, %c0_133] : memref<1x1x64xf32, #tpu.memory_space<vmem>>, vector<1x1x64xf32>
    %311 = vector.shape_cast %310 : vector<1x1x64xf32> to vector<1x64xf32>
    %c0_134 = arith.constant 0 : index
    %c0_135 = arith.constant 0 : index
    %c0_136 = arith.constant 0 : index
    %312 = vector.load %arg25[%c0_134, %c0_135, %c0_136] : memref<1x64x32xbf16, #tpu.memory_space<vmem>>, vector<1x64x32xbf16>
    %313 = vector.shape_cast %312 : vector<1x64x32xbf16> to vector<64x32xbf16>
    %c0_137 = arith.constant 0 : index
    %c0_138 = arith.constant 0 : index
    %c0_139 = arith.constant 0 : index
    %314 = vector.load %arg26[%c0_137, %c0_138, %c0_139] : memref<1x1x32xf32, #tpu.memory_space<vmem>>, vector<1x1x32xf32>
    %315 = vector.shape_cast %314 : vector<1x1x32xf32> to vector<1x32xf32>
    %cst_140 = arith.constant dense<0.000000e+00> : vector<8xf32>
    %316 = vector.multi_reduction <add>, %303, %cst_140 [1] : vector<8x32xf32> to vector<8xf32>
    %317 = vector.shape_cast %316 : vector<8xf32> to vector<8x1xf32>
    %cst_141 = arith.constant 3.200000e+01 : f32
    %318 = vector.broadcast %cst_141 : f32 to vector<8x1xf32>
    %319 = arith.divf %317, %318 : vector<8x1xf32>
    %320 = vector.broadcast %319 : vector<8x1xf32> to vector<8x32xf32>
    %321 = arith.subf %303, %320 : vector<8x32xf32>
    %322 = arith.mulf %321, %321 : vector<8x32xf32>
    %cst_142 = arith.constant dense<0.000000e+00> : vector<8xf32>
    %323 = vector.multi_reduction <add>, %322, %cst_142 [1] : vector<8x32xf32> to vector<8xf32>
    %324 = vector.shape_cast %323 : vector<8xf32> to vector<8x1xf32>
    %cst_143 = arith.constant 3.200000e+01 : f32
    %325 = vector.broadcast %cst_143 : f32 to vector<8x1xf32>
    %326 = arith.divf %324, %325 : vector<8x1xf32>
    %327 = vector.broadcast %319 : vector<8x1xf32> to vector<8x32xf32>
    %328 = arith.subf %303, %327 : vector<8x32xf32>
    %cst_144 = arith.constant 9.99999974E-6 : f32
    %329 = vector.broadcast %cst_144 : f32 to vector<8x1xf32>
    %330 = arith.addf %326, %329 : vector<8x1xf32>
    %331 = math.rsqrt %330 : vector<8x1xf32>
    %332 = vector.broadcast %331 : vector<8x1xf32> to vector<8x32xf32>
    %333 = arith.mulf %328, %332 : vector<8x32xf32>
    %334 = vector.broadcast %305 : vector<1x32xf32> to vector<8x32xf32>
    %335 = arith.mulf %333, %334 : vector<8x32xf32>
    %336 = vector.broadcast %307 : vector<1x32xf32> to vector<8x32xf32>
    %337 = arith.addf %335, %336 : vector<8x32xf32>
    %338 = arith.truncf %337 : vector<8x32xf32> to vector<8x32xbf16>
    %cst_145 = arith.constant dense<0.000000e+00> : vector<8x64xf32>
    %339 = tpu.matmul %338, %309, %cst_145 {dimension_numbers = #tpu.dot_dimension_numbers<[1], [0], [0], [1], [0, 0, 1, 1], [], []>} : vector<8x32xbf16>, vector<32x64xbf16>, vector<8x64xf32> -> vector<8x64xf32>
    %340 = vector.broadcast %311 : vector<1x64xf32> to vector<8x64xf32>
    %341 = arith.addf %339, %340 : vector<8x64xf32>
    %342 = arith.mulf %341, %341 : vector<8x64xf32>
    %343 = arith.mulf %341, %342 : vector<8x64xf32>
    %cst_146 = arith.constant 4.471500e-02 : f32
    %344 = vector.broadcast %cst_146 : f32 to vector<8x64xf32>
    %345 = arith.mulf %344, %343 : vector<8x64xf32>
    %346 = arith.addf %341, %345 : vector<8x64xf32>
    %cst_147 = arith.constant 0.797884583 : f32
    %347 = vector.broadcast %cst_147 : f32 to vector<8x64xf32>
    %348 = arith.mulf %347, %346 : vector<8x64xf32>
    %349 = math.tanh %348 : vector<8x64xf32>
    %cst_148 = arith.constant 1.000000e+00 : f32
    %350 = vector.broadcast %cst_148 : f32 to vector<8x64xf32>
    %351 = arith.addf %350, %349 : vector<8x64xf32>
    %cst_149 = arith.constant 5.000000e-01 : f32
    %352 = vector.broadcast %cst_149 : f32 to vector<8x64xf32>
    %353 = arith.mulf %352, %351 : vector<8x64xf32>
    %354 = arith.mulf %341, %353 : vector<8x64xf32>
    %355 = arith.truncf %354 : vector<8x64xf32> to vector<8x64xbf16>
    %cst_150 = arith.constant dense<0.000000e+00> : vector<8x32xf32>
    %356 = tpu.matmul %355, %313, %cst_150 {dimension_numbers = #tpu.dot_dimension_numbers<[1], [0], [0], [1], [0, 0, 1, 1], [], []>} : vector<8x64xbf16>, vector<64x32xbf16>, vector<8x32xf32> -> vector<8x32xf32>
    %357 = vector.broadcast %315 : vector<1x32xf32> to vector<8x32xf32>
    %358 = arith.addf %356, %357 : vector<8x32xf32>
    %359 = arith.addf %303, %358 : vector<8x32xf32>
    %c0_151 = arith.constant 0 : index
    %c0_152 = arith.constant 0 : index
    %360 = vector.load %arg30[%c0_151, %c0_152] : memref<8x32xf32, #tpu.memory_space<vmem>>, vector<8x32xf32>
    tpu.vector_store %arg30[%c0_151, %c0_152], %359 {strides = array<i32>} : memref<8x32xf32, #tpu.memory_space<vmem>>, vector<8x32xf32>,
    %c1_i32 = arith.constant 1 : i32
    %361 = arith.cmpi eq, %arg1, %c1_i32 : i32
    %362 = arith.extui %361 : i1 to i32
    %c0_i32_153 = arith.constant 0 : i32
    %363 = arith.cmpi ne, %362, %c0_i32_153 : i32
    scf.if %363 {
      %c0_154 = arith.constant 0 : index
      %c0_155 = arith.constant 0 : index
      %364 = vector.load %arg30[%c0_154, %c0_155] : memref<8x32xf32, #tpu.memory_space<vmem>>, vector<8x32xf32>
      %c0_156 = arith.constant 0 : index
      %c0_157 = arith.constant 0 : index
      %365 = vector.load %arg27[%c0_156, %c0_157] : memref<1x32xf32, #tpu.memory_space<vmem>>, vector<1x32xf32>
      %c0_158 = arith.constant 0 : index
      %c0_159 = arith.constant 0 : index
      %366 = vector.load %arg28[%c0_158, %c0_159] : memref<1x32xf32, #tpu.memory_space<vmem>>, vector<1x32xf32>
      %cst_160 = arith.constant dense<0.000000e+00> : vector<8xf32>
      %367 = vector.multi_reduction <add>, %364, %cst_160 [1] : vector<8x32xf32> to vector<8xf32>
      %368 = vector.shape_cast %367 : vector<8xf32> to vector<8x1xf32>
      %cst_161 = arith.constant 3.200000e+01 : f32
      %369 = vector.broadcast %cst_161 : f32 to vector<8x1xf32>
      %370 = arith.divf %368, %369 : vector<8x1xf32>
      %371 = vector.broadcast %370 : vector<8x1xf32> to vector<8x32xf32>
      %372 = arith.subf %364, %371 : vector<8x32xf32>
      %373 = arith.mulf %372, %372 : vector<8x32xf32>
      %cst_162 = arith.constant dense<0.000000e+00> : vector<8xf32>
      %374 = vector.multi_reduction <add>, %373, %cst_162 [1] : vector<8x32xf32> to vector<8xf32>
      %375 = vector.shape_cast %374 : vector<8xf32> to vector<8x1xf32>
      %cst_163 = arith.constant 3.200000e+01 : f32
      %376 = vector.broadcast %cst_163 : f32 to vector<8x1xf32>
      %377 = arith.divf %375, %376 : vector<8x1xf32>
      %378 = vector.broadcast %370 : vector<8x1xf32> to vector<8x32xf32>
      %379 = arith.subf %364, %378 : vector<8x32xf32>
      %cst_164 = arith.constant 9.99999974E-6 : f32
      %380 = vector.broadcast %cst_164 : f32 to vector<8x1xf32>
      %381 = arith.addf %377, %380 : vector<8x1xf32>
      %382 = math.rsqrt %381 : vector<8x1xf32>
      %383 = vector.broadcast %382 : vector<8x1xf32> to vector<8x32xf32>
      %384 = arith.mulf %379, %383 : vector<8x32xf32>
      %385 = vector.broadcast %365 : vector<1x32xf32> to vector<8x32xf32>
      %386 = arith.mulf %384, %385 : vector<8x32xf32>
      %387 = vector.broadcast %366 : vector<1x32xf32> to vector<8x32xf32>
      %388 = arith.addf %386, %387 : vector<8x32xf32>
      %c0_165 = arith.constant 0 : index
      %c0_166 = arith.constant 0 : index
      %c0_167 = arith.constant 0 : index
      %389 = vector.load %arg29[%c0_165, %c0_166, %c0_167] : memref<1x8x32xf32, #tpu.memory_space<vmem>>, vector<1x8x32xf32>
      %390 = vector.shape_cast %389 : vector<1x8x32xf32> to vector<8x32xf32>
      %391 = vector.shape_cast %388 : vector<8x32xf32> to vector<1x8x32xf32>
      tpu.vector_store %arg29[%c0_165, %c0_166, %c0_167], %391 {strides = array<i32>} : memref<1x8x32xf32, #tpu.memory_space<vmem>>, vector<1x8x32xf32>,
    } else {
    }
    return
  }
  func.func @transform_0(%arg0: i32, %arg1: i32, %arg2: memref<2xi32, #tpu.memory_space<smem>>) -> (i32, i32, i32) {
    %c0_i32 = arith.constant 0 : i32
    %c0_i32_0 = arith.constant 0 : i32
    %c0_i32_1 = arith.constant 0 : i32
    return %arg0, %c0_i32, %c0_i32_0 : i32, i32, i32
  }
  func.func @transform_1(%arg0: i32, %arg1: i32, %arg2: memref<2xi32, #tpu.memory_space<smem>>) -> (i32, i32, i32) {
    %c0_i32 = arith.constant 0 : i32
    %c0_i32_0 = arith.constant 0 : i32
    %c0_i32_1 = arith.constant 0 : i32
    return %arg0, %c0_i32, %c0_i32_0 : i32, i32, i32
  }
  func.func @transform_2(%arg0: i32, %arg1: i32, %arg2: memref<2xi32, #tpu.memory_space<smem>>) -> (i32, i32) {
    %c0_i32 = arith.constant 0 : i32
    %c0_i32_0 = arith.constant 0 : i32
    %c0_i32_1 = arith.constant 0 : i32
    return %c0_i32, %c0_i32_0 : i32, i32
  }
  func.func @transform_3(%arg0: i32, %arg1: i32, %arg2: memref<2xi32, #tpu.memory_space<smem>>) -> (i32, i32) {
    %c0_i32 = arith.constant 0 : i32
    %c0_i32_0 = arith.constant 0 : i32
    %c0_i32_1 = arith.constant 0 : i32
    return %c0_i32, %c0_i32_0 : i32, i32
  }
  func.func @transform_4(%arg0: i32, %arg1: i32, %arg2: memref<2xi32, #tpu.memory_space<smem>>) -> (i32, i32, i32) {
    %c0_i32 = arith.constant 0 : i32
    %c0_i32_0 = arith.constant 0 : i32
    %c0_i32_1 = arith.constant 0 : i32
    return %arg1, %c0_i32, %c0_i32_0 : i32, i32, i32
  }
  func.func @transform_5(%arg0: i32, %arg1: i32, %arg2: memref<2xi32, #tpu.memory_space<smem>>) -> (i32, i32, i32) {
    %c0_i32 = arith.constant 0 : i32
    %c0_i32_0 = arith.constant 0 : i32
    %c0_i32_1 = arith.constant 0 : i32
    return %arg1, %c0_i32, %c0_i32_0 : i32, i32, i32
  }
  func.func @transform_6(%arg0: i32, %arg1: i32, %arg2: memref<2xi32, #tpu.memory_space<smem>>) -> (i32, i32, i32) {
    %c0_i32 = arith.constant 0 : i32
    %c0_i32_0 = arith.constant 0 : i32
    %c0_i32_1 = arith.constant 0 : i32
    return %arg1, %c0_i32, %c0_i32_0 : i32, i32, i32
  }
  func.func @transform_7(%arg0: i32, %arg1: i32, %arg2: memref<2xi32, #tpu.memory_space<smem>>) -> (i32, i32, i32) {
    %c0_i32 = arith.constant 0 : i32
    %c0_i32_0 = arith.constant 0 : i32
    %c0_i32_1 = arith.constant 0 : i32
    return %arg1, %c0_i32, %c0_i32_0 : i32, i32, i32
  }
  func.func @transform_8(%arg0: i32, %arg1: i32, %arg2: memref<2xi32, #tpu.memory_space<smem>>) -> (i32, i32, i32) {
    %c0_i32 = arith.constant 0 : i32
    %c0_i32_0 = arith.constant 0 : i32
    %c0_i32_1 = arith.constant 0 : i32
    return %arg1, %c0_i32, %c0_i32_0 : i32, i32, i32
  }
  func.func @transform_9(%arg0: i32, %arg1: i32, %arg2: memref<2xi32, #tpu.memory_space<smem>>) -> (i32, i32, i32) {
    %c0_i32 = arith.constant 0 : i32
    %c0_i32_0 = arith.constant 0 : i32
    %c0_i32_1 = arith.constant 0 : i32
    return %arg1, %c0_i32, %c0_i32_0 : i32, i32, i32
  }
  func.func @transform_10(%arg0: i32, %arg1: i32, %arg2: memref<2xi32, #tpu.memory_space<smem>>) -> (i32, i32, i32) {
    %c0_i32 = arith.constant 0 : i32
    %c0_i32_0 = arith.constant 0 : i32
    %c0_i32_1 = arith.constant 0 : i32
    return %arg1, %c0_i32, %c0_i32_0 : i32, i32, i32
  }
  func.func @transform_11(%arg0: i32, %arg1: i32, %arg2: memref<2xi32, #tpu.memory_space<smem>>) -> (i32, i32, i32) {
    %c0_i32 = arith.constant 0 : i32
    %c0_i32_0 = arith.constant 0 : i32
    %c0_i32_1 = arith.constant 0 : i32
    return %arg1, %c0_i32, %c0_i32_0 : i32, i32, i32
  }
  func.func @transform_12(%arg0: i32, %arg1: i32, %arg2: memref<2xi32, #tpu.memory_space<smem>>) -> (i32, i32, i32) {
    %c0_i32 = arith.constant 0 : i32
    %c0_i32_0 = arith.constant 0 : i32
    %c0_i32_1 = arith.constant 0 : i32
    return %arg1, %c0_i32, %c0_i32_0 : i32, i32, i32
  }
  func.func @transform_13(%arg0: i32, %arg1: i32, %arg2: memref<2xi32, #tpu.memory_space<smem>>) -> (i32, i32, i32) {
    %c0_i32 = arith.constant 0 : i32
    %c0_i32_0 = arith.constant 0 : i32
    %c0_i32_1 = arith.constant 0 : i32
    return %arg1, %c0_i32, %c0_i32_0 : i32, i32, i32
  }
  func.func @transform_14(%arg0: i32, %arg1: i32, %arg2: memref<2xi32, #tpu.memory_space<smem>>) -> (i32, i32, i32) {
    %c0_i32 = arith.constant 0 : i32
    %c0_i32_0 = arith.constant 0 : i32
    %c0_i32_1 = arith.constant 0 : i32
    return %arg1, %c0_i32, %c0_i32_0 : i32, i32, i32
  }
  func.func @transform_15(%arg0: i32, %arg1: i32, %arg2: memref<2xi32, #tpu.memory_space<smem>>) -> (i32, i32, i32) {
    %c0_i32 = arith.constant 0 : i32
    %c0_i32_0 = arith.constant 0 : i32
    %c0_i32_1 = arith.constant 0 : i32
    return %arg1, %c0_i32, %c0_i32_0 : i32, i32, i32
  }
  func.func @transform_16(%arg0: i32, %arg1: i32, %arg2: memref<2xi32, #tpu.memory_space<smem>>) -> (i32, i32, i32) {
    %c0_i32 = arith.constant 0 : i32
    %c0_i32_0 = arith.constant 0 : i32
    %c0_i32_1 = arith.constant 0 : i32
    return %arg1, %c0_i32, %c0_i32_0 : i32, i32, i32
  }
  func.func @transform_17(%arg0: i32, %arg1: i32, %arg2: memref<2xi32, #tpu.memory_space<smem>>) -> (i32, i32, i32) {
    %c0_i32 = arith.constant 0 : i32
    %c0_i32_0 = arith.constant 0 : i32
    %c0_i32_1 = arith.constant 0 : i32
    return %arg1, %c0_i32, %c0_i32_0 : i32, i32, i32
  }
  func.func @transform_18(%arg0: i32, %arg1: i32, %arg2: memref<2xi32, #tpu.memory_space<smem>>) -> (i32, i32, i32) {
    %c0_i32 = arith.constant 0 : i32
    %c0_i32_0 = arith.constant 0 : i32
    %c0_i32_1 = arith.constant 0 : i32
    return %arg1, %c0_i32, %c0_i32_0 : i32, i32, i32
  }
  func.func @transform_19(%arg0: i32, %arg1: i32, %arg2: memref<2xi32, #tpu.memory_space<smem>>) -> (i32, i32, i32) {
    %c0_i32 = arith.constant 0 : i32
    %c0_i32_0 = arith.constant 0 : i32
    %c0_i32_1 = arith.constant 0 : i32
    return %arg1, %c0_i32, %c0_i32_0 : i32, i32, i32
  }
  func.func @transform_20(%arg0: i32, %arg1: i32, %arg2: memref<2xi32, #tpu.memory_space<smem>>) -> (i32, i32, i32) {
    %c0_i32 = arith.constant 0 : i32
    %c0_i32_0 = arith.constant 0 : i32
    %c0_i32_1 = arith.constant 0 : i32
    return %arg1, %c0_i32, %c0_i32_0 : i32, i32, i32
  }
  func.func @transform_21(%arg0: i32, %arg1: i32, %arg2: memref<2xi32, #tpu.memory_space<smem>>) -> (i32, i32, i32) {
    %c0_i32 = arith.constant 0 : i32
    %c0_i32_0 = arith.constant 0 : i32
    %c0_i32_1 = arith.constant 0 : i32
    return %arg1, %c0_i32, %c0_i32_0 : i32, i32, i32
  }
  func.func @transform_22(%arg0: i32, %arg1: i32, %arg2: memref<2xi32, #tpu.memory_space<smem>>) -> (i32, i32, i32) {
    %c0_i32 = arith.constant 0 : i32
    %c0_i32_0 = arith.constant 0 : i32
    %c0_i32_1 = arith.constant 0 : i32
    return %arg1, %c0_i32, %c0_i32_0 : i32, i32, i32
  }
  func.func @transform_23(%arg0: i32, %arg1: i32, %arg2: memref<2xi32, #tpu.memory_space<smem>>) -> (i32, i32, i32) {
    %c0_i32 = arith.constant 0 : i32
    %c0_i32_0 = arith.constant 0 : i32
    %c0_i32_1 = arith.constant 0 : i32
    return %arg1, %c0_i32, %c0_i32_0 : i32, i32, i32
  }
  func.func @transform_24(%arg0: i32, %arg1: i32, %arg2: memref<2xi32, #tpu.memory_space<smem>>) -> (i32, i32) {
    %c0_i32 = arith.constant 0 : i32
    %c0_i32_0 = arith.constant 0 : i32
    %c0_i32_1 = arith.constant 0 : i32
    return %c0_i32, %c0_i32_0 : i32, i32
  }
  func.func @transform_25(%arg0: i32, %arg1: i32, %arg2: memref<2xi32, #tpu.memory_space<smem>>) -> (i32, i32) {
    %c0_i32 = arith.constant 0 : i32
    %c0_i32_0 = arith.constant 0 : i32
    %c0_i32_1 = arith.constant 0 : i32
    return %c0_i32, %c0_i32_0 : i32, i32
  }
  func.func @transform_26(%arg0: i32, %arg1: i32, %arg2: memref<2xi32, #tpu.memory_space<smem>>) -> (i32, i32, i32) {
    %c0_i32 = arith.constant 0 : i32
    %c0_i32_0 = arith.constant 0 : i32
    %c0_i32_1 = arith.constant 0 : i32
    return %arg0, %c0_i32, %c0_i32_0 : i32, i32, i32
  }
}

</mosaic_0001>

<llo_original>
// kernel: _lambda_.2
$region0: #{_lambda_.2}
  #allocation0 [shape = 'u32[]', space=smem, size = 0x4, offset = 0x4, fixed_abs, tag = 'smem constant byte address 0x4 - core index']
  #allocation1 [shape = 'u32[144,128]{1,0:T(1,128)}', space=vmem, size = 0x12000, scoped, tag = 'internal scratch']
  #allocation2 [shape = 'f32[8,32]{1,0:T(8,128)}', space=vmem, size = 0x1000, scoped, tag = 'scratch operand']
  #allocation3 [shape = 'f32[8,32]{1,0:T(8,128)}', space=vmem, size = 0x1000, scoped, tag = 'scratch operand']
  #allocation4 [shape = 's32[1]{0}', space=sflag, size = 0x4, scoped, tag = 'scoped memory for _lambda_.2']
  #allocation5 [shape = 'u8[512]{0}', space=smem, size = 0x200, scoped, tag = 'prefetched SMEM operand 0']
  %s0 = inlined_call_operand.vmem [shape: s32[2], index: 0, kind: input, shape index: {}]
  %s1 = inlined_call_operand.vmem [shape: f32[2,8,32], index: 1, kind: input, shape index: {}]
  %s2 = inlined_call_operand.vmem [shape: f32[1,32], index: 2, kind: input, shape index: {}]
  %s3 = inlined_call_operand.vmem [shape: f32[1,32], index: 3, kind: input, shape index: {}]
  %s4 = inlined_call_operand.vmem [shape: f32[2,1,32], index: 4, kind: input, shape index: {}]
  %s5 = inlined_call_operand.vmem [shape: f32[2,1,32], index: 5, kind: input, shape index: {}]
  %s6 = inlined_call_operand.vmem [shape: bf16[2,32,96], index: 6, kind: input, shape index: {}]
  %s7 = inlined_call_operand.vmem [shape: f32[2,1,96], index: 7, kind: input, shape index: {}]
  %s8 = inlined_call_operand.vmem [shape: bf16[2,32,32], index: 8, kind: input, shape index: {}]
  %s9 = inlined_call_operand.vmem [shape: f32[2,1,32], index: 9, kind: input, shape index: {}]
  %s10 = inlined_call_operand.vmem [shape: f32[2,1,32], index: 10, kind: input, shape index: {}]
  %s11 = inlined_call_operand.vmem [shape: f32[2,1,32], index: 11, kind: input, shape index: {}]
  %s12 = inlined_call_operand.vmem [shape: bf16[2,32,64], index: 12, kind: input, shape index: {}]
  %s13 = inlined_call_operand.vmem [shape: f32[2,1,64], index: 13, kind: input, shape index: {}]
  %s14 = inlined_call_operand.vmem [shape: bf16[2,64,32], index: 14, kind: input, shape index: {}]
  %s15 = inlined_call_operand.vmem [shape: f32[2,1,32], index: 15, kind: input, shape index: {}]
  %s16 = inlined_call_operand.vmem [shape: f32[1,32], index: 16, kind: input, shape index: {}]
  %s17 = inlined_call_operand.vmem [shape: f32[1,32], index: 17, kind: input, shape index: {}]
  %s18 = inlined_call_operand.vmem [shape: f32[2,8,32], index: 18, kind: output, shape index: {}]
  %s19 = sld [smem:[#allocation0]]
  $region109: #{_lambda_.2} parent=0
    _
  %s21 = ssub.s32 1, %s19
  %s22 = scalar_select 0, %s21, %s19
  %s23 = sshll.u32 %s0, 4
  %s24 = int_to_ptr.vmem [resolvable:$true] %s23
  %26 = dma.vmem_to_smem %s24, 16, [#allocation5], [#allocation4]
  %27 = dma.done [#allocation4], 16
  %28 = sfence
  loop: start=0, step=1, limit=6
  $region2: #{_lambda_.2} parent=0 // loop_pre_header
    _
  $region3: #{_lambda_.2} parent=0 // loop_header
    %s30 = sphi 0, %s34
    %p31 = scmp.ge.s32.totalorder %s30, 6
    %s37 = sphi 0, %s49
    %s38 = sphi 0, %s45
    %s39 = sphi 0, %s37
    %s40 = sphi 0, %s38
    %s41 = sphi 0, %s39
    %s42 = sphi 0, %s40
    %s52 = sphi 0, %s54
    %s55 = sphi 0, %s52
    %s56 = sphi 0, %s55
    %s72 = sphi 0, %s56
    %s76 = sphi 0, %s76
    %s78 = sphi 0, %s76
    %s79 = sphi 0, %s78
    %s93 = sphi 0, %s79
    %s97 = sphi 0, %s97
    %s99 = sphi 0, %s97
    %s100 = sphi 0, %s99
    %s114 = sphi 0, %s100
    %s120 = sphi 0, %s122
    %s123 = sphi 0, %s120
    %s124 = sphi 0, %s123
    %s140 = sphi 0, %s124
    %s146 = sphi 0, %s148
    %s149 = sphi 0, %s146
    %s150 = sphi 0, %s149
    %s166 = sphi 0, %s150
    %s172 = sphi 0, %s174
    %s175 = sphi 0, %s172
    %s176 = sphi 0, %s175
    %s192 = sphi 0, %s176
    %s198 = sphi 0, %s200
    %s201 = sphi 0, %s198
    %s202 = sphi 0, %s201
    %s218 = sphi 0, %s202
    %s224 = sphi 0, %s226
    %s227 = sphi 0, %s224
    %s228 = sphi 0, %s227
    %s244 = sphi 0, %s228
    %s250 = sphi 0, %s252
    %s253 = sphi 0, %s250
    %s254 = sphi 0, %s253
    %s270 = sphi 0, %s254
    %s276 = sphi 0, %s278
    %s279 = sphi 0, %s276
    %s280 = sphi 0, %s279
    %s296 = sphi 0, %s280
    %s302 = sphi 0, %s304
    %s305 = sphi 0, %s302
    %s306 = sphi 0, %s305
    %s322 = sphi 0, %s306
    %s328 = sphi 0, %s330
    %s331 = sphi 0, %s328
    %s332 = sphi 0, %s331
    %s348 = sphi 0, %s332
    %s354 = sphi 0, %s356
    %s357 = sphi 0, %s354
    %s358 = sphi 0, %s357
    %s374 = sphi 0, %s358
    %s380 = sphi 0, %s382
    %s383 = sphi 0, %s380
    %s384 = sphi 0, %s383
    %s400 = sphi 0, %s384
    %s406 = sphi 0, %s408
    %s409 = sphi 0, %s406
    %s410 = sphi 0, %s409
    %s426 = sphi 0, %s410
    %s430 = sphi 0, %s430
    %s432 = sphi 0, %s430
    %s433 = sphi 0, %s432
    %s447 = sphi 0, %s433
    %s451 = sphi 0, %s451
    %s453 = sphi 0, %s451
    %s454 = sphi 0, %s453
    %s468 = sphi 0, %s454
    %s474 = sphi 0, %s476
    %s477 = sphi 0, %s474
    %s478 = sphi 0, %s477
    %s494 = sphi 0, %s478
  $region4: #{_lambda_.2} parent=0 // loop_header_branch
    %33 = sbr.rel (%p31) target = $region8
  $region5: #{_lambda_.2} parent=0 // loop_body
    %s35 = ssub.s32 %s30, 1
    %s36 = ssub.s32 %s30, 2
    %s43 = sadd.s32 1, %s38
    %p44 = scmp.ge.s32.totalorder %s43, 2
    %s45 = scalar_select %p44, 0, %s43
    %s46 = sadd.s32 1, %s37
    %s47 = scalar_select %p44, %s46, %s37
    %p48 = scmp.ge.s32.totalorder %s47, 2
    %s49 = scalar_select %p48, 0, %s47
    %s50 = ssub.s32 %s37, %s49
    %p51 = scmp.eq.s32.totalorder %s50, 0
    %s53 = sadd.s32 %s52, 1
    %s54 = scalar_select %p51, %s52, %s53
    %p57 = pneg %p51
    %p58 = scmp.eq.s32.totalorder %s30, 3
    %p59 = por %p57, %p58
    %p60 = scmp.ne.s32.totalorder %s52, %s55
    %p61 = scmp.eq.s32.totalorder %s30, 0
    %p62 = por %p60, %p61
    %p63 = scmp.ne.s32.totalorder %s52, %s55
    %p64 = scmp.eq.s32.totalorder %s35, 3
    %p65 = por %p63, %p64
    %p66 = scmp.ne.s32.totalorder %s55, %s56
    %p67 = scmp.eq.s32.totalorder %s35, 0
    %p68 = por %p66, %p67
    %p69 = scmp.ne.s32.totalorder %s55, %s56
    %p70 = scmp.eq.s32.totalorder %s36, 3
    %p71 = por %p69, %p70
    %p73 = scmp.ne.s32.totalorder %s56, %s72
    %p74 = scmp.eq.s32.totalorder %s36, 0
    %p75 = por %p73, %p74
    %s77 = sadd.s32 %s76, 1
    %p80 = scmp.eq.s32.totalorder %s30, 3
    %p81 = scmp.ne.s32.totalorder %s76, %s78
    %p82 = scmp.eq.s32.totalorder %s30, 0
    %p83 = por %p81, %p82
    %p84 = scmp.ne.s32.totalorder %s76, %s78
    %p85 = scmp.eq.s32.totalorder %s35, 3
    %p86 = por %p84, %p85
    %p87 = scmp.ne.s32.totalorder %s78, %s79
    %p88 = scmp.eq.s32.totalorder %s35, 0
    %p89 = por %p87, %p88
    %p90 = scmp.ne.s32.totalorder %s78, %s79
    %p91 = scmp.eq.s32.totalorder %s36, 3
    %p92 = por %p90, %p91
    %p94 = scmp.ne.s32.totalorder %s79, %s93
    %p95 = scmp.eq.s32.totalorder %s36, 0
    %p96 = por %p94, %p95
    %s98 = sadd.s32 %s97, 1
    %p101 = scmp.eq.s32.totalorder %s30, 3
    %p102 = scmp.ne.s32.totalorder %s97, %s99
    %p103 = scmp.eq.s32.totalorder %s30, 0
    %p104 = por %p102, %p103
    %p105 = scmp.ne.s32.totalorder %s97, %s99
    %p106 = scmp.eq.s32.totalorder %s35, 3
    %p107 = por %p105, %p106
    %p108 = scmp.ne.s32.totalorder %s99, %s100
    %p109 = scmp.eq.s32.totalorder %s35, 0
    %p110 = por %p108, %p109
    %p111 = scmp.ne.s32.totalorder %s99, %s100
    %p112 = scmp.eq.s32.totalorder %s36, 3
    %p113 = por %p111, %p112
    %p115 = scmp.ne.s32.totalorder %s100, %s114
    %p116 = scmp.eq.s32.totalorder %s36, 0
    %p117 = por %p115, %p116
    %s118 = ssub.s32 %s38, %s45
    %p119 = scmp.eq.s32.totalorder %s118, 0
    %s121 = sadd.s32 %s120, 1
    %s122 = scalar_select %p119, %s120, %s121
    %p125 = pneg %p119
    %p126 = scmp.eq.s32.totalorder %s30, 3
    %p127 = por %p125, %p126
    %p128 = scmp.ne.s32.totalorder %s120, %s123
    %p129 = scmp.eq.s32.totalorder %s30, 0
    %p130 = por %p128, %p129
    %p131 = scmp.ne.s32.totalorder %s120, %s123
    %p132 = scmp.eq.s32.totalorder %s35, 3
    %p133 = por %p131, %p132
    %p134 = scmp.ne.s32.totalorder %s123, %s124
    %p135 = scmp.eq.s32.totalorder %s35, 0
    %p136 = por %p134, %p135
    %p137 = scmp.ne.s32.totalorder %s123, %s124
    %p138 = scmp.eq.s32.totalorder %s36, 3
    %p139 = por %p137, %p138
    %p141 = scmp.ne.s32.totalorder %s124, %s140
    %p142 = scmp.eq.s32.totalorder %s36, 0
    %p143 = por %p141, %p142
    %s144 = ssub.s32 %s38, %s45
    %p145 = scmp.eq.s32.totalorder %s144, 0
    %s147 = sadd.s32 %s146, 1
    %s148 = scalar_select %p145, %s146, %s147
    %p151 = pneg %p145
    %p152 = scmp.eq.s32.totalorder %s30, 3
    %p153 = por %p151, %p152
    %p154 = scmp.ne.s32.totalorder %s146, %s149
    %p155 = scmp.eq.s32.totalorder %s30, 0
    %p156 = por %p154, %p155
    %p157 = scmp.ne.s32.totalorder %s146, %s149
    %p158 = scmp.eq.s32.totalorder %s35, 3
    %p159 = por %p157, %p158
    %p160 = scmp.ne.s32.totalorder %s149, %s150
    %p161 = scmp.eq.s32.totalorder %s35, 0
    %p162 = por %p160, %p161
    %p163 = scmp.ne.s32.totalorder %s149, %s150
    %p164 = scmp.eq.s32.totalorder %s36, 3
    %p165 = por %p163, %p164
    %p167 = scmp.ne.s32.totalorder %s150, %s166
    %p168 = scmp.eq.s32.totalorder %s36, 0
    %p169 = por %p167, %p168
    %s170 = ssub.s32 %s38, %s45
    %p171 = scmp.eq.s32.totalorder %s170, 0
    %s173 = sadd.s32 %s172, 1
    %s174 = scalar_select %p171, %s172, %s173
    %p177 = pneg %p171
    %p178 = scmp.eq.s32.totalorder %s30, 3
    %p179 = por %p177, %p178
    %p180 = scmp.ne.s32.totalorder %s172, %s175
    %p181 = scmp.eq.s32.totalorder %s30, 0
    %p182 = por %p180, %p181
    %p183 = scmp.ne.s32.totalorder %s172, %s175
    %p184 = scmp.eq.s32.totalorder %s35, 3
    %p185 = por %p183, %p184
    %p186 = scmp.ne.s32.totalorder %s175, %s176
    %p187 = scmp.eq.s32.totalorder %s35, 0
    %p188 = por %p186, %p187
    %p189 = scmp.ne.s32.totalorder %s175, %s176
    %p190 = scmp.eq.s32.totalorder %s36, 3
    %p191 = por %p189, %p190
    %p193 = scmp.ne.s32.totalorder %s176, %s192
    %p194 = scmp.eq.s32.totalorder %s36, 0
    %p195 = por %p193, %p194
    %s196 = ssub.s32 %s38, %s45
    %p197 = scmp.eq.s32.totalorder %s196, 0
    %s199 = sadd.s32 %s198, 1
    %s200 = scalar_select %p197, %s198, %s199
    %p203 = pneg %p197
    %p204 = scmp.eq.s32.totalorder %s30, 3
    %p205 = por %p203, %p204
    %p206 = scmp.ne.s32.totalorder %s198, %s201
    %p207 = scmp.eq.s32.totalorder %s30, 0
    %p208 = por %p206, %p207
    %p209 = scmp.ne.s32.totalorder %s198, %s201
    %p210 = scmp.eq.s32.totalorder %s35, 3
    %p211 = por %p209, %p210
    %p212 = scmp.ne.s32.totalorder %s201, %s202
    %p213 = scmp.eq.s32.totalorder %s35, 0
    %p214 = por %p212, %p213
    %p215 = scmp.ne.s32.totalorder %s201, %s202
    %p216 = scmp.eq.s32.totalorder %s36, 3
    %p217 = por %p215, %p216
    %p219 = scmp.ne.s32.totalorder %s202, %s218
    %p220 = scmp.eq.s32.totalorder %s36, 0
    %p221 = por %p219, %p220
    %s222 = ssub.s32 %s38, %s45
    %p223 = scmp.eq.s32.totalorder %s222, 0
    %s225 = sadd.s32 %s224, 1
    %s226 = scalar_select %p223, %s224, %s225
    %p229 = pneg %p223
    %p230 = scmp.eq.s32.totalorder %s30, 3
    %p231 = por %p229, %p230
    %p232 = scmp.ne.s32.totalorder %s224, %s227
    %p233 = scmp.eq.s32.totalorder %s30, 0
    %p234 = por %p232, %p233
    %p235 = scmp.ne.s32.totalorder %s224, %s227
    %p236 = scmp.eq.s32.totalorder %s35, 3
    %p237 = por %p235, %p236
    %p238 = scmp.ne.s32.totalorder %s227, %s228
    %p239 = scmp.eq.s32.totalorder %s35, 0
    %p240 = por %p238, %p239
    %p241 = scmp.ne.s32.totalorder %s227, %s228
    %p242 = scmp.eq.s32.totalorder %s36, 3
    %p243 = por %p241, %p242
    %p245 = scmp.ne.s32.totalorder %s228, %s244
    %p246 = scmp.eq.s32.totalorder %s36, 0
    %p247 = por %p245, %p246
    %s248 = ssub.s32 %s38, %s45
    %p249 = scmp.eq.s32.totalorder %s248, 0
    %s251 = sadd.s32 %s250, 1
    %s252 = scalar_select %p249, %s250, %s251
    %p255 = pneg %p249
    %p256 = scmp.eq.s32.totalorder %s30, 3
    %p257 = por %p255, %p256
    %p258 = scmp.ne.s32.totalorder %s250, %s253
    %p259 = scmp.eq.s32.totalorder %s30, 0
    %p260 = por %p258, %p259
    %p261 = scmp.ne.s32.totalorder %s250, %s253
    %p262 = scmp.eq.s32.totalorder %s35, 3
    %p263 = por %p261, %p262
    %p264 = scmp.ne.s32.totalorder %s253, %s254
    %p265 = scmp.eq.s32.totalorder %s35, 0
    %p266 = por %p264, %p265
    %p267 = scmp.ne.s32.totalorder %s253, %s254
    %p268 = scmp.eq.s32.totalorder %s36, 3
    %p269 = por %p267, %p268
    %p271 = scmp.ne.s32.totalorder %s254, %s270
    %p272 = scmp.eq.s32.totalorder %s36, 0
    %p273 = por %p271, %p272
    %s274 = ssub.s32 %s38, %s45
    %p275 = scmp.eq.s32.totalorder %s274, 0
    %s277 = sadd.s32 %s276, 1
    %s278 = scalar_select %p275, %s276, %s277
    %p281 = pneg %p275
    %p282 = scmp.eq.s32.totalorder %s30, 3
    %p283 = por %p281, %p282
    %p284 = scmp.ne.s32.totalorder %s276, %s279
    %p285 = scmp.eq.s32.totalorder %s30, 0
    %p286 = por %p284, %p285
    %p287 = scmp.ne.s32.totalorder %s276, %s279
    %p288 = scmp.eq.s32.totalorder %s35, 3
    %p289 = por %p287, %p288
    %p290 = scmp.ne.s32.totalorder %s279, %s280
    %p291 = scmp.eq.s32.totalorder %s35, 0
    %p292 = por %p290, %p291
    %p293 = scmp.ne.s32.totalorder %s279, %s280
    %p294 = scmp.eq.s32.totalorder %s36, 3
    %p295 = por %p293, %p294
    %p297 = scmp.ne.s32.totalorder %s280, %s296
    %p298 = scmp.eq.s32.totalorder %s36, 0
    %p299 = por %p297, %p298
    %s300 = ssub.s32 %s38, %s45
    %p301 = scmp.eq.s32.totalorder %s300, 0
    %s303 = sadd.s32 %s302, 1
    %s304 = scalar_select %p301, %s302, %s303
    %p307 = pneg %p301
    %p308 = scmp.eq.s32.totalorder %s30, 3
    %p309 = por %p307, %p308
    %p310 = scmp.ne.s32.totalorder %s302, %s305
    %p311 = scmp.eq.s32.totalorder %s30, 0
    %p312 = por %p310, %p311
    %p313 = scmp.ne.s32.totalorder %s302, %s305
    %p314 = scmp.eq.s32.totalorder %s35, 3
    %p315 = por %p313, %p314
    %p316 = scmp.ne.s32.totalorder %s305, %s306
    %p317 = scmp.eq.s32.totalorder %s35, 0
    %p318 = por %p316, %p317
    %p319 = scmp.ne.s32.totalorder %s305, %s306
    %p320 = scmp.eq.s32.totalorder %s36, 3
    %p321 = por %p319, %p320
    %p323 = scmp.ne.s32.totalorder %s306, %s322
    %p324 = scmp.eq.s32.totalorder %s36, 0
    %p325 = por %p323, %p324
    %s326 = ssub.s32 %s38, %s45
    %p327 = scmp.eq.s32.totalorder %s326, 0
    %s329 = sadd.s32 %s328, 1
    %s330 = scalar_select %p327, %s328, %s329
    %p333 = pneg %p327
    %p334 = scmp.eq.s32.totalorder %s30, 3
    %p335 = por %p333, %p334
    %p336 = scmp.ne.s32.totalorder %s328, %s331
    %p337 = scmp.eq.s32.totalorder %s30, 0
    %p338 = por %p336, %p337
    %p339 = scmp.ne.s32.totalorder %s328, %s331
    %p340 = scmp.eq.s32.totalorder %s35, 3
    %p341 = por %p339, %p340
    %p342 = scmp.ne.s32.totalorder %s331, %s332
    %p343 = scmp.eq.s32.totalorder %s35, 0
    %p344 = por %p342, %p343
    %p345 = scmp.ne.s32.totalorder %s331, %s332
    %p346 = scmp.eq.s32.totalorder %s36, 3
    %p347 = por %p345, %p346
    %p349 = scmp.ne.s32.totalorder %s332, %s348
    %p350 = scmp.eq.s32.totalorder %s36, 0
    %p351 = por %p349, %p350
    %s352 = ssub.s32 %s38, %s45
    %p353 = scmp.eq.s32.totalorder %s352, 0
    %s355 = sadd.s32 %s354, 1
    %s356 = scalar_select %p353, %s354, %s355
    %p359 = pneg %p353
    %p360 = scmp.eq.s32.totalorder %s30, 3
    %p361 = por %p359, %p360
    %p362 = scmp.ne.s32.totalorder %s354, %s357
    %p363 = scmp.eq.s32.totalorder %s30, 0
    %p364 = por %p362, %p363
    %p365 = scmp.ne.s32.totalorder %s354, %s357
    %p366 = scmp.eq.s32.totalorder %s35, 3
    %p367 = por %p365, %p366
    %p368 = scmp.ne.s32.totalorder %s357, %s358
    %p369 = scmp.eq.s32.totalorder %s35, 0
    %p370 = por %p368, %p369
    %p371 = scmp.ne.s32.totalorder %s357, %s358
    %p372 = scmp.eq.s32.totalorder %s36, 3
    %p373 = por %p371, %p372
    %p375 = scmp.ne.s32.totalorder %s358, %s374
    %p376 = scmp.eq.s32.totalorder %s36, 0
    %p377 = por %p375, %p376
    %s378 = ssub.s32 %s38, %s45
    %p379 = scmp.eq.s32.totalorder %s378, 0
    %s381 = sadd.s32 %s380, 1
    %s382 = scalar_select %p379, %s380, %s381
    %p385 = pneg %p379
    %p386 = scmp.eq.s32.totalorder %s30, 3
    %p387 = por %p385, %p386
    %p388 = scmp.ne.s32.totalorder %s380, %s383
    %p389 = scmp.eq.s32.totalorder %s30, 0
    %p390 = por %p388, %p389
    %p391 = scmp.ne.s32.totalorder %s380, %s383
    %p392 = scmp.eq.s32.totalorder %s35, 3
    %p393 = por %p391, %p392
    %p394 = scmp.ne.s32.totalorder %s383, %s384
    %p395 = scmp.eq.s32.totalorder %s35, 0
    %p396 = por %p394, %p395
    %p397 = scmp.ne.s32.totalorder %s383, %s384
    %p398 = scmp.eq.s32.totalorder %s36, 3
    %p399 = por %p397, %p398
    %p401 = scmp.ne.s32.totalorder %s384, %s400
    %p402 = scmp.eq.s32.totalorder %s36, 0
    %p403 = por %p401, %p402
    %s404 = ssub.s32 %s38, %s45
    %p405 = scmp.eq.s32.totalorder %s404, 0
    %s407 = sadd.s32 %s406, 1
    %s408 = scalar_select %p405, %s406, %s407
    %p411 = pneg %p405
    %p412 = scmp.eq.s32.totalorder %s30, 3
    %p413 = por %p411, %p412
    %p414 = scmp.ne.s32.totalorder %s406, %s409
    %p415 = scmp.eq.s32.totalorder %s30, 0
    %p416 = por %p414, %p415
    %p417 = scmp.ne.s32.totalorder %s406, %s409
    %p418 = scmp.eq.s32.totalorder %s35, 3
    %p419 = por %p417, %p418
    %p420 = scmp.ne.s32.totalorder %s409, %s410
    %p421 = scmp.eq.s32.totalorder %s35, 0
    %p422 = por %p420, %p421
    %p423 = scmp.ne.s32.totalorder %s409, %s410
    %p424 = scmp.eq.s32.totalorder %s36, 3
    %p425 = por %p423, %p424
    %p427 = scmp.ne.s32.totalorder %s410, %s426
    %p428 = scmp.eq.s32.totalorder %s36, 0
    %p429 = por %p427, %p428
    %s431 = sadd.s32 %s430, 1
    %p434 = scmp.eq.s32.totalorder %s30, 3
    %p435 = scmp.ne.s32.totalorder %s430, %s432
    %p436 = scmp.eq.s32.totalorder %s30, 0
    %p437 = por %p435, %p436
    %p438 = scmp.ne.s32.totalorder %s430, %s432
    %p439 = scmp.eq.s32.totalorder %s35, 3
    %p440 = por %p438, %p439
    %p441 = scmp.ne.s32.totalorder %s432, %s433
    %p442 = scmp.eq.s32.totalorder %s35, 0
    %p443 = por %p441, %p442
    %p444 = scmp.ne.s32.totalorder %s432, %s433
    %p445 = scmp.eq.s32.totalorder %s36, 3
    %p446 = por %p444, %p445
    %p448 = scmp.ne.s32.totalorder %s433, %s447
    %p449 = scmp.eq.s32.totalorder %s36, 0
    %p450 = por %p448, %p449
    %s452 = sadd.s32 %s451, 1
    %p455 = scmp.eq.s32.totalorder %s30, 3
    %p456 = scmp.ne.s32.totalorder %s451, %s453
    %p457 = scmp.eq.s32.totalorder %s30, 0
    %p458 = por %p456, %p457
    %p459 = scmp.ne.s32.totalorder %s451, %s453
    %p460 = scmp.eq.s32.totalorder %s35, 3
    %p461 = por %p459, %p460
    %p462 = scmp.ne.s32.totalorder %s453, %s454
    %p463 = scmp.eq.s32.totalorder %s35, 0
    %p464 = por %p462, %p463
    %p465 = scmp.ne.s32.totalorder %s453, %s454
    %p466 = scmp.eq.s32.totalorder %s36, 3
    %p467 = por %p465, %p466
    %p469 = scmp.ne.s32.totalorder %s454, %s468
    %p470 = scmp.eq.s32.totalorder %s36, 0
    %p471 = por %p469, %p470
    %s472 = ssub.s32 %s37, %s49
    %p473 = scmp.eq.s32.totalorder %s472, 0
    %s475 = sadd.s32 %s474, 1
    %s476 = scalar_select %p473, %s474, %s475
    %p479 = pneg %p473
    %p480 = scmp.eq.s32.totalorder %s30, 3
    %p481 = por %p479, %p480
    %p482 = scmp.ne.s32.totalorder %s474, %s477
    %p483 = scmp.eq.s32.totalorder %s30, 0
    %p484 = por %p482, %p483
    %p485 = scmp.ne.s32.totalorder %s474, %s477
    %p486 = scmp.eq.s32.totalorder %s35, 3
    %p487 = por %p485, %p486
    %p488 = scmp.ne.s32.totalorder %s477, %s478
    %p489 = scmp.eq.s32.totalorder %s35, 0
    %p490 = por %p488, %p489
    %p491 = scmp.ne.s32.totalorder %s477, %s478
    %p492 = scmp.eq.s32.totalorder %s36, 3
    %p493 = por %p491, %p492
    %p495 = scmp.ne.s32.totalorder %s478, %s494
    %p496 = scmp.eq.s32.totalorder %s36, 0
    %p497 = por %p495, %p496
    %p498 = scmp.le.s32.totalorder 1, %s30
    %p499 = scmp.lt.s32.totalorder %s30, 5
    %p500 = pnand %p498, %p499
    %p501 = pneg %p500
    // Predicated region
    $region9: #{_lambda_.2} parent=5 // pred_check
      _
    $region10: #{_lambda_.2} parent=5 // pred_check_branch
      %503 = sbr.rel (%p500) target = $region12
    $region11: #{_lambda_.2} parent=5 // pred_region
      %s504 = ssub.s32 %s30, 1
      // Predicated region
      $region13: #{_lambda_.2} parent=11 // pred_check
        %p505 = pneg %p89
      $region14: #{_lambda_.2} parent=11 // pred_check_branch
        %507 = sbr.rel (%p505) target = $region16
      $region15: #{_lambda_.2} parent=11 // pred_region
        _
      $region16: #{_lambda_.2} parent=11 // pred_fallthru
        _
      // Predicated region
      $region17: #{_lambda_.2} parent=11 // pred_check
        %p508 = pneg %p110
      $region18: #{_lambda_.2} parent=11 // pred_check_branch
        %510 = sbr.rel (%p508) target = $region20
      $region19: #{_lambda_.2} parent=11 // pred_region
        _
      $region20: #{_lambda_.2} parent=11 // pred_fallthru
        _
      // Predicated region
      $region21: #{_lambda_.2} parent=11 // pred_check
        %p511 = pneg %p443
      $region22: #{_lambda_.2} parent=11 // pred_check_branch
        %513 = sbr.rel (%p511) target = $region24
      $region23: #{_lambda_.2} parent=11 // pred_region
        _
      $region24: #{_lambda_.2} parent=11 // pred_fallthru
        _
      // Predicated region
      $region25: #{_lambda_.2} parent=11 // pred_check
        %p514 = pneg %p464
      $region26: #{_lambda_.2} parent=11 // pred_check_branch
        %516 = sbr.rel (%p514) target = $region28
      $region27: #{_lambda_.2} parent=11 // pred_region
        _
      $region28: #{_lambda_.2} parent=11 // pred_fallthru
        _
    $region12: #{_lambda_.2} parent=5 // pred_fallthru
      _
    %p517 = scmp.lt.s32.totalorder %s30, 4
    // Predicated region
    $region29: #{_lambda_.2} parent=5 // pred_check
      %p518 = pneg %p517
    $region30: #{_lambda_.2} parent=5 // pred_check_branch
      %520 = sbr.rel (%p518) target = $region32
    $region31: #{_lambda_.2} parent=5 // pred_region
      // Predicated region
      $region33: #{_lambda_.2} parent=31 // pred_check
        %p521 = pneg %p62
      $region34: #{_lambda_.2} parent=31 // pred_check_branch
        %523 = sbr.rel (%p521) target = $region36
      $region35: #{_lambda_.2} parent=31 // pred_region
        %p524 = scmp.lt.s32.totalorder %s37, 1
        %s525 = scalar_select %p524, %s37, 1
        %s526 = smul.addr %s525, 8
        %s527 = scalar_lea.vmem %s1, %s526
      $region36: #{_lambda_.2} parent=31 // pred_fallthru
        _
      // Predicated region
      $region37: #{_lambda_.2} parent=31 // pred_check
        %p528 = pneg %p130
      $region38: #{_lambda_.2} parent=31 // pred_check_branch
        %530 = sbr.rel (%p528) target = $region40
      $region39: #{_lambda_.2} parent=31 // pred_region
        %p531 = scmp.lt.s32.totalorder %s38, 1
        %s532 = scalar_select %p531, %s38, 1
        %s533 = scalar_lea.vmem %s4, %s532
      $region40: #{_lambda_.2} parent=31 // pred_fallthru
        _
      // Predicated region
      $region41: #{_lambda_.2} parent=31 // pred_check
        %p534 = pneg %p156
      $region42: #{_lambda_.2} parent=31 // pred_check_branch
        %536 = sbr.rel (%p534) target = $region44
      $region43: #{_lambda_.2} parent=31 // pred_region
        %p537 = scmp.lt.s32.totalorder %s38, 1
        %s538 = scalar_select %p537, %s38, 1
        %s539 = scalar_lea.vmem %s5, %s538
      $region44: #{_lambda_.2} parent=31 // pred_fallthru
        _
      // Predicated region
      $region45: #{_lambda_.2} parent=31 // pred_check
        %p540 = pneg %p182
      $region46: #{_lambda_.2} parent=31 // pred_check_branch
        %542 = sbr.rel (%p540) target = $region48
      $region47: #{_lambda_.2} parent=31 // pred_region
        %p543 = scmp.lt.s32.totalorder %s38, 1
        %s544 = scalar_select %p543, %s38, 1
        %s545 = smul.addr %s544, 4
        %s546 = smul.addr %s545, 4
        %s547 = scalar_lea.vmem %s6, %s546
      $region48: #{_lambda_.2} parent=31 // pred_fallthru
        _
      // Predicated region
      $region49: #{_lambda_.2} parent=31 // pred_check
        %p548 = pneg %p208
      $region50: #{_lambda_.2} parent=31 // pred_check_branch
        %550 = sbr.rel (%p548) target = $region52
      $region51: #{_lambda_.2} parent=31 // pred_region
        %p551 = scmp.lt.s32.totalorder %s38, 1
        %s552 = scalar_select %p551, %s38, 1
        %s553 = scalar_lea.vmem %s7, %s552
      $region52: #{_lambda_.2} parent=31 // pred_fallthru
        _
      // Predicated region
      $region53: #{_lambda_.2} parent=31 // pred_check
        %p554 = pneg %p234
      $region54: #{_lambda_.2} parent=31 // pred_check_branch
        %556 = sbr.rel (%p554) target = $region56
      $region55: #{_lambda_.2} parent=31 // pred_region
        %p557 = scmp.lt.s32.totalorder %s38, 1
        %s558 = scalar_select %p557, %s38, 1
        %s559 = smul.addr %s558, 4
        %s560 = smul.addr %s559, 4
        %s561 = scalar_lea.vmem %s8, %s560
      $region56: #{_lambda_.2} parent=31 // pred_fallthru
        _
      // Predicated region
      $region57: #{_lambda_.2} parent=31 // pred_check
        %p562 = pneg %p260
      $region58: #{_lambda_.2} parent=31 // pred_check_branch
        %564 = sbr.rel (%p562) target = $region60
      $region59: #{_lambda_.2} parent=31 // pred_region
        %p565 = scmp.lt.s32.totalorder %s38, 1
        %s566 = scalar_select %p565, %s38, 1
        %s567 = scalar_lea.vmem %s9, %s566
      $region60: #{_lambda_.2} parent=31 // pred_fallthru
        _
      // Predicated region
      $region61: #{_lambda_.2} parent=31 // pred_check
        %p568 = pneg %p286
      $region62: #{_lambda_.2} parent=31 // pred_check_branch
        %570 = sbr.rel (%p568) target = $region64
      $region63: #{_lambda_.2} parent=31 // pred_region
        %p571 = scmp.lt.s32.totalorder %s38, 1
        %s572 = scalar_select %p571, %s38, 1
        %s573 = scalar_lea.vmem %s10, %s572
      $region64: #{_lambda_.2} parent=31 // pred_fallthru
        _
      // Predicated region
      $region65: #{_lambda_.2} parent=31 // pred_check
        %p574 = pneg %p312
      $region66: #{_lambda_.2} parent=31 // pred_check_branch
        %576 = sbr.rel (%p574) target = $region68
      $region67: #{_lambda_.2} parent=31 // pred_region
        %p577 = scmp.lt.s32.totalorder %s38, 1
        %s578 = scalar_select %p577, %s38, 1
        %s579 = scalar_lea.vmem %s11, %s578
      $region68: #{_lambda_.2} parent=31 // pred_fallthru
        _
      // Predicated region
      $region69: #{_lambda_.2} parent=31 // pred_check
        %p580 = pneg %p338
      $region70: #{_lambda_.2} parent=31 // pred_check_branch
        %582 = sbr.rel (%p580) target = $region72
      $region71: #{_lambda_.2} parent=31 // pred_region
        %p583 = scmp.lt.s32.totalorder %s38, 1
        %s584 = scalar_select %p583, %s38, 1
        %s585 = smul.addr %s584, 4
        %s586 = smul.addr %s585, 4
        %s587 = scalar_lea.vmem %s12, %s586
      $region72: #{_lambda_.2} parent=31 // pred_fallthru
        _
      // Predicated region
      $region73: #{_lambda_.2} parent=31 // pred_check
        %p588 = pneg %p364
      $region74: #{_lambda_.2} parent=31 // pred_check_branch
        %590 = sbr.rel (%p588) target = $region76
      $region75: #{_lambda_.2} parent=31 // pred_region
        %p591 = scmp.lt.s32.totalorder %s38, 1
        %s592 = scalar_select %p591, %s38, 1
        %s593 = scalar_lea.vmem %s13, %s592
      $region76: #{_lambda_.2} parent=31 // pred_fallthru
        _
      // Predicated region
      $region77: #{_lambda_.2} parent=31 // pred_check
        %p594 = pneg %p390
      $region78: #{_lambda_.2} parent=31 // pred_check_branch
        %596 = sbr.rel (%p594) target = $region80
      $region79: #{_lambda_.2} parent=31 // pred_region
        %p597 = scmp.lt.s32.totalorder %s38, 1
        %s598 = scalar_select %p597, %s38, 1
        %s599 = smul.addr %s598, 8
        %s600 = smul.addr %s599, 4
        %s601 = scalar_lea.vmem %s14, %s600
      $region80: #{_lambda_.2} parent=31 // pred_fallthru
        _
      // Predicated region
      $region81: #{_lambda_.2} parent=31 // pred_check
        %p602 = pneg %p416
      $region82: #{_lambda_.2} parent=31 // pred_check_branch
        %604 = sbr.rel (%p602) target = $region84
      $region83: #{_lambda_.2} parent=31 // pred_region
        %p605 = scmp.lt.s32.totalorder %s38, 1
        %s606 = scalar_select %p605, %s38, 1
        %s607 = scalar_lea.vmem %s15, %s606
      $region84: #{_lambda_.2} parent=31 // pred_fallthru
        _
    $region32: #{_lambda_.2} parent=5 // pred_fallthru
      _
    %p608 = scmp.le.s32.totalorder 1, %s30
    %p609 = scmp.lt.s32.totalorder %s30, 5
    %p610 = pnand %p608, %p609
    %p611 = pneg %p610
    // Predicated region
    $region85: #{_lambda_.2} parent=5 // pred_check
      _
    $region86: #{_lambda_.2} parent=5 // pred_check_branch
      %613 = sbr.rel (%p610) target = $region88
    $region87: #{_lambda_.2} parent=5 // pred_region
      %s614 = ssub.s32 %s30, 1
      %p615 = scmp.lt.s32.totalorder %s39, 1
      %s616 = scalar_select %p615, %s39, 1
      %s617 = smul.addr %s616, 8
      %s618 = scalar_lea.vmem %s1, %s617
      %p619 = pneg %p68
      %p620 = pneg %p65
      %p621 = pneg %p89
      %p622 = pneg %p86
      %p623 = pneg %p110
      %p624 = pneg %p107
      %p625 = scmp.lt.s32.totalorder %s40, 1
      %s626 = scalar_select %p625, %s40, 1
      %s627 = scalar_lea.vmem %s4, %s626
      %p628 = pneg %p136
      %p629 = pneg %p133
      %p630 = scmp.lt.s32.totalorder %s40, 1
      %s631 = scalar_select %p630, %s40, 1
      %s632 = scalar_lea.vmem %s5, %s631
      %p633 = pneg %p162
      %p634 = pneg %p159
      %p635 = scmp.lt.s32.totalorder %s40, 1
      %s636 = scalar_select %p635, %s40, 1
      %s637 = smul.addr %s636, 4
      %s638 = smul.addr %s637, 4
      %s639 = scalar_lea.vmem %s6, %s638
      %p640 = pneg %p188
      %p641 = pneg %p185
      %p642 = scmp.lt.s32.totalorder %s40, 1
      %s643 = scalar_select %p642, %s40, 1
      %s644 = scalar_lea.vmem %s7, %s643
      %p645 = pneg %p214
      %p646 = pneg %p211
      %p647 = scmp.lt.s32.totalorder %s40, 1
      %s648 = scalar_select %p647, %s40, 1
      %s649 = smul.addr %s648, 4
      %s650 = smul.addr %s649, 4
      %s651 = scalar_lea.vmem %s8, %s650
      %p652 = pneg %p240
      %p653 = pneg %p237
      %p654 = scmp.lt.s32.totalorder %s40, 1
      %s655 = scalar_select %p654, %s40, 1
      %s656 = scalar_lea.vmem %s9, %s655
      %p657 = pneg %p266
      %p658 = pneg %p263
      %p659 = scmp.lt.s32.totalorder %s40, 1
      %s660 = scalar_select %p659, %s40, 1
      %s661 = scalar_lea.vmem %s10, %s660
      %p662 = pneg %p292
      %p663 = pneg %p289
      %p664 = scmp.lt.s32.totalorder %s40, 1
      %s665 = scalar_select %p664, %s40, 1
      %s666 = scalar_lea.vmem %s11, %s665
      %p667 = pneg %p318
      %p668 = pneg %p315
      %p669 = scmp.lt.s32.totalorder %s40, 1
      %s670 = scalar_select %p669, %s40, 1
      %s671 = smul.addr %s670, 4
      %s672 = smul.addr %s671, 4
      %s673 = scalar_lea.vmem %s12, %s672
      %p674 = pneg %p344
      %p675 = pneg %p341
      %p676 = scmp.lt.s32.totalorder %s40, 1
      %s677 = scalar_select %p676, %s40, 1
      %s678 = scalar_lea.vmem %s13, %s677
      %p679 = pneg %p370
      %p680 = pneg %p367
      %p681 = scmp.lt.s32.totalorder %s40, 1
      %s682 = scalar_select %p681, %s40, 1
      %s683 = smul.addr %s682, 8
      %s684 = smul.addr %s683, 4
      %s685 = scalar_lea.vmem %s14, %s684
      %p686 = pneg %p396
      %p687 = pneg %p393
      %p688 = scmp.lt.s32.totalorder %s40, 1
      %s689 = scalar_select %p688, %s40, 1
      %s690 = scalar_lea.vmem %s15, %s689
      %p691 = pneg %p422
      %p692 = pneg %p419
      %p693 = pneg %p443
      %p694 = pneg %p440
      %p695 = pneg %p464
      %p696 = pneg %p461
      %p697 = pneg %p490
      %p698 = pneg %p487
      %p699 = scmp.lt.s32.totalorder %s39, 1
      %s700 = scalar_select %p699, %s39, 1
      %s701 = smul.addr %s700, 8
      %s702 = scalar_lea.vmem %s18, %s701
      %p703 = scmp.lt.s32.totalorder %s39, 1
      %s704 = scalar_select %p703, %s39, 1
      %s705 = smul.addr %s704, 8
      %s706 = scalar_lea.vmem %s1, %s705
      %p707 = scmp.lt.s32.totalorder %s40, 1
      %s708 = scalar_select %p707, %s40, 1
      %s709 = scalar_lea.vmem %s4, %s708
      %p710 = scmp.lt.s32.totalorder %s40, 1
      %s711 = scalar_select %p710, %s40, 1
      %s712 = scalar_lea.vmem %s5, %s711
      %p713 = scmp.lt.s32.totalorder %s40, 1
      %s714 = scalar_select %p713, %s40, 1
      %s715 = smul.addr %s714, 4
      %s716 = smul.addr %s715, 4
      %s717 = scalar_lea.vmem %s6, %s716
      %p718 = scmp.lt.s32.totalorder %s40, 1
      %s719 = scalar_select %p718, %s40, 1
      %s720 = scalar_lea.vmem %s7, %s719
      %p721 = scmp.lt.s32.totalorder %s40, 1
      %s722 = scalar_select %p721, %s40, 1
      %s723 = smul.addr %s722, 4
      %s724 = smul.addr %s723, 4
      %s725 = scalar_lea.vmem %s8, %s724
      %p726 = scmp.lt.s32.totalorder %s40, 1
      %s727 = scalar_select %p726, %s40, 1
      %s728 = scalar_lea.vmem %s9, %s727
      %p729 = scmp.lt.s32.totalorder %s40, 1
      %s730 = scalar_select %p729, %s40, 1
      %s731 = scalar_lea.vmem %s10, %s730
      %p732 = scmp.lt.s32.totalorder %s40, 1
      %s733 = scalar_select %p732, %s40, 1
      %s734 = scalar_lea.vmem %s11, %s733
      %p735 = scmp.lt.s32.totalorder %s40, 1
      %s736 = scalar_select %p735, %s40, 1
      %s737 = smul.addr %s736, 4
      %s738 = smul.addr %s737, 4
      %s739 = scalar_lea.vmem %s12, %s738
      %p740 = scmp.lt.s32.totalorder %s40, 1
      %s741 = scalar_select %p740, %s40, 1
      %s742 = scalar_lea.vmem %s13, %s741
      %p743 = scmp.lt.s32.totalorder %s40, 1
      %s744 = scalar_select %p743, %s40, 1
      %s745 = smul.addr %s744, 8
      %s746 = smul.addr %s745, 4
      %s747 = scalar_lea.vmem %s14, %s746
      %p748 = scmp.lt.s32.totalorder %s40, 1
      %s749 = scalar_select %p748, %s40, 1
      %s750 = scalar_lea.vmem %s15, %s749
      %p751 = scmp.lt.s32.totalorder %s39, 1
      %s752 = scalar_select %p751, %s39, 1
      %s753 = smul.addr %s752, 8
      %s754 = scalar_lea.vmem %s18, %s753
      %p756 = scmp.eq.s32.totalorder %s40, 0
      // Predicated region
      $region89: #{_lambda_.2} parent=87 // pred_check
        %p757 = pneg %p756
      $region90: #{_lambda_.2} parent=87 // pred_check_branch
        %759 = sbr.rel (%p757) target = $region92
      $region91: #{_lambda_.2} parent=87 // pred_region
        %v760 = vld [vmem:[%s706] sm:$0xff]
        %v761 = vld [vmem:[%s2] sm:$0x1]
        %v762 = vld [vmem:[%s3] sm:$0x1]
        %vm763 = vcmask 261120
        %v764 = vsel %vm763, %v760, 0.0
        %765 = vadd.xlane.f32.xlu0 %v764
        %v766 = vpop.xlane.xlu0 %765
        %v767 = vrcp.pop 32.0
        %v768 = vmul.f32 %v766, %v767
        %v769 = vsub.f32 %v760, %v768
        %v770 = vmul.f32 %v769, %v769
        %v771 = vsel %vm763, %v770, 0.0
        %772 = vadd.xlane.f32.xlu0 %v771
        %v773 = vpop.xlane.xlu0 %772
        %v774 = vmul.f32 %v773, %v767
        %v775 = vadd.f32 %v774, 1e-05
        %v776 = vrsqrt.pop %v775
        %v777 = vmul.f32 %v769, %v776
        %v779 = vlaneseq
        %v780 = vshrl.u32 %v779, 7
        %v781 = vsub.s32 0, %v780
        %v782 = vrot.slane %v761, %v781
        %v784 = vmul.f32 %v777, %v782
        %v786 = vlaneseq
        %v787 = vshrl.u32 %v786, 7
        %v788 = vsub.s32 0, %v787
        %v789 = vrot.slane %v762, %v788
        %v791 = vadd.f32 %v784, %v789
        %792 = vst.msk [vmem:[#allocation2] sm:$0xff] %vm763, %v791
      $region92: #{_lambda_.2} parent=87 // pred_fallthru
        _
      %v793 = vlaneseq
      %v794 = vand.u32 %v793, 127
      %s795 = sld [smem:[#allocation5 + %s39]]
      %v796 = vstv %s795
      %vm797 = vcmp.lt.s32.totalorder %v794, %v796
      %v798 = vsel %vm797, 0.0, -1e+09
      %v799 = vld [vmem:[#allocation2] sm:$0xff]
      %v800 = vld [vmem:[%s709] sm:$0x1]
      %v801 = vld [vmem:[%s712] sm:$0x1]
      %vm802 = vcmask 261120
      %v803 = vsel %vm802, %v799, 0.0
      %804 = vadd.xlane.f32.xlu0 %v803
      %v805 = vpop.xlane.xlu0 %804
      %v806 = vrcp.pop 32.0
      %v807 = vmul.f32 %v805, %v806
      %v808 = vsub.f32 %v799, %v807
      %v809 = vmul.f32 %v808, %v808
      %v810 = vsel %vm802, %v809, 0.0
      %811 = vadd.xlane.f32.xlu0 %v810
      %v812 = vpop.xlane.xlu0 %811
      %v813 = vmul.f32 %v812, %v806
      %v814 = vadd.f32 %v813, 1e-05
      %v815 = vrsqrt.pop %v814
      %v816 = vmul.f32 %v808, %v815
      %v818 = vlaneseq
      %v819 = vshrl.u32 %v818, 7
      %v820 = vsub.s32 0, %v819
      %v821 = vrot.slane %v800, %v820
      %v823 = vmul.f32 %v816, %v821
      %v825 = vlaneseq
      %v826 = vshrl.u32 %v825, 7
      %v827 = vsub.s32 0, %v826
      %v828 = vrot.slane %v801, %v827
      %v830 = vadd.f32 %v823, %v828
      %v831 = vpack.c.bf16 %v830, %v830
      %v832 = vld [vmem:[%s717] sm:$0xf]
      %v833 = vld [vmem:[%s717 + $0x4] sm:$0xf]
      %v834 = vld [vmem:[%s717 + $0x8] sm:$0xf]
      %v835 = vld [vmem:[%s717 + $0xc] sm:$0xf]
      %v836 = vld [vmem:[%s720] sm:$0x1]
      %v838 = vlaneseq
      %v839 = vshrl.u32 %v838, 7
      %v840 = vsub.s32 0, %v839
      %v841 = vrot.slane %v836, %v840
      %v847 = vunpack.c.l.b16 %v832
      %v848 = vunpack.c.l.b16 %v833
      %v849 = vunpack.c.l.b16 %v834
      %v850 = vunpack.c.l.b16 %v835
      %v851 = vpack.c.b16 %v848, %v847
      %v852 = vpack.c.b16 %v850, %v849
      %v856 = vsel %vm802, %v831, 0
      %858 = vmatprep.subr.bf16.mxu0 0
      %859 = vmatpush1.bf16.msra.mxu0 %v851
      %860 = vmatprep.subr.bf16.mxu0 0
      %861 = vmatpush1.bf16.msra.mxu0 %v852
      %862 = vmatprep.subr.bf16.mxu0 0
      %863 = vmatpush1.bf16.msra.mxu0 0
      %864 = vmatprep.subr.bf16.mxu0 0
      %865 = vmatpush1.bf16.msra.mxu0 0
      %866 = vmatprep.subr.bf16.mxu0 0
      %867 = vmatpush1.bf16.msra.mxu0 0
      %868 = vmatprep.subr.bf16.mxu0 0
      %869 = vmatpush1.bf16.msra.mxu0 0
      %870 = vmatprep.subr.bf16.mxu0 0
      %871 = vmatpush1.bf16.msra.mxu0 0
      %872 = vmatprep.subr.bf16.mxu0 0
      %873 = vmatpush1.bf16.msra.mxu0 0
      %874 = vmatprep.subr.bf16.mxu0 0
      %875 = vmatpush1.bf16.msra.mxu0 0
      %876 = vmatprep.subr.bf16.mxu0 0
      %877 = vmatpush1.bf16.msra.mxu0 0
      %878 = vmatprep.subr.bf16.mxu0 0
      %879 = vmatpush1.bf16.msra.mxu0 0
      %880 = vmatprep.subr.bf16.mxu0 0
      %881 = vmatpush1.bf16.msra.mxu0 0
      %882 = vmatprep.subr.bf16.mxu0 0
      %883 = vmatpush1.bf16.msra.mxu0 0
      %884 = vmatprep.subr.bf16.mxu0 0
      %885 = vmatpush1.bf16.msra.mxu0 0
      %886 = vmatprep.subr.bf16.mxu0 0
      %887 = vmatpush1.bf16.msra.mxu0 0
      %888 = vmatprep.subr.bf16.mxu0 0
      %889 = vmatpush1.bf16.msra.mxu0 0
      %890 = vmatprep.mubr.bf16.mxu0 0
      %891 = vmatmul.mubr.bf16.gmra.mrb[0].mxu0 %v856
      %v892 = vpop.f32.mrb[0].mxu0
      %v893 = vadd.f32 %v841, %v892
      %v894 = vpop.f32.mrb[0].mxu0
      %v895 = vpop.f32.mrb[0].mxu0
      %v896 = vpop.f32.mrb[0].mxu0
      %897 = vdwg.mxu0
      %v898 = vld [vmem:[%s725] sm:$0xf]
      %v899 = vld [vmem:[%s725 + $0x4] sm:$0xf]
      %v900 = vld [vmem:[%s725 + $0x8] sm:$0xf]
      %v901 = vld [vmem:[%s725 + $0xc] sm:$0xf]
      %v902 = vld [vmem:[%s728] sm:$0x1]
      %v903 = vmul.f32 %v893, 0.35355338
      %v904 = vpack.c.bf16 %v903, %v903
      %v905 = vpack.c.bf16 %v893, %v893
      %907 = vrot.lane.b32.xlu0 %v905, 96
      %v908 = vpop.permute.xlu0 %907
      %vm909 = vcmask 64512
      %v911 = vsel %vm909, %v904, 0
      %v914 = vsel %vm909, %v908, 0
      %916 = vmatprep.subr.bf16.mxu0 0
      %917 = vmatpush1.bf16.xpose.msra.mxu0 %v914
      %918 = vmatprep.subr.bf16.mxu0 0
      %919 = vmatpush1.bf16.xpose.msra.mxu0 0
      %920 = vmatprep.subr.bf16.mxu0 0
      %921 = vmatpush1.bf16.xpose.msra.mxu0 0
      %922 = vmatprep.subr.bf16.mxu0 0
      %923 = vmatpush1.bf16.xpose.msra.mxu0 0
      %924 = vmatprep.subr.bf16.mxu0 0
      %925 = vmatpush1.bf16.xpose.msra.mxu0 0
      %926 = vmatprep.subr.bf16.mxu0 0
      %927 = vmatpush1.bf16.xpose.msra.mxu0 0
      %928 = vmatprep.subr.bf16.mxu0 0
      %929 = vmatpush1.bf16.xpose.msra.mxu0 0
      %930 = vmatprep.subr.bf16.mxu0 0
      %931 = vmatpush1.bf16.xpose.msra.mxu0 0
      %932 = vmatprep.subr.bf16.mxu0 0
      %933 = vmatpush1.bf16.xpose.msra.mxu0 0
      %934 = vmatprep.subr.bf16.mxu0 0
      %935 = vmatpush1.bf16.xpose.msra.mxu0 0
      %936 = vmatprep.subr.bf16.mxu0 0
      %937 = vmatpush1.bf16.xpose.msra.mxu0 0
      %938 = vmatprep.subr.bf16.mxu0 0
      %939 = vmatpush1.bf16.xpose.msra.mxu0 0
      %940 = vmatprep.subr.bf16.mxu0 0
      %941 = vmatpush1.bf16.xpose.msra.mxu0 0
      %942 = vmatprep.subr.bf16.mxu0 0
      %943 = vmatpush1.bf16.xpose.msra.mxu0 0
      %944 = vmatprep.subr.bf16.mxu0 0
      %945 = vmatpush1.bf16.xpose.msra.mxu0 0
      %946 = vmatprep.subr.bf16.mxu0 0
      %947 = vmatpush1.bf16.xpose.msra.mxu0 0
      %948 = vmatprep.mubr.bf16.mxu0 0
      %949 = vmatmul.mubr.bf16.gmra.mrb[0].mxu0 %v911
      %v950 = vpop.f32.mrb[0].mxu0
      %v951 = vadd.f32 %v798, %v950
      %v952 = vpop.f32.mrb[0].mxu0
      %v953 = vpop.f32.mrb[0].mxu0
      %v954 = vpop.f32.mrb[0].mxu0
      %955 = vdwg.mxu0
      %v956 = vsel %vm909, %v951, -inf
      %957 = vmax.xlane.f32.xlu0 %v956
      %v958 = vpop.xlane.xlu0 %957
      %v959 = vsub.f32 %v951, %v958
      %v960 = vmul.f32 %v959, 1.442695
      %v961 = vpow.pop %v960
      %v962 = vsel %vm909, %v961, 0.0
      %963 = vadd.xlane.f32.xlu0 %v962
      %v964 = vpop.xlane.xlu0 %963
      %v965 = vrcp.pop %v964
      %v966 = vmul.f32 %v961, %v965
      %v967 = vpack.c.bf16 %v966, %v966
      %968 = vrot.lane.b32.xlu0 %v905, 64
      %v969 = vpop.permute.xlu0 %968
      %v971 = vsel %vm909, %v967, 0
      %vm973 = vcmask 1043456
      %v975 = vsel %vm973, %v969, 0
      %977 = vmatprep.subr.bf16.mxu0 0
      %978 = vmatpush1.bf16.msra.mxu0 %v975
      %979 = vmatprep.subr.bf16.mxu0 0
      %980 = vmatpush1.bf16.msra.mxu0 0
      %981 = vmatprep.subr.bf16.mxu0 0
      %982 = vmatpush1.bf16.msra.mxu0 0
      %983 = vmatprep.subr.bf16.mxu0 0
      %984 = vmatpush1.bf16.msra.mxu0 0
      %985 = vmatprep.subr.bf16.mxu0 0
      %986 = vmatpush1.bf16.msra.mxu0 0
      %987 = vmatprep.subr.bf16.mxu0 0
      %988 = vmatpush1.bf16.msra.mxu0 0
      %989 = vmatprep.subr.bf16.mxu0 0
      %990 = vmatpush1.bf16.msra.mxu0 0
      %991 = vmatprep.subr.bf16.mxu0 0
      %992 = vmatpush1.bf16.msra.mxu0 0
      %993 = vmatprep.subr.bf16.mxu0 0
      %994 = vmatpush1.bf16.msra.mxu0 0
      %995 = vmatprep.subr.bf16.mxu0 0
      %996 = vmatpush1.bf16.msra.mxu0 0
      %997 = vmatprep.subr.bf16.mxu0 0
      %998 = vmatpush1.bf16.msra.mxu0 0
      %999 = vmatprep.subr.bf16.mxu0 0
      %1000 = vmatpush1.bf16.msra.mxu0 0
      %1001 = vmatprep.subr.bf16.mxu0 0
      %1002 = vmatpush1.bf16.msra.mxu0 0
      %1003 = vmatprep.subr.bf16.mxu0 0
      %1004 = vmatpush1.bf16.msra.mxu0 0
      %1005 = vmatprep.subr.bf16.mxu0 0
      %1006 = vmatpush1.bf16.msra.mxu0 0
      %1007 = vmatprep.subr.bf16.mxu0 0
      %1008 = vmatpush1.bf16.msra.mxu0 0
      %1009 = vmatprep.mubr.bf16.mxu0 0
      %1010 = vmatmul.mubr.bf16.gmra.mrb[0].mxu0 %v971
      %v1011 = vpop.f32.mrb[0].mxu0
      %v1012 = vadd.f32 0.0, %v1011
      %v1013 = vpop.f32.mrb[0].mxu0
      %v1014 = vpop.f32.mrb[0].mxu0
      %v1015 = vpop.f32.mrb[0].mxu0
      %1016 = vdwg.mxu0
      %1017 = vst.msk [vmem:[#allocation3] sm:$0xff] %vm909, %v1012
      %1019 = vrot.lane.b32.xlu0 %v904, 120
      %v1020 = vpop.permute.xlu0 %1019
      %1021 = vrot.lane.b32.xlu0 %v905, 88
      %v1022 = vpop.permute.xlu0 %1021
      %v1024 = vsel %vm909, %v1020, 0
      %v1027 = vsel %vm909, %v1022, 0
      %1029 = vmatprep.subr.bf16.mxu0 0
      %1030 = vmatpush1.bf16.xpose.msra.mxu0 %v1027
      %1031 = vmatprep.subr.bf16.mxu0 0
      %1032 = vmatpush1.bf16.xpose.msra.mxu0 0
      %1033 = vmatprep.subr.bf16.mxu0 0
      %1034 = vmatpush1.bf16.xpose.msra.mxu0 0
      %1035 = vmatprep.subr.bf16.mxu0 0
      %1036 = vmatpush1.bf16.xpose.msra.mxu0 0
      %1037 = vmatprep.subr.bf16.mxu0 0
      %1038 = vmatpush1.bf16.xpose.msra.mxu0 0
      %1039 = vmatprep.subr.bf16.mxu0 0
      %1040 = vmatpush1.bf16.xpose.msra.mxu0 0
      %1041 = vmatprep.subr.bf16.mxu0 0
      %1042 = vmatpush1.bf16.xpose.msra.mxu0 0
      %1043 = vmatprep.subr.bf16.mxu0 0
      %1044 = vmatpush1.bf16.xpose.msra.mxu0 0
      %1045 = vmatprep.subr.bf16.mxu0 0
      %1046 = vmatpush1.bf16.xpose.msra.mxu0 0
      %1047 = vmatprep.subr.bf16.mxu0 0
      %1048 = vmatpush1.bf16.xpose.msra.mxu0 0
      %1049 = vmatprep.subr.bf16.mxu0 0
      %1050 = vmatpush1.bf16.xpose.msra.mxu0 0
      %1051 = vmatprep.subr.bf16.mxu0 0
      %1052 = vmatpush1.bf16.xpose.msra.mxu0 0
      %1053 = vmatprep.subr.bf16.mxu0 0
      %1054 = vmatpush1.bf16.xpose.msra.mxu0 0
      %1055 = vmatprep.subr.bf16.mxu0 0
      %1056 = vmatpush1.bf16.xpose.msra.mxu0 0
      %1057 = vmatprep.subr.bf16.mxu0 0
      %1058 = vmatpush1.bf16.xpose.msra.mxu0 0
      %1059 = vmatprep.subr.bf16.mxu0 0
      %1060 = vmatpush1.bf16.xpose.msra.mxu0 0
      %1061 = vmatprep.mubr.bf16.mxu0 0
      %1062 = vmatmul.mubr.bf16.gmra.mrb[0].mxu0 %v1024
      %v1063 = vpop.f32.mrb[0].mxu0
      %v1064 = vadd.f32 %v798, %v1063
      %v1065 = vpop.f32.mrb[0].mxu0
      %v1066 = vpop.f32.mrb[0].mxu0
      %v1067 = vpop.f32.mrb[0].mxu0
      %1068 = vdwg.mxu0
      %v1069 = vsel %vm909, %v1064, -inf
      %1070 = vmax.xlane.f32.xlu0 %v1069
      %v1071 = vpop.xlane.xlu0 %1070
      %v1072 = vsub.f32 %v1064, %v1071
      %v1073 = vmul.f32 %v1072, 1.442695
      %v1074 = vpow.pop %v1073
      %v1075 = vsel %vm909, %v1074, 0.0
      %1076 = vadd.xlane.f32.xlu0 %v1075
      %v1077 = vpop.xlane.xlu0 %1076
      %v1078 = vrcp.pop %v1077
      %v1079 = vmul.f32 %v1074, %v1078
      %v1080 = vpack.c.bf16 %v1079, %v1079
      %1081 = vrot.lane.b32.xlu0 %v905, 56
      %v1082 = vpop.permute.xlu0 %1081
      %v1084 = vsel %vm909, %v1080, 0
      %v1087 = vsel %vm973, %v1082, 0
      %1089 = vmatprep.subr.bf16.mxu0 0
      %1090 = vmatpush1.bf16.msra.mxu0 %v1087
      %1091 = vmatprep.subr.bf16.mxu0 0
      %1092 = vmatpush1.bf16.msra.mxu0 0
      %1093 = vmatprep.subr.bf16.mxu0 0
      %1094 = vmatpush1.bf16.msra.mxu0 0
      %1095 = vmatprep.subr.bf16.mxu0 0
      %1096 = vmatpush1.bf16.msra.mxu0 0
      %1097 = vmatprep.subr.bf16.mxu0 0
      %1098 = vmatpush1.bf16.msra.mxu0 0
      %1099 = vmatprep.subr.bf16.mxu0 0
      %1100 = vmatpush1.bf16.msra.mxu0 0
      %1101 = vmatprep.subr.bf16.mxu0 0
      %1102 = vmatpush1.bf16.msra.mxu0 0
      %1103 = vmatprep.subr.bf16.mxu0 0
      %1104 = vmatpush1.bf16.msra.mxu0 0
      %1105 = vmatprep.subr.bf16.mxu0 0
      %1106 = vmatpush1.bf16.msra.mxu0 0
      %1107 = vmatprep.subr.bf16.mxu0 0
      %1108 = vmatpush1.bf16.msra.mxu0 0
      %1109 = vmatprep.subr.bf16.mxu0 0
      %1110 = vmatpush1.bf16.msra.mxu0 0
      %1111 = vmatprep.subr.bf16.mxu0 0
      %1112 = vmatpush1.bf16.msra.mxu0 0
      %1113 = vmatprep.subr.bf16.mxu0 0
      %1114 = vmatpush1.bf16.msra.mxu0 0
      %1115 = vmatprep.subr.bf16.mxu0 0
      %1116 = vmatpush1.bf16.msra.mxu0 0
      %1117 = vmatprep.subr.bf16.mxu0 0
      %1118 = vmatpush1.bf16.msra.mxu0 0
      %1119 = vmatprep.subr.bf16.mxu0 0
      %1120 = vmatpush1.bf16.msra.mxu0 0
      %1121 = vmatprep.mubr.bf16.mxu0 0
      %1122 = vmatmul.mubr.bf16.gmra.mrb[0].mxu0 %v1084
      %v1123 = vpop.f32.mrb[0].mxu0
      %v1124 = vadd.f32 0.0, %v1123
      %v1125 = vpop.f32.mrb[0].mxu0
      %v1126 = vpop.f32.mrb[0].mxu0
      %v1127 = vpop.f32.mrb[0].mxu0
      %1128 = vdwg.mxu0
      %1130 = vrot.lane.b32.xlu0 %v1124, 8
      %v1131 = vpop.permute.xlu0 %1130
      %vm1133 = vcmask 130112
      %1134 = vst.msk [vmem:[#allocation3] sm:$0xff] %vm1133, %v1131
      %1135 = vrot.lane.b32.xlu0 %v904, 112
      %v1136 = vpop.permute.xlu0 %1135
      %1137 = vrot.lane.b32.xlu0 %v905, 80
      %v1138 = vpop.permute.xlu0 %1137
      %v1140 = vsel %vm909, %v1136, 0
      %v1143 = vsel %vm909, %v1138, 0
      %1145 = vmatprep.subr.bf16.mxu0 0
      %1146 = vmatpush1.bf16.xpose.msra.mxu0 %v1143
      %1147 = vmatprep.subr.bf16.mxu0 0
      %1148 = vmatpush1.bf16.xpose.msra.mxu0 0
      %1149 = vmatprep.subr.bf16.mxu0 0
      %1150 = vmatpush1.bf16.xpose.msra.mxu0 0
      %1151 = vmatprep.subr.bf16.mxu0 0
      %1152 = vmatpush1.bf16.xpose.msra.mxu0 0
      %1153 = vmatprep.subr.bf16.mxu0 0
      %1154 = vmatpush1.bf16.xpose.msra.mxu0 0
      %1155 = vmatprep.subr.bf16.mxu0 0
      %1156 = vmatpush1.bf16.xpose.msra.mxu0 0
      %1157 = vmatprep.subr.bf16.mxu0 0
      %1158 = vmatpush1.bf16.xpose.msra.mxu0 0
      %1159 = vmatprep.subr.bf16.mxu0 0
      %1160 = vmatpush1.bf16.xpose.msra.mxu0 0
      %1161 = vmatprep.subr.bf16.mxu0 0
      %1162 = vmatpush1.bf16.xpose.msra.mxu0 0
      %1163 = vmatprep.subr.bf16.mxu0 0
      %1164 = vmatpush1.bf16.xpose.msra.mxu0 0
      %1165 = vmatprep.subr.bf16.mxu0 0
      %1166 = vmatpush1.bf16.xpose.msra.mxu0 0
      %1167 = vmatprep.subr.bf16.mxu0 0
      %1168 = vmatpush1.bf16.xpose.msra.mxu0 0
      %1169 = vmatprep.subr.bf16.mxu0 0
      %1170 = vmatpush1.bf16.xpose.msra.mxu0 0
      %1171 = vmatprep.subr.bf16.mxu0 0
      %1172 = vmatpush1.bf16.xpose.msra.mxu0 0
      %1173 = vmatprep.subr.bf16.mxu0 0
      %1174 = vmatpush1.bf16.xpose.msra.mxu0 0
      %1175 = vmatprep.subr.bf16.mxu0 0
      %1176 = vmatpush1.bf16.xpose.msra.mxu0 0
      %1177 = vmatprep.mubr.bf16.mxu0 0
      %1178 = vmatmul.mubr.bf16.gmra.mrb[0].mxu0 %v1140
      %v1179 = vpop.f32.mrb[0].mxu0
      %v1180 = vadd.f32 %v798, %v1179
      %v1181 = vpop.f32.mrb[0].mxu0
      %v1182 = vpop.f32.mrb[0].mxu0
      %v1183 = vpop.f32.mrb[0].mxu0
      %1184 = vdwg.mxu0
      %v1185 = vsel %vm909, %v1180, -inf
      %1186 = vmax.xlane.f32.xlu0 %v1185
      %v1187 = vpop.xlane.xlu0 %1186
      %v1188 = vsub.f32 %v1180, %v1187
      %v1189 = vmul.f32 %v1188, 1.442695
      %v1190 = vpow.pop %v1189
      %v1191 = vsel %vm909, %v1190, 0.0
      %1192 = vadd.xlane.f32.xlu0 %v1191
      %v1193 = vpop.xlane.xlu0 %1192
      %v1194 = vrcp.pop %v1193
      %v1195 = vmul.f32 %v1190, %v1194
      %v1196 = vpack.c.bf16 %v1195, %v1195
      %1197 = vrot.lane.b32.xlu0 %v905, 48
      %v1198 = vpop.permute.xlu0 %1197
      %v1200 = vsel %vm909, %v1196, 0
      %v1203 = vsel %vm973, %v1198, 0
      %1205 = vmatprep.subr.bf16.mxu0 0
      %1206 = vmatpush1.bf16.msra.mxu0 %v1203
      %1207 = vmatprep.subr.bf16.mxu0 0
      %1208 = vmatpush1.bf16.msra.mxu0 0
      %1209 = vmatprep.subr.bf16.mxu0 0
      %1210 = vmatpush1.bf16.msra.mxu0 0
      %1211 = vmatprep.subr.bf16.mxu0 0
      %1212 = vmatpush1.bf16.msra.mxu0 0
      %1213 = vmatprep.subr.bf16.mxu0 0
      %1214 = vmatpush1.bf16.msra.mxu0 0
      %1215 = vmatprep.subr.bf16.mxu0 0
      %1216 = vmatpush1.bf16.msra.mxu0 0
      %1217 = vmatprep.subr.bf16.mxu0 0
      %1218 = vmatpush1.bf16.msra.mxu0 0
      %1219 = vmatprep.subr.bf16.mxu0 0
      %1220 = vmatpush1.bf16.msra.mxu0 0
      %1221 = vmatprep.subr.bf16.mxu0 0
      %1222 = vmatpush1.bf16.msra.mxu0 0
      %1223 = vmatprep.subr.bf16.mxu0 0
      %1224 = vmatpush1.bf16.msra.mxu0 0
      %1225 = vmatprep.subr.bf16.mxu0 0
      %1226 = vmatpush1.bf16.msra.mxu0 0
      %1227 = vmatprep.subr.bf16.mxu0 0
      %1228 = vmatpush1.bf16.msra.mxu0 0
      %1229 = vmatprep.subr.bf16.mxu0 0
      %1230 = vmatpush1.bf16.msra.mxu0 0
      %1231 = vmatprep.subr.bf16.mxu0 0
      %1232 = vmatpush1.bf16.msra.mxu0 0
      %1233 = vmatprep.subr.bf16.mxu0 0
      %1234 = vmatpush1.bf16.msra.mxu0 0
      %1235 = vmatprep.subr.bf16.mxu0 0
      %1236 = vmatpush1.bf16.msra.mxu0 0
      %1237 = vmatprep.mubr.bf16.mxu0 0
      %1238 = vmatmul.mubr.bf16.gmra.mrb[0].mxu0 %v1200
      %v1239 = vpop.f32.mrb[0].mxu0
      %v1240 = vadd.f32 0.0, %v1239
      %v1241 = vpop.f32.mrb[0].mxu0
      %v1242 = vpop.f32.mrb[0].mxu0
      %v1243 = vpop.f32.mrb[0].mxu0
      %1244 = vdwg.mxu0
      %1246 = vrot.lane.b32.xlu0 %v1240, 16
      %v1247 = vpop.permute.xlu0 %1246
      %vm1249 = vcmask 195712
      %1250 = vst.msk [vmem:[#allocation3] sm:$0xff] %vm1249, %v1247
      %1251 = vrot.lane.b32.xlu0 %v904, 104
      %v1252 = vpop.permute.xlu0 %1251
      %1253 = vrot.lane.b32.xlu0 %v905, 72
      %v1254 = vpop.permute.xlu0 %1253
      %v1256 = vsel %vm909, %v1252, 0
      %v1259 = vsel %vm909, %v1254, 0
      %1261 = vmatprep.subr.bf16.mxu0 0
      %1262 = vmatpush1.bf16.xpose.msra.mxu0 %v1259
      %1263 = vmatprep.subr.bf16.mxu0 0
      %1264 = vmatpush1.bf16.xpose.msra.mxu0 0
      %1265 = vmatprep.subr.bf16.mxu0 0
      %1266 = vmatpush1.bf16.xpose.msra.mxu0 0
      %1267 = vmatprep.subr.bf16.mxu0 0
      %1268 = vmatpush1.bf16.xpose.msra.mxu0 0
      %1269 = vmatprep.subr.bf16.mxu0 0
      %1270 = vmatpush1.bf16.xpose.msra.mxu0 0
      %1271 = vmatprep.subr.bf16.mxu0 0
      %1272 = vmatpush1.bf16.xpose.msra.mxu0 0
      %1273 = vmatprep.subr.bf16.mxu0 0
      %1274 = vmatpush1.bf16.xpose.msra.mxu0 0
      %1275 = vmatprep.subr.bf16.mxu0 0
      %1276 = vmatpush1.bf16.xpose.msra.mxu0 0
      %1277 = vmatprep.subr.bf16.mxu0 0
      %1278 = vmatpush1.bf16.xpose.msra.mxu0 0
      %1279 = vmatprep.subr.bf16.mxu0 0
      %1280 = vmatpush1.bf16.xpose.msra.mxu0 0
      %1281 = vmatprep.subr.bf16.mxu0 0
      %1282 = vmatpush1.bf16.xpose.msra.mxu0 0
      %1283 = vmatprep.subr.bf16.mxu0 0
      %1284 = vmatpush1.bf16.xpose.msra.mxu0 0
      %1285 = vmatprep.subr.bf16.mxu0 0
      %1286 = vmatpush1.bf16.xpose.msra.mxu0 0
      %1287 = vmatprep.subr.bf16.mxu0 0
      %1288 = vmatpush1.bf16.xpose.msra.mxu0 0
      %1289 = vmatprep.subr.bf16.mxu0 0
      %1290 = vmatpush1.bf16.xpose.msra.mxu0 0
      %1291 = vmatprep.subr.bf16.mxu0 0
      %1292 = vmatpush1.bf16.xpose.msra.mxu0 0
      %1293 = vmatprep.mubr.bf16.mxu0 0
      %1294 = vmatmul.mubr.bf16.gmra.mrb[0].mxu0 %v1256
      %v1295 = vpop.f32.mrb[0].mxu0
      %v1296 = vadd.f32 %v798, %v1295
      %v1297 = vpop.f32.mrb[0].mxu0
      %v1298 = vpop.f32.mrb[0].mxu0
      %v1299 = vpop.f32.mrb[0].mxu0
      %1300 = vdwg.mxu0
      %v1301 = vsel %vm909, %v1296, -inf
      %1302 = vmax.xlane.f32.xlu0 %v1301
      %v1303 = vpop.xlane.xlu0 %1302
      %v1304 = vsub.f32 %v1296, %v1303
      %v1305 = vmul.f32 %v1304, 1.442695
      %v1306 = vpow.pop %v1305
      %v1307 = vsel %vm909, %v1306, 0.0
      %1308 = vadd.xlane.f32.xlu0 %v1307
      %v1309 = vpop.xlane.xlu0 %1308
      %v1310 = vrcp.pop %v1309
      %v1311 = vmul.f32 %v1306, %v1310
      %v1312 = vpack.c.bf16 %v1311, %v1311
      %1313 = vrot.lane.b32.xlu0 %v905, 40
      %v1314 = vpop.permute.xlu0 %1313
      %v1316 = vsel %vm909, %v1312, 0
      %v1319 = vsel %vm973, %v1314, 0
      %1321 = vmatprep.subr.bf16.mxu0 0
      %1322 = vmatpush1.bf16.msra.mxu0 %v1319
      %1323 = vmatprep.subr.bf16.mxu0 0
      %1324 = vmatpush1.bf16.msra.mxu0 0
      %1325 = vmatprep.subr.bf16.mxu0 0
      %1326 = vmatpush1.bf16.msra.mxu0 0
      %1327 = vmatprep.subr.bf16.mxu0 0
      %1328 = vmatpush1.bf16.msra.mxu0 0
      %1329 = vmatprep.subr.bf16.mxu0 0
      %1330 = vmatpush1.bf16.msra.mxu0 0
      %1331 = vmatprep.subr.bf16.mxu0 0
      %1332 = vmatpush1.bf16.msra.mxu0 0
      %1333 = vmatprep.subr.bf16.mxu0 0
      %1334 = vmatpush1.bf16.msra.mxu0 0
      %1335 = vmatprep.subr.bf16.mxu0 0
      %1336 = vmatpush1.bf16.msra.mxu0 0
      %1337 = vmatprep.subr.bf16.mxu0 0
      %1338 = vmatpush1.bf16.msra.mxu0 0
      %1339 = vmatprep.subr.bf16.mxu0 0
      %1340 = vmatpush1.bf16.msra.mxu0 0
      %1341 = vmatprep.subr.bf16.mxu0 0
      %1342 = vmatpush1.bf16.msra.mxu0 0
      %1343 = vmatprep.subr.bf16.mxu0 0
      %1344 = vmatpush1.bf16.msra.mxu0 0
      %1345 = vmatprep.subr.bf16.mxu0 0
      %1346 = vmatpush1.bf16.msra.mxu0 0
      %1347 = vmatprep.subr.bf16.mxu0 0
      %1348 = vmatpush1.bf16.msra.mxu0 0
      %1349 = vmatprep.subr.bf16.mxu0 0
      %1350 = vmatpush1.bf16.msra.mxu0 0
      %1351 = vmatprep.subr.bf16.mxu0 0
      %1352 = vmatpush1.bf16.msra.mxu0 0
      %1353 = vmatprep.mubr.bf16.mxu0 0
      %1354 = vmatmul.mubr.bf16.gmra.mrb[0].mxu0 %v1316
      %v1355 = vpop.f32.mrb[0].mxu0
      %v1356 = vadd.f32 0.0, %v1355
      %v1357 = vpop.f32.mrb[0].mxu0
      %v1358 = vpop.f32.mrb[0].mxu0
      %v1359 = vpop.f32.mrb[0].mxu0
      %1360 = vdwg.mxu0
      %1362 = vrot.lane.b32.xlu0 %v1356, 24
      %v1363 = vpop.permute.xlu0 %1362
      %vm1365 = vcmask 261312
      %1366 = vst.msk [vmem:[#allocation3] sm:$0xff] %vm1365, %v1363
      %v1367 = vld [vmem:[#allocation3] sm:$0xff]
      %v1368 = vpack.c.bf16 %v1367, %v1367
      %v1370 = vlaneseq
      %v1371 = vshrl.u32 %v1370, 7
      %v1372 = vsub.s32 0, %v1371
      %v1373 = vrot.slane %v902, %v1372
      %v1379 = vunpack.c.l.b16 %v898
      %v1380 = vunpack.c.l.b16 %v899
      %v1381 = vunpack.c.l.b16 %v900
      %v1382 = vunpack.c.l.b16 %v901
      %v1383 = vpack.c.b16 %v1380, %v1379
      %v1384 = vpack.c.b16 %v1382, %v1381
      %v1388 = vsel %vm802, %v1368, 0
      %1390 = vmatprep.subr.bf16.mxu0 0
      %1391 = vmatpush1.bf16.msra.mxu0 %v1383
      %1392 = vmatprep.subr.bf16.mxu0 0
      %1393 = vmatpush1.bf16.msra.mxu0 %v1384
      %1394 = vmatprep.subr.bf16.mxu0 0
      %1395 = vmatpush1.bf16.msra.mxu0 0
      %1396 = vmatprep.subr.bf16.mxu0 0
      %1397 = vmatpush1.bf16.msra.mxu0 0
      %1398 = vmatprep.subr.bf16.mxu0 0
      %1399 = vmatpush1.bf16.msra.mxu0 0
      %1400 = vmatprep.subr.bf16.mxu0 0
      %1401 = vmatpush1.bf16.msra.mxu0 0
      %1402 = vmatprep.subr.bf16.mxu0 0
      %1403 = vmatpush1.bf16.msra.mxu0 0
      %1404 = vmatprep.subr.bf16.mxu0 0
      %1405 = vmatpush1.bf16.msra.mxu0 0
      %1406 = vmatprep.subr.bf16.mxu0 0
      %1407 = vmatpush1.bf16.msra.mxu0 0
      %1408 = vmatprep.subr.bf16.mxu0 0
      %1409 = vmatpush1.bf16.msra.mxu0 0
      %1410 = vmatprep.subr.bf16.mxu0 0
      %1411 = vmatpush1.bf16.msra.mxu0 0
      %1412 = vmatprep.subr.bf16.mxu0 0
      %1413 = vmatpush1.bf16.msra.mxu0 0
      %1414 = vmatprep.subr.bf16.mxu0 0
      %1415 = vmatpush1.bf16.msra.mxu0 0
      %1416 = vmatprep.subr.bf16.mxu0 0
      %1417 = vmatpush1.bf16.msra.mxu0 0
      %1418 = vmatprep.subr.bf16.mxu0 0
      %1419 = vmatpush1.bf16.msra.mxu0 0
      %1420 = vmatprep.subr.bf16.mxu0 0
      %1421 = vmatpush1.bf16.msra.mxu0 0
      %1422 = vmatprep.mubr.bf16.mxu0 0
      %1423 = vmatmul.mubr.bf16.gmra.mrb[0].mxu0 %v1388
      %v1424 = vpop.f32.mrb[0].mxu0
      %v1425 = vadd.f32 %v1373, %v1424
      %v1426 = vpop.f32.mrb[0].mxu0
      %v1427 = vpop.f32.mrb[0].mxu0
      %v1428 = vpop.f32.mrb[0].mxu0
      %1429 = vdwg.mxu0
      %v1430 = vadd.f32 %v799, %v1425
      %v1431 = vld [vmem:[%s731] sm:$0x1]
      %v1432 = vld [vmem:[%s734] sm:$0x1]
      %v1433 = vld [vmem:[%s739] sm:$0xf]
      %v1434 = vld [vmem:[%s739 + $0x4] sm:$0xf]
      %v1435 = vld [vmem:[%s739 + $0x8] sm:$0xf]
      %v1436 = vld [vmem:[%s739 + $0xc] sm:$0xf]
      %v1437 = vld [vmem:[%s742] sm:$0x1]
      %v1438 = vld [vmem:[%s747] sm:$0xf]
      %v1439 = vld [vmem:[%s747 + $0x4] sm:$0xf]
      %v1440 = vld [vmem:[%s747 + $0x8] sm:$0xf]
      %v1441 = vld [vmem:[%s747 + $0xc] sm:$0xf]
      %v1442 = vld [vmem:[%s747 + $0x10] sm:$0xf]
      %v1443 = vld [vmem:[%s747 + $0x14] sm:$0xf]
      %v1444 = vld [vmem:[%s747 + $0x18] sm:$0xf]
      %v1445 = vld [vmem:[%s747 + $0x1c] sm:$0xf]
      %v1446 = vld [vmem:[%s750] sm:$0x1]
      %v1447 = vsel %vm802, %v1430, 0.0
      %1448 = vadd.xlane.f32.xlu0 %v1447
      %v1449 = vpop.xlane.xlu0 %1448
      %v1450 = vmul.f32 %v1449, %v806
      %v1451 = vsub.f32 %v1430, %v1450
      %v1452 = vmul.f32 %v1451, %v1451
      %v1453 = vsel %vm802, %v1452, 0.0
      %1454 = vadd.xlane.f32.xlu0 %v1453
      %v1455 = vpop.xlane.xlu0 %1454
      %v1456 = vmul.f32 %v1455, %v806
      %v1457 = vadd.f32 %v1456, 1e-05
      %v1458 = vrsqrt.pop %v1457
      %v1459 = vmul.f32 %v1451, %v1458
      %v1461 = vlaneseq
      %v1462 = vshrl.u32 %v1461, 7
      %v1463 = vsub.s32 0, %v1462
      %v1464 = vrot.slane %v1431, %v1463
      %v1466 = vmul.f32 %v1459, %v1464
      %v1468 = vlaneseq
      %v1469 = vshrl.u32 %v1468, 7
      %v1470 = vsub.s32 0, %v1469
      %v1471 = vrot.slane %v1432, %v1470
      %v1473 = vadd.f32 %v1466, %v1471
      %v1474 = vpack.c.bf16 %v1473, %v1473
      %v1476 = vlaneseq
      %v1477 = vshrl.u32 %v1476, 7
      %v1478 = vsub.s32 0, %v1477
      %v1479 = vrot.slane %v1437, %v1478
      %v1485 = vunpack.c.l.b16 %v1433
      %v1486 = vunpack.c.l.b16 %v1434
      %v1487 = vunpack.c.l.b16 %v1435
      %v1488 = vunpack.c.l.b16 %v1436
      %v1489 = vpack.c.b16 %v1486, %v1485
      %v1490 = vpack.c.b16 %v1488, %v1487
      %v1494 = vsel %vm802, %v1474, 0
      %1496 = vmatprep.subr.bf16.mxu0 0
      %1497 = vmatpush1.bf16.msra.mxu0 %v1489
      %1498 = vmatprep.subr.bf16.mxu0 0
      %1499 = vmatpush1.bf16.msra.mxu0 %v1490
      %1500 = vmatprep.subr.bf16.mxu0 0
      %1501 = vmatpush1.bf16.msra.mxu0 0
      %1502 = vmatprep.subr.bf16.mxu0 0
      %1503 = vmatpush1.bf16.msra.mxu0 0
      %1504 = vmatprep.subr.bf16.mxu0 0
      %1505 = vmatpush1.bf16.msra.mxu0 0
      %1506 = vmatprep.subr.bf16.mxu0 0
      %1507 = vmatpush1.bf16.msra.mxu0 0
      %1508 = vmatprep.subr.bf16.mxu0 0
      %1509 = vmatpush1.bf16.msra.mxu0 0
      %1510 = vmatprep.subr.bf16.mxu0 0
      %1511 = vmatpush1.bf16.msra.mxu0 0
      %1512 = vmatprep.subr.bf16.mxu0 0
      %1513 = vmatpush1.bf16.msra.mxu0 0
      %1514 = vmatprep.subr.bf16.mxu0 0
      %1515 = vmatpush1.bf16.msra.mxu0 0
      %1516 = vmatprep.subr.bf16.mxu0 0
      %1517 = vmatpush1.bf16.msra.mxu0 0
      %1518 = vmatprep.subr.bf16.mxu0 0
      %1519 = vmatpush1.bf16.msra.mxu0 0
      %1520 = vmatprep.subr.bf16.mxu0 0
      %1521 = vmatpush1.bf16.msra.mxu0 0
      %1522 = vmatprep.subr.bf16.mxu0 0
      %1523 = vmatpush1.bf16.msra.mxu0 0
      %1524 = vmatprep.subr.bf16.mxu0 0
      %1525 = vmatpush1.bf16.msra.mxu0 0
      %1526 = vmatprep.subr.bf16.mxu0 0
      %1527 = vmatpush1.bf16.msra.mxu0 0
      %1528 = vmatprep.mubr.bf16.mxu0 0
      %1529 = vmatmul.mubr.bf16.gmra.mrb[0].mxu0 %v1494
      %v1530 = vpop.f32.mrb[0].mxu0
      %v1531 = vadd.f32 %v1479, %v1530
      %v1532 = vpop.f32.mrb[0].mxu0
      %v1533 = vpop.f32.mrb[0].mxu0
      %v1534 = vpop.f32.mrb[0].mxu0
      %1535 = vdwg.mxu0
      %v1536 = vmul.f32 %v1531, %v1531
      %v1537 = vmul.f32 %v1531, %v1536
      %v1538 = vmul.f32 %v1537, 0.044715
      %v1539 = vadd.f32 %v1531, %v1538
      %v1540 = vmul.f32 %v1539, 0.7978846
      %v1541 = vtanh.pop %v1540
      %v1542 = vadd.f32 %v1541, 1.0
      %v1543 = vmul.f32 %v1542, 0.5
      %v1544 = vmul.f32 %v1531, %v1543
      %v1545 = vpack.c.bf16 %v1544, %v1544
      %v1547 = vlaneseq
      %v1548 = vshrl.u32 %v1547, 7
      %v1549 = vsub.s32 0, %v1548
      %v1550 = vrot.slane %v1446, %v1549
      %v1560 = vunpack.c.l.b16 %v1438
      %v1561 = vunpack.c.l.b16 %v1439
      %v1562 = vunpack.c.l.b16 %v1440
      %v1563 = vunpack.c.l.b16 %v1441
      %v1564 = vunpack.c.l.b16 %v1442
      %v1565 = vunpack.c.l.b16 %v1443
      %v1566 = vunpack.c.l.b16 %v1444
      %v1567 = vunpack.c.l.b16 %v1445
      %v1568 = vpack.c.b16 %v1561, %v1560
      %v1569 = vpack.c.b16 %v1563, %v1562
      %v1570 = vpack.c.b16 %v1565, %v1564
      %v1571 = vpack.c.b16 %v1567, %v1566
      %vm1576 = vcmask 523264
      %v1578 = vsel %vm1576, %v1545, 0
      %1580 = vmatprep.subr.bf16.mxu0 0
      %1581 = vmatpush1.bf16.msra.mxu0 %v1568
      %1582 = vmatprep.subr.bf16.mxu0 0
      %1583 = vmatpush1.bf16.msra.mxu0 %v1569
      %1584 = vmatprep.subr.bf16.mxu0 0
      %1585 = vmatpush1.bf16.msra.mxu0 %v1570
      %1586 = vmatprep.subr.bf16.mxu0 0
      %1587 = vmatpush1.bf16.msra.mxu0 %v1571
      %1588 = vmatprep.subr.bf16.mxu0 0
      %1589 = vmatpush1.bf16.msra.mxu0 0
      %1590 = vmatprep.subr.bf16.mxu0 0
      %1591 = vmatpush1.bf16.msra.mxu0 0
      %1592 = vmatprep.subr.bf16.mxu0 0
      %1593 = vmatpush1.bf16.msra.mxu0 0
      %1594 = vmatprep.subr.bf16.mxu0 0
      %1595 = vmatpush1.bf16.msra.mxu0 0
      %1596 = vmatprep.subr.bf16.mxu0 0
      %1597 = vmatpush1.bf16.msra.mxu0 0
      %1598 = vmatprep.subr.bf16.mxu0 0
      %1599 = vmatpush1.bf16.msra.mxu0 0
      %1600 = vmatprep.subr.bf16.mxu0 0
      %1601 = vmatpush1.bf16.msra.mxu0 0
      %1602 = vmatprep.subr.bf16.mxu0 0
      %1603 = vmatpush1.bf16.msra.mxu0 0
      %1604 = vmatprep.subr.bf16.mxu0 0
      %1605 = vmatpush1.bf16.msra.mxu0 0
      %1606 = vmatprep.subr.bf16.mxu0 0
      %1607 = vmatpush1.bf16.msra.mxu0 0
      %1608 = vmatprep.subr.bf16.mxu0 0
      %1609 = vmatpush1.bf16.msra.mxu0 0
      %1610 = vmatprep.subr.bf16.mxu0 0
      %1611 = vmatpush1.bf16.msra.mxu0 0
      %1612 = vmatprep.mubr.bf16.mxu0 0
      %1613 = vmatmul.mubr.bf16.gmra.mrb[0].mxu0 %v1578
      %v1614 = vpop.f32.mrb[0].mxu0
      %v1615 = vadd.f32 %v1550, %v1614
      %v1616 = vpop.f32.mrb[0].mxu0
      %v1617 = vpop.f32.mrb[0].mxu0
      %v1618 = vpop.f32.mrb[0].mxu0
      %1619 = vdwg.mxu0
      %v1620 = vadd.f32 %v1430, %v1615
      %1621 = vst.msk [vmem:[#allocation2] sm:$0xff] %vm802, %v1620
      %p1622 = scmp.eq.s32.totalorder %s40, 1
      // Predicated region
      $region93: #{_lambda_.2} parent=87 // pred_check
        %p1623 = pneg %p1622
      $region94: #{_lambda_.2} parent=87 // pred_check_branch
        %1625 = sbr.rel (%p1623) target = $region96
      $region95: #{_lambda_.2} parent=87 // pred_region
        %v1626 = vld [vmem:[#allocation2] sm:$0xff]
        %v1627 = vld [vmem:[%s16] sm:$0x1]
        %v1628 = vld [vmem:[%s17] sm:$0x1]
        %v1629 = vsel %vm802, %v1626, 0.0
        %1630 = vadd.xlane.f32.xlu0 %v1629
        %v1631 = vpop.xlane.xlu0 %1630
        %v1632 = vmul.f32 %v1631, %v806
        %v1633 = vsub.f32 %v1626, %v1632
        %v1634 = vmul.f32 %v1633, %v1633
        %v1635 = vsel %vm802, %v1634, 0.0
        %1636 = vadd.xlane.f32.xlu0 %v1635
        %v1637 = vpop.xlane.xlu0 %1636
        %v1638 = vmul.f32 %v1637, %v806
        %v1639 = vadd.f32 %v1638, 1e-05
        %v1640 = vrsqrt.pop %v1639
        %v1641 = vmul.f32 %v1633, %v1640
        %v1643 = vlaneseq
        %v1644 = vshrl.u32 %v1643, 7
        %v1645 = vsub.s32 0, %v1644
        %v1646 = vrot.slane %v1627, %v1645
        %v1648 = vmul.f32 %v1641, %v1646
        %v1650 = vlaneseq
        %v1651 = vshrl.u32 %v1650, 7
        %v1652 = vsub.s32 0, %v1651
        %v1653 = vrot.slane %v1628, %v1652
        %v1655 = vadd.f32 %v1648, %v1653
        %1656 = vst.msk [vmem:[%s754] sm:$0xff] %vm802, %v1655
      $region96: #{_lambda_.2} parent=87 // pred_fallthru
        _
      %p1657 = scmp.lt.s32.totalorder %s39, 1
      %s1658 = scalar_select %p1657, %s39, 1
      %s1659 = smul.addr %s1658, 8
      %s1660 = scalar_lea.vmem %s18, %s1659
      // Predicated region
      $region97: #{_lambda_.2} parent=87 // pred_check
        %p1661 = pneg %p487
      $region98: #{_lambda_.2} parent=87 // pred_check_branch
        %1663 = sbr.rel (%p1661) target = $region100
      $region99: #{_lambda_.2} parent=87 // pred_region
        _
      $region100: #{_lambda_.2} parent=87 // pred_fallthru
        _
    $region88: #{_lambda_.2} parent=5 // pred_fallthru
      _
    %p1664 = scmp.le.s32.totalorder 2, %s30
    // Predicated region
    $region101: #{_lambda_.2} parent=5 // pred_check
      %p1665 = pneg %p1664
    $region102: #{_lambda_.2} parent=5 // pred_check_branch
      %1667 = sbr.rel (%p1665) target = $region104
    $region103: #{_lambda_.2} parent=5 // pred_region
      %s1668 = ssub.s32 %s30, 2
      // Predicated region
      $region105: #{_lambda_.2} parent=103 // pred_check
        %p1669 = pneg %p493
      $region106: #{_lambda_.2} parent=103 // pred_check_branch
        %1671 = sbr.rel (%p1669) target = $region108
      $region107: #{_lambda_.2} parent=103 // pred_region
        %p1672 = scmp.lt.s32.totalorder %s41, 1
        %s1673 = scalar_select %p1672, %s41, 1
        %s1674 = smul.addr %s1673, 8
        %s1675 = scalar_lea.vmem %s18, %s1674
      $region108: #{_lambda_.2} parent=103 // pred_fallthru
        _
    $region104: #{_lambda_.2} parent=5 // pred_fallthru
      _
  $region6: #{_lambda_.2} parent=0 // loop_footer
    %s34 = sadd.s32 1, %s30
  $region7: #{_lambda_.2} parent=0 // loop_footer_branch
    %29 = sbr.rel target = $region3
  $region8: #{_lambda_.2} parent=0 // loop_exit
    _

// kernel: _lambda_.3
$region0: #{_lambda_.3}
  #allocation0 [shape = 'u32[]', space=smem, size = 0x4, offset = 0x4, fixed_abs, tag = 'smem constant byte address 0x4 - core index']
  #allocation1 [shape = 'u32[144,128]{1,0:T(1,128)}', space=vmem, size = 0x12000, scoped, tag = 'internal scratch']
  #allocation2 [shape = 'f32[8,32]{1,0:T(8,128)}', space=vmem, size = 0x1000, scoped, tag = 'scratch operand']
  #allocation3 [shape = 'f32[8,32]{1,0:T(8,128)}', space=vmem, size = 0x1000, scoped, tag = 'scratch operand']
  #allocation4 [shape = 's32[1]{0}', space=sflag, size = 0x4, scoped, tag = 'scoped memory for _lambda_.3']
  #allocation5 [shape = 'u8[512]{0}', space=smem, size = 0x200, scoped, tag = 'prefetched SMEM operand 0']
  %s0 = inlined_call_operand.vmem [shape: s32[2], index: 0, kind: input, shape index: {}]
  %s1 = inlined_call_operand.vmem [shape: f32[2,8,32], index: 1, kind: input, shape index: {}]
  %s2 = inlined_call_operand.vmem [shape: f32[2,8,32], index: 2, kind: input, shape index: {}]
  %s3 = inlined_call_operand.vmem [shape: f32[1,32], index: 3, kind: input, shape index: {}]
  %s4 = inlined_call_operand.vmem [shape: f32[1,32], index: 4, kind: input, shape index: {}]
  %s5 = inlined_call_operand.vmem [shape: f32[2,1,32], index: 5, kind: input, shape index: {}]
  %s6 = inlined_call_operand.vmem [shape: f32[2,1,32], index: 6, kind: input, shape index: {}]
  %s7 = inlined_call_operand.vmem [shape: bf16[2,32,96], index: 7, kind: input, shape index: {}]
  %s8 = inlined_call_operand.vmem [shape: f32[2,1,96], index: 8, kind: input, shape index: {}]
  %s9 = inlined_call_operand.vmem [shape: bf16[2,32,32], index: 9, kind: input, shape index: {}]
  %s10 = inlined_call_operand.vmem [shape: f32[2,1,32], index: 10, kind: input, shape index: {}]
  %s11 = inlined_call_operand.vmem [shape: f32[2,1,32], index: 11, kind: input, shape index: {}]
  %s12 = inlined_call_operand.vmem [shape: f32[2,1,32], index: 12, kind: input, shape index: {}]
  %s13 = inlined_call_operand.vmem [shape: bf16[2,32,32], index: 13, kind: input, shape index: {}]
  %s14 = inlined_call_operand.vmem [shape: f32[2,1,32], index: 14, kind: input, shape index: {}]
  %s15 = inlined_call_operand.vmem [shape: bf16[2,32,64], index: 15, kind: input, shape index: {}]
  %s16 = inlined_call_operand.vmem [shape: f32[2,1,64], index: 16, kind: input, shape index: {}]
  %s17 = inlined_call_operand.vmem [shape: bf16[2,32,32], index: 17, kind: input, shape index: {}]
  %s18 = inlined_call_operand.vmem [shape: f32[2,1,32], index: 18, kind: input, shape index: {}]
  %s19 = inlined_call_operand.vmem [shape: f32[2,1,32], index: 19, kind: input, shape index: {}]
  %s20 = inlined_call_operand.vmem [shape: f32[2,1,32], index: 20, kind: input, shape index: {}]
  %s21 = inlined_call_operand.vmem [shape: bf16[2,32,64], index: 21, kind: input, shape index: {}]
  %s22 = inlined_call_operand.vmem [shape: f32[2,1,64], index: 22, kind: input, shape index: {}]
  %s23 = inlined_call_operand.vmem [shape: bf16[2,64,32], index: 23, kind: input, shape index: {}]
  %s24 = inlined_call_operand.vmem [shape: f32[2,1,32], index: 24, kind: input, shape index: {}]
  %s25 = inlined_call_operand.vmem [shape: f32[1,32], index: 25, kind: input, shape index: {}]
  %s26 = inlined_call_operand.hbm [shape: f32[1,32], index: 26, kind: input, shape index: {}]
  %s27 = inlined_call_operand.vmem [shape: f32[2,8,32], index: 27, kind: output, shape index: {}]
  %s28 = sld [smem:[#allocation0]]
  $region149: #{_lambda_.3} parent=0
    _
  %s30 = ssub.s32 1, %s28
  %s31 = scalar_select 0, %s30, %s28
  %s32 = sshll.u32 %s0, 4
  %s33 = int_to_ptr.vmem [resolvable:$true] %s32
  %35 = dma.vmem_to_smem %s33, 16, [#allocation5], [#allocation4]
  %36 = dma.done [#allocation4], 16
  %37 = sfence
  $region1: #{_lambda_.3} parent=0
    #allocation6 [shape = 'u8[512]{0}', space=vmem, size = 0x400, scoped, tag = 'input window, operand 26, single buffered']
    #allocation7 [shape = 's32[2]{0}', space=sflag, size = 0x8, scoped, tag = 'scoped memory for _lambda_.3']
    %38 = vsyncpa [#allocation7], 0
    loop: start=0, step=1, limit=6
    $region2: #{_lambda_.3} parent=1 // loop_pre_header
      _
    $region3: #{_lambda_.3} parent=1 // loop_header
      %s40 = sphi 0, %s44
      %p41 = scmp.ge.s32.totalorder %s40, 6
      %s47 = sphi 0, %s59
      %s48 = sphi 0, %s55
      %s49 = sphi 0, %s47
      %s50 = sphi 0, %s48
      %s51 = sphi 0, %s49
      %s52 = sphi 0, %s50
      %s62 = sphi 0, %s64
      %s65 = sphi 0, %s62
      %s66 = sphi 0, %s65
      %s82 = sphi 0, %s66
      %s88 = sphi 0, %s90
      %s91 = sphi 0, %s88
      %s92 = sphi 0, %s91
      %s108 = sphi 0, %s92
      %s112 = sphi 0, %s112
      %s114 = sphi 0, %s112
      %s115 = sphi 0, %s114
      %s129 = sphi 0, %s115
      %s133 = sphi 0, %s133
      %s135 = sphi 0, %s133
      %s136 = sphi 0, %s135
      %s150 = sphi 0, %s136
      %s156 = sphi 0, %s158
      %s159 = sphi 0, %s156
      %s160 = sphi 0, %s159
      %s176 = sphi 0, %s160
      %s182 = sphi 0, %s184
      %s185 = sphi 0, %s182
      %s186 = sphi 0, %s185
      %s202 = sphi 0, %s186
      %s208 = sphi 0, %s210
      %s211 = sphi 0, %s208
      %s212 = sphi 0, %s211
      %s228 = sphi 0, %s212
      %s234 = sphi 0, %s236
      %s237 = sphi 0, %s234
      %s238 = sphi 0, %s237
      %s254 = sphi 0, %s238
      %s260 = sphi 0, %s262
      %s263 = sphi 0, %s260
      %s264 = sphi 0, %s263
      %s280 = sphi 0, %s264
      %s286 = sphi 0, %s288
      %s289 = sphi 0, %s286
      %s290 = sphi 0, %s289
      %s306 = sphi 0, %s290
      %s312 = sphi 0, %s314
      %s315 = sphi 0, %s312
      %s316 = sphi 0, %s315
      %s332 = sphi 0, %s316
      %s338 = sphi 0, %s340
      %s341 = sphi 0, %s338
      %s342 = sphi 0, %s341
      %s358 = sphi 0, %s342
      %s364 = sphi 0, %s366
      %s367 = sphi 0, %s364
      %s368 = sphi 0, %s367
      %s384 = sphi 0, %s368
      %s390 = sphi 0, %s392
      %s393 = sphi 0, %s390
      %s394 = sphi 0, %s393
      %s410 = sphi 0, %s394
      %s416 = sphi 0, %s418
      %s419 = sphi 0, %s416
      %s420 = sphi 0, %s419
      %s436 = sphi 0, %s420
      %s442 = sphi 0, %s444
      %s445 = sphi 0, %s442
      %s446 = sphi 0, %s445
      %s462 = sphi 0, %s446
      %s468 = sphi 0, %s470
      %s471 = sphi 0, %s468
      %s472 = sphi 0, %s471
      %s488 = sphi 0, %s472
      %s494 = sphi 0, %s496
      %s497 = sphi 0, %s494
      %s498 = sphi 0, %s497
      %s514 = sphi 0, %s498
      %s520 = sphi 0, %s522
      %s523 = sphi 0, %s520
      %s524 = sphi 0, %s523
      %s540 = sphi 0, %s524
      %s546 = sphi 0, %s548
      %s549 = sphi 0, %s546
      %s550 = sphi 0, %s549
      %s566 = sphi 0, %s550
      %s572 = sphi 0, %s574
      %s575 = sphi 0, %s572
      %s576 = sphi 0, %s575
      %s592 = sphi 0, %s576
      %s598 = sphi 0, %s600
      %s601 = sphi 0, %s598
      %s602 = sphi 0, %s601
      %s618 = sphi 0, %s602
      %s624 = sphi 0, %s626
      %s627 = sphi 0, %s624
      %s628 = sphi 0, %s627
      %s644 = sphi 0, %s628
      %s650 = sphi 0, %s652
      %s653 = sphi 0, %s650
      %s654 = sphi 0, %s653
      %s670 = sphi 0, %s654
      %s674 = sphi 0, %s674
      %s676 = sphi 0, %s674
      %s677 = sphi 0, %s676
      %s691 = sphi 0, %s677
      %s695 = sphi 0, %s695
      %s697 = sphi 0, %s695
      %s698 = sphi 0, %s697
      %s712 = sphi 0, %s698
      %s718 = sphi 0, %s720
      %s721 = sphi 0, %s718
      %s722 = sphi 0, %s721
      %s738 = sphi 0, %s722
    $region4: #{_lambda_.3} parent=1 // loop_header_branch
      %43 = sbr.rel (%p41) target = $region8
    $region5: #{_lambda_.3} parent=1 // loop_body
      %s45 = ssub.s32 %s40, 1
      %s46 = ssub.s32 %s40, 2
      %s53 = sadd.s32 1, %s48
      %p54 = scmp.ge.s32.totalorder %s53, 2
      %s55 = scalar_select %p54, 0, %s53
      %s56 = sadd.s32 1, %s47
      %s57 = scalar_select %p54, %s56, %s47
      %p58 = scmp.ge.s32.totalorder %s57, 2
      %s59 = scalar_select %p58, 0, %s57
      %s60 = ssub.s32 %s47, %s59
      %p61 = scmp.eq.s32.totalorder %s60, 0
      %s63 = sadd.s32 %s62, 1
      %s64 = scalar_select %p61, %s62, %s63
      %p67 = pneg %p61
      %p68 = scmp.eq.s32.totalorder %s40, 3
      %p69 = por %p67, %p68
      %p70 = scmp.ne.s32.totalorder %s62, %s65
      %p71 = scmp.eq.s32.totalorder %s40, 0
      %p72 = por %p70, %p71
      %p73 = scmp.ne.s32.totalorder %s62, %s65
      %p74 = scmp.eq.s32.totalorder %s45, 3
      %p75 = por %p73, %p74
      %p76 = scmp.ne.s32.totalorder %s65, %s66
      %p77 = scmp.eq.s32.totalorder %s45, 0
      %p78 = por %p76, %p77
      %p79 = scmp.ne.s32.totalorder %s65, %s66
      %p80 = scmp.eq.s32.totalorder %s46, 3
      %p81 = por %p79, %p80
      %p83 = scmp.ne.s32.totalorder %s66, %s82
      %p84 = scmp.eq.s32.totalorder %s46, 0
      %p85 = por %p83, %p84
      %s86 = ssub.s32 %s47, %s59
      %p87 = scmp.eq.s32.totalorder %s86, 0
      %s89 = sadd.s32 %s88, 1
      %s90 = scalar_select %p87, %s88, %s89
      %p93 = pneg %p87
      %p94 = scmp.eq.s32.totalorder %s40, 3
      %p95 = por %p93, %p94
      %p96 = scmp.ne.s32.totalorder %s88, %s91
      %p97 = scmp.eq.s32.totalorder %s40, 0
      %p98 = por %p96, %p97
      %p99 = scmp.ne.s32.totalorder %s88, %s91
      %p100 = scmp.eq.s32.totalorder %s45, 3
      %p101 = por %p99, %p100
      %p102 = scmp.ne.s32.totalorder %s91, %s92
      %p103 = scmp.eq.s32.totalorder %s45, 0
      %p104 = por %p102, %p103
      %p105 = scmp.ne.s32.totalorder %s91, %s92
      %p106 = scmp.eq.s32.totalorder %s46, 3
      %p107 = por %p105, %p106
      %p109 = scmp.ne.s32.totalorder %s92, %s108
      %p110 = scmp.eq.s32.totalorder %s46, 0
      %p111 = por %p109, %p110
      %s113 = sadd.s32 %s112, 1
      %p116 = scmp.eq.s32.totalorder %s40, 3
      %p117 = scmp.ne.s32.totalorder %s112, %s114
      %p118 = scmp.eq.s32.totalorder %s40, 0
      %p119 = por %p117, %p118
      %p120 = scmp.ne.s32.totalorder %s112, %s114
      %p121 = scmp.eq.s32.totalorder %s45, 3
      %p122 = por %p120, %p121
      %p123 = scmp.ne.s32.totalorder %s114, %s115
      %p124 = scmp.eq.s32.totalorder %s45, 0
      %p125 = por %p123, %p124
      %p126 = scmp.ne.s32.totalorder %s114, %s115
      %p127 = scmp.eq.s32.totalorder %s46, 3
      %p128 = por %p126, %p127
      %p130 = scmp.ne.s32.totalorder %s115, %s129
      %p131 = scmp.eq.s32.totalorder %s46, 0
      %p132 = por %p130, %p131
      %s134 = sadd.s32 %s133, 1
      %p137 = scmp.eq.s32.totalorder %s40, 3
      %p138 = scmp.ne.s32.totalorder %s133, %s135
      %p139 = scmp.eq.s32.totalorder %s40, 0
      %p140 = por %p138, %p139
      %p141 = scmp.ne.s32.totalorder %s133, %s135
      %p142 = scmp.eq.s32.totalorder %s45, 3
      %p143 = por %p141, %p142
      %p144 = scmp.ne.s32.totalorder %s135, %s136
      %p145 = scmp.eq.s32.totalorder %s45, 0
      %p146 = por %p144, %p145
      %p147 = scmp.ne.s32.totalorder %s135, %s136
      %p148 = scmp.eq.s32.totalorder %s46, 3
      %p149 = por %p147, %p148
      %p151 = scmp.ne.s32.totalorder %s136, %s150
      %p152 = scmp.eq.s32.totalorder %s46, 0
      %p153 = por %p151, %p152
      %s154 = ssub.s32 %s48, %s55
      %p155 = scmp.eq.s32.totalorder %s154, 0
      %s157 = sadd.s32 %s156, 1
      %s158 = scalar_select %p155, %s156, %s157
      %p161 = pneg %p155
      %p162 = scmp.eq.s32.totalorder %s40, 3
      %p163 = por %p161, %p162
      %p164 = scmp.ne.s32.totalorder %s156, %s159
      %p165 = scmp.eq.s32.totalorder %s40, 0
      %p166 = por %p164, %p165
      %p167 = scmp.ne.s32.totalorder %s156, %s159
      %p168 = scmp.eq.s32.totalorder %s45, 3
      %p169 = por %p167, %p168
      %p170 = scmp.ne.s32.totalorder %s159, %s160
      %p171 = scmp.eq.s32.totalorder %s45, 0
      %p172 = por %p170, %p171
      %p173 = scmp.ne.s32.totalorder %s159, %s160
      %p174 = scmp.eq.s32.totalorder %s46, 3
      %p175 = por %p173, %p174
      %p177 = scmp.ne.s32.totalorder %s160, %s176
      %p178 = scmp.eq.s32.totalorder %s46, 0
      %p179 = por %p177, %p178
      %s180 = ssub.s32 %s48, %s55
      %p181 = scmp.eq.s32.totalorder %s180, 0
      %s183 = sadd.s32 %s182, 1
      %s184 = scalar_select %p181, %s182, %s183
      %p187 = pneg %p181
      %p188 = scmp.eq.s32.totalorder %s40, 3
      %p189 = por %p187, %p188
      %p190 = scmp.ne.s32.totalorder %s182, %s185
      %p191 = scmp.eq.s32.totalorder %s40, 0
      %p192 = por %p190, %p191
      %p193 = scmp.ne.s32.totalorder %s182, %s185
      %p194 = scmp.eq.s32.totalorder %s45, 3
      %p195 = por %p193, %p194
      %p196 = scmp.ne.s32.totalorder %s185, %s186
      %p197 = scmp.eq.s32.totalorder %s45, 0
      %p198 = por %p196, %p197
      %p199 = scmp.ne.s32.totalorder %s185, %s186
      %p200 = scmp.eq.s32.totalorder %s46, 3
      %p201 = por %p199, %p200
      %p203 = scmp.ne.s32.totalorder %s186, %s202
      %p204 = scmp.eq.s32.totalorder %s46, 0
      %p205 = por %p203, %p204
      %s206 = ssub.s32 %s48, %s55
      %p207 = scmp.eq.s32.totalorder %s206, 0
      %s209 = sadd.s32 %s208, 1
      %s210 = scalar_select %p207, %s208, %s209
      %p213 = pneg %p207
      %p214 = scmp.eq.s32.totalorder %s40, 3
      %p215 = por %p213, %p214
      %p216 = scmp.ne.s32.totalorder %s208, %s211
      %p217 = scmp.eq.s32.totalorder %s40, 0
      %p218 = por %p216, %p217
      %p219 = scmp.ne.s32.totalorder %s208, %s211
      %p220 = scmp.eq.s32.totalorder %s45, 3
      %p221 = por %p219, %p220
      %p222 = scmp.ne.s32.totalorder %s211, %s212
      %p223 = scmp.eq.s32.totalorder %s45, 0
      %p224 = por %p222, %p223
      %p225 = scmp.ne.s32.totalorder %s211, %s212
      %p226 = scmp.eq.s32.totalorder %s46, 3
      %p227 = por %p225, %p226
      %p229 = scmp.ne.s32.totalorder %s212, %s228
      %p230 = scmp.eq.s32.totalorder %s46, 0
      %p231 = por %p229, %p230
      %s232 = ssub.s32 %s48, %s55
      %p233 = scmp.eq.s32.totalorder %s232, 0
      %s235 = sadd.s32 %s234, 1
      %s236 = scalar_select %p233, %s234, %s235
      %p239 = pneg %p233
      %p240 = scmp.eq.s32.totalorder %s40, 3
      %p241 = por %p239, %p240
      %p242 = scmp.ne.s32.totalorder %s234, %s237
      %p243 = scmp.eq.s32.totalorder %s40, 0
      %p244 = por %p242, %p243
      %p245 = scmp.ne.s32.totalorder %s234, %s237
      %p246 = scmp.eq.s32.totalorder %s45, 3
      %p247 = por %p245, %p246
      %p248 = scmp.ne.s32.totalorder %s237, %s238
      %p249 = scmp.eq.s32.totalorder %s45, 0
      %p250 = por %p248, %p249
      %p251 = scmp.ne.s32.totalorder %s237, %s238
      %p252 = scmp.eq.s32.totalorder %s46, 3
      %p253 = por %p251, %p252
      %p255 = scmp.ne.s32.totalorder %s238, %s254
      %p256 = scmp.eq.s32.totalorder %s46, 0
      %p257 = por %p255, %p256
      %s258 = ssub.s32 %s48, %s55
      %p259 = scmp.eq.s32.totalorder %s258, 0
      %s261 = sadd.s32 %s260, 1
      %s262 = scalar_select %p259, %s260, %s261
      %p265 = pneg %p259
      %p266 = scmp.eq.s32.totalorder %s40, 3
      %p267 = por %p265, %p266
      %p268 = scmp.ne.s32.totalorder %s260, %s263
      %p269 = scmp.eq.s32.totalorder %s40, 0
      %p270 = por %p268, %p269
      %p271 = scmp.ne.s32.totalorder %s260, %s263
      %p272 = scmp.eq.s32.totalorder %s45, 3
      %p273 = por %p271, %p272
      %p274 = scmp.ne.s32.totalorder %s263, %s264
      %p275 = scmp.eq.s32.totalorder %s45, 0
      %p276 = por %p274, %p275
      %p277 = scmp.ne.s32.totalorder %s263, %s264
      %p278 = scmp.eq.s32.totalorder %s46, 3
      %p279 = por %p277, %p278
      %p281 = scmp.ne.s32.totalorder %s264, %s280
      %p282 = scmp.eq.s32.totalorder %s46, 0
      %p283 = por %p281, %p282
      %s284 = ssub.s32 %s48, %s55
      %p285 = scmp.eq.s32.totalorder %s284, 0
      %s287 = sadd.s32 %s286, 1
      %s288 = scalar_select %p285, %s286, %s287
      %p291 = pneg %p285
      %p292 = scmp.eq.s32.totalorder %s40, 3
      %p293 = por %p291, %p292
      %p294 = scmp.ne.s32.totalorder %s286, %s289
      %p295 = scmp.eq.s32.totalorder %s40, 0
      %p296 = por %p294, %p295
      %p297 = scmp.ne.s32.totalorder %s286, %s289
      %p298 = scmp.eq.s32.totalorder %s45, 3
      %p299 = por %p297, %p298
      %p300 = scmp.ne.s32.totalorder %s289, %s290
      %p301 = scmp.eq.s32.totalorder %s45, 0
      %p302 = por %p300, %p301
      %p303 = scmp.ne.s32.totalorder %s289, %s290
      %p304 = scmp.eq.s32.totalorder %s46, 3
      %p305 = por %p303, %p304
      %p307 = scmp.ne.s32.totalorder %s290, %s306
      %p308 = scmp.eq.s32.totalorder %s46, 0
      %p309 = por %p307, %p308
      %s310 = ssub.s32 %s48, %s55
      %p311 = scmp.eq.s32.totalorder %s310, 0
      %s313 = sadd.s32 %s312, 1
      %s314 = scalar_select %p311, %s312, %s313
      %p317 = pneg %p311
      %p318 = scmp.eq.s32.totalorder %s40, 3
      %p319 = por %p317, %p318
      %p320 = scmp.ne.s32.totalorder %s312, %s315
      %p321 = scmp.eq.s32.totalorder %s40, 0
      %p322 = por %p320, %p321
      %p323 = scmp.ne.s32.totalorder %s312, %s315
      %p324 = scmp.eq.s32.totalorder %s45, 3
      %p325 = por %p323, %p324
      %p326 = scmp.ne.s32.totalorder %s315, %s316
      %p327 = scmp.eq.s32.totalorder %s45, 0
      %p328 = por %p326, %p327
      %p329 = scmp.ne.s32.totalorder %s315, %s316
      %p330 = scmp.eq.s32.totalorder %s46, 3
      %p331 = por %p329, %p330
      %p333 = scmp.ne.s32.totalorder %s316, %s332
      %p334 = scmp.eq.s32.totalorder %s46, 0
      %p335 = por %p333, %p334
      %s336 = ssub.s32 %s48, %s55
      %p337 = scmp.eq.s32.totalorder %s336, 0
      %s339 = sadd.s32 %s338, 1
      %s340 = scalar_select %p337, %s338, %s339
      %p343 = pneg %p337
      %p344 = scmp.eq.s32.totalorder %s40, 3
      %p345 = por %p343, %p344
      %p346 = scmp.ne.s32.totalorder %s338, %s341
      %p347 = scmp.eq.s32.totalorder %s40, 0
      %p348 = por %p346, %p347
      %p349 = scmp.ne.s32.totalorder %s338, %s341
      %p350 = scmp.eq.s32.totalorder %s45, 3
      %p351 = por %p349, %p350
      %p352 = scmp.ne.s32.totalorder %s341, %s342
      %p353 = scmp.eq.s32.totalorder %s45, 0
      %p354 = por %p352, %p353
      %p355 = scmp.ne.s32.totalorder %s341, %s342
      %p356 = scmp.eq.s32.totalorder %s46, 3
      %p357 = por %p355, %p356
      %p359 = scmp.ne.s32.totalorder %s342, %s358
      %p360 = scmp.eq.s32.totalorder %s46, 0
      %p361 = por %p359, %p360
      %s362 = ssub.s32 %s48, %s55
      %p363 = scmp.eq.s32.totalorder %s362, 0
      %s365 = sadd.s32 %s364, 1
      %s366 = scalar_select %p363, %s364, %s365
      %p369 = pneg %p363
      %p370 = scmp.eq.s32.totalorder %s40, 3
      %p371 = por %p369, %p370
      %p372 = scmp.ne.s32.totalorder %s364, %s367
      %p373 = scmp.eq.s32.totalorder %s40, 0
      %p374 = por %p372, %p373
      %p375 = scmp.ne.s32.totalorder %s364, %s367
      %p376 = scmp.eq.s32.totalorder %s45, 3
      %p377 = por %p375, %p376
      %p378 = scmp.ne.s32.totalorder %s367, %s368
      %p379 = scmp.eq.s32.totalorder %s45, 0
      %p380 = por %p378, %p379
      %p381 = scmp.ne.s32.totalorder %s367, %s368
      %p382 = scmp.eq.s32.totalorder %s46, 3
      %p383 = por %p381, %p382
      %p385 = scmp.ne.s32.totalorder %s368, %s384
      %p386 = scmp.eq.s32.totalorder %s46, 0
      %p387 = por %p385, %p386
      %s388 = ssub.s32 %s48, %s55
      %p389 = scmp.eq.s32.totalorder %s388, 0
      %s391 = sadd.s32 %s390, 1
      %s392 = scalar_select %p389, %s390, %s391
      %p395 = pneg %p389
      %p396 = scmp.eq.s32.totalorder %s40, 3
      %p397 = por %p395, %p396
      %p398 = scmp.ne.s32.totalorder %s390, %s393
      %p399 = scmp.eq.s32.totalorder %s40, 0
      %p400 = por %p398, %p399
      %p401 = scmp.ne.s32.totalorder %s390, %s393
      %p402 = scmp.eq.s32.totalorder %s45, 3
      %p403 = por %p401, %p402
      %p404 = scmp.ne.s32.totalorder %s393, %s394
      %p405 = scmp.eq.s32.totalorder %s45, 0
      %p406 = por %p404, %p405
      %p407 = scmp.ne.s32.totalorder %s393, %s394
      %p408 = scmp.eq.s32.totalorder %s46, 3
      %p409 = por %p407, %p408
      %p411 = scmp.ne.s32.totalorder %s394, %s410
      %p412 = scmp.eq.s32.totalorder %s46, 0
      %p413 = por %p411, %p412
      %s414 = ssub.s32 %s48, %s55
      %p415 = scmp.eq.s32.totalorder %s414, 0
      %s417 = sadd.s32 %s416, 1
      %s418 = scalar_select %p415, %s416, %s417
      %p421 = pneg %p415
      %p422 = scmp.eq.s32.totalorder %s40, 3
      %p423 = por %p421, %p422
      %p424 = scmp.ne.s32.totalorder %s416, %s419
      %p425 = scmp.eq.s32.totalorder %s40, 0
      %p426 = por %p424, %p425
      %p427 = scmp.ne.s32.totalorder %s416, %s419
      %p428 = scmp.eq.s32.totalorder %s45, 3
      %p429 = por %p427, %p428
      %p430 = scmp.ne.s32.totalorder %s419, %s420
      %p431 = scmp.eq.s32.totalorder %s45, 0
      %p432 = por %p430, %p431
      %p433 = scmp.ne.s32.totalorder %s419, %s420
      %p434 = scmp.eq.s32.totalorder %s46, 3
      %p435 = por %p433, %p434
      %p437 = scmp.ne.s32.totalorder %s420, %s436
      %p438 = scmp.eq.s32.totalorder %s46, 0
      %p439 = por %p437, %p438
      %s440 = ssub.s32 %s48, %s55
      %p441 = scmp.eq.s32.totalorder %s440, 0
      %s443 = sadd.s32 %s442, 1
      %s444 = scalar_select %p441, %s442, %s443
      %p447 = pneg %p441
      %p448 = scmp.eq.s32.totalorder %s40, 3
      %p449 = por %p447, %p448
      %p450 = scmp.ne.s32.totalorder %s442, %s445
      %p451 = scmp.eq.s32.totalorder %s40, 0
      %p452 = por %p450, %p451
      %p453 = scmp.ne.s32.totalorder %s442, %s445
      %p454 = scmp.eq.s32.totalorder %s45, 3
      %p455 = por %p453, %p454
      %p456 = scmp.ne.s32.totalorder %s445, %s446
      %p457 = scmp.eq.s32.totalorder %s45, 0
      %p458 = por %p456, %p457
      %p459 = scmp.ne.s32.totalorder %s445, %s446
      %p460 = scmp.eq.s32.totalorder %s46, 3
      %p461 = por %p459, %p460
      %p463 = scmp.ne.s32.totalorder %s446, %s462
      %p464 = scmp.eq.s32.totalorder %s46, 0
      %p465 = por %p463, %p464
      %s466 = ssub.s32 %s48, %s55
      %p467 = scmp.eq.s32.totalorder %s466, 0
      %s469 = sadd.s32 %s468, 1
      %s470 = scalar_select %p467, %s468, %s469
      %p473 = pneg %p467
      %p474 = scmp.eq.s32.totalorder %s40, 3
      %p475 = por %p473, %p474
      %p476 = scmp.ne.s32.totalorder %s468, %s471
      %p477 = scmp.eq.s32.totalorder %s40, 0
      %p478 = por %p476, %p477
      %p479 = scmp.ne.s32.totalorder %s468, %s471
      %p480 = scmp.eq.s32.totalorder %s45, 3
      %p481 = por %p479, %p480
      %p482 = scmp.ne.s32.totalorder %s471, %s472
      %p483 = scmp.eq.s32.totalorder %s45, 0
      %p484 = por %p482, %p483
      %p485 = scmp.ne.s32.totalorder %s471, %s472
      %p486 = scmp.eq.s32.totalorder %s46, 3
      %p487 = por %p485, %p486
      %p489 = scmp.ne.s32.totalorder %s472, %s488
      %p490 = scmp.eq.s32.totalorder %s46, 0
      %p491 = por %p489, %p490
      %s492 = ssub.s32 %s48, %s55
      %p493 = scmp.eq.s32.totalorder %s492, 0
      %s495 = sadd.s32 %s494, 1
      %s496 = scalar_select %p493, %s494, %s495
      %p499 = pneg %p493
      %p500 = scmp.eq.s32.totalorder %s40, 3
      %p501 = por %p499, %p500
      %p502 = scmp.ne.s32.totalorder %s494, %s497
      %p503 = scmp.eq.s32.totalorder %s40, 0
      %p504 = por %p502, %p503
      %p505 = scmp.ne.s32.totalorder %s494, %s497
      %p506 = scmp.eq.s32.totalorder %s45, 3
      %p507 = por %p505, %p506
      %p508 = scmp.ne.s32.totalorder %s497, %s498
      %p509 = scmp.eq.s32.totalorder %s45, 0
      %p510 = por %p508, %p509
      %p511 = scmp.ne.s32.totalorder %s497, %s498
      %p512 = scmp.eq.s32.totalorder %s46, 3
      %p513 = por %p511, %p512
      %p515 = scmp.ne.s32.totalorder %s498, %s514
      %p516 = scmp.eq.s32.totalorder %s46, 0
      %p517 = por %p515, %p516
      %s518 = ssub.s32 %s48, %s55
      %p519 = scmp.eq.s32.totalorder %s518, 0
      %s521 = sadd.s32 %s520, 1
      %s522 = scalar_select %p519, %s520, %s521
      %p525 = pneg %p519
      %p526 = scmp.eq.s32.totalorder %s40, 3
      %p527 = por %p525, %p526
      %p528 = scmp.ne.s32.totalorder %s520, %s523
      %p529 = scmp.eq.s32.totalorder %s40, 0
      %p530 = por %p528, %p529
      %p531 = scmp.ne.s32.totalorder %s520, %s523
      %p532 = scmp.eq.s32.totalorder %s45, 3
      %p533 = por %p531, %p532
      %p534 = scmp.ne.s32.totalorder %s523, %s524
      %p535 = scmp.eq.s32.totalorder %s45, 0
      %p536 = por %p534, %p535
      %p537 = scmp.ne.s32.totalorder %s523, %s524
      %p538 = scmp.eq.s32.totalorder %s46, 3
      %p539 = por %p537, %p538
      %p541 = scmp.ne.s32.totalorder %s524, %s540
      %p542 = scmp.eq.s32.totalorder %s46, 0
      %p543 = por %p541, %p542
      %s544 = ssub.s32 %s48, %s55
      %p545 = scmp.eq.s32.totalorder %s544, 0
      %s547 = sadd.s32 %s546, 1
      %s548 = scalar_select %p545, %s546, %s547
      %p551 = pneg %p545
      %p552 = scmp.eq.s32.totalorder %s40, 3
      %p553 = por %p551, %p552
      %p554 = scmp.ne.s32.totalorder %s546, %s549
      %p555 = scmp.eq.s32.totalorder %s40, 0
      %p556 = por %p554, %p555
      %p557 = scmp.ne.s32.totalorder %s546, %s549
      %p558 = scmp.eq.s32.totalorder %s45, 3
      %p559 = por %p557, %p558
      %p560 = scmp.ne.s32.totalorder %s549, %s550
      %p561 = scmp.eq.s32.totalorder %s45, 0
      %p562 = por %p560, %p561
      %p563 = scmp.ne.s32.totalorder %s549, %s550
      %p564 = scmp.eq.s32.totalorder %s46, 3
      %p565 = por %p563, %p564
      %p567 = scmp.ne.s32.totalorder %s550, %s566
      %p568 = scmp.eq.s32.totalorder %s46, 0
      %p569 = por %p567, %p568
      %s570 = ssub.s32 %s48, %s55
      %p571 = scmp.eq.s32.totalorder %s570, 0
      %s573 = sadd.s32 %s572, 1
      %s574 = scalar_select %p571, %s572, %s573
      %p577 = pneg %p571
      %p578 = scmp.eq.s32.totalorder %s40, 3
      %p579 = por %p577, %p578
      %p580 = scmp.ne.s32.totalorder %s572, %s575
      %p581 = scmp.eq.s32.totalorder %s40, 0
      %p582 = por %p580, %p581
      %p583 = scmp.ne.s32.totalorder %s572, %s575
      %p584 = scmp.eq.s32.totalorder %s45, 3
      %p585 = por %p583, %p584
      %p586 = scmp.ne.s32.totalorder %s575, %s576
      %p587 = scmp.eq.s32.totalorder %s45, 0
      %p588 = por %p586, %p587
      %p589 = scmp.ne.s32.totalorder %s575, %s576
      %p590 = scmp.eq.s32.totalorder %s46, 3
      %p591 = por %p589, %p590
      %p593 = scmp.ne.s32.totalorder %s576, %s592
      %p594 = scmp.eq.s32.totalorder %s46, 0
      %p595 = por %p593, %p594
      %s596 = ssub.s32 %s48, %s55
      %p597 = scmp.eq.s32.totalorder %s596, 0
      %s599 = sadd.s32 %s598, 1
      %s600 = scalar_select %p597, %s598, %s599
      %p603 = pneg %p597
      %p604 = scmp.eq.s32.totalorder %s40, 3
      %p605 = por %p603, %p604
      %p606 = scmp.ne.s32.totalorder %s598, %s601
      %p607 = scmp.eq.s32.totalorder %s40, 0
      %p608 = por %p606, %p607
      %p609 = scmp.ne.s32.totalorder %s598, %s601
      %p610 = scmp.eq.s32.totalorder %s45, 3
      %p611 = por %p609, %p610
      %p612 = scmp.ne.s32.totalorder %s601, %s602
      %p613 = scmp.eq.s32.totalorder %s45, 0
      %p614 = por %p612, %p613
      %p615 = scmp.ne.s32.totalorder %s601, %s602
      %p616 = scmp.eq.s32.totalorder %s46, 3
      %p617 = por %p615, %p616
      %p619 = scmp.ne.s32.totalorder %s602, %s618
      %p620 = scmp.eq.s32.totalorder %s46, 0
      %p621 = por %p619, %p620
      %s622 = ssub.s32 %s48, %s55
      %p623 = scmp.eq.s32.totalorder %s622, 0
      %s625 = sadd.s32 %s624, 1
      %s626 = scalar_select %p623, %s624, %s625
      %p629 = pneg %p623
      %p630 = scmp.eq.s32.totalorder %s40, 3
      %p631 = por %p629, %p630
      %p632 = scmp.ne.s32.totalorder %s624, %s627
      %p633 = scmp.eq.s32.totalorder %s40, 0
      %p634 = por %p632, %p633
      %p635 = scmp.ne.s32.totalorder %s624, %s627
      %p636 = scmp.eq.s32.totalorder %s45, 3
      %p637 = por %p635, %p636
      %p638 = scmp.ne.s32.totalorder %s627, %s628
      %p639 = scmp.eq.s32.totalorder %s45, 0
      %p640 = por %p638, %p639
      %p641 = scmp.ne.s32.totalorder %s627, %s628
      %p642 = scmp.eq.s32.totalorder %s46, 3
      %p643 = por %p641, %p642
      %p645 = scmp.ne.s32.totalorder %s628, %s644
      %p646 = scmp.eq.s32.totalorder %s46, 0
      %p647 = por %p645, %p646
      %s648 = ssub.s32 %s48, %s55
      %p649 = scmp.eq.s32.totalorder %s648, 0
      %s651 = sadd.s32 %s650, 1
      %s652 = scalar_select %p649, %s650, %s651
      %p655 = pneg %p649
      %p656 = scmp.eq.s32.totalorder %s40, 3
      %p657 = por %p655, %p656
      %p658 = scmp.ne.s32.totalorder %s650, %s653
      %p659 = scmp.eq.s32.totalorder %s40, 0
      %p660 = por %p658, %p659
      %p661 = scmp.ne.s32.totalorder %s650, %s653
      %p662 = scmp.eq.s32.totalorder %s45, 3
      %p663 = por %p661, %p662
      %p664 = scmp.ne.s32.totalorder %s653, %s654
      %p665 = scmp.eq.s32.totalorder %s45, 0
      %p666 = por %p664, %p665
      %p667 = scmp.ne.s32.totalorder %s653, %s654
      %p668 = scmp.eq.s32.totalorder %s46, 3
      %p669 = por %p667, %p668
      %p671 = scmp.ne.s32.totalorder %s654, %s670
      %p672 = scmp.eq.s32.totalorder %s46, 0
      %p673 = por %p671, %p672
      %s675 = sadd.s32 %s674, 1
      %p678 = scmp.eq.s32.totalorder %s40, 3
      %p679 = scmp.ne.s32.totalorder %s674, %s676
      %p680 = scmp.eq.s32.totalorder %s40, 0
      %p681 = por %p679, %p680
      %p682 = scmp.ne.s32.totalorder %s674, %s676
      %p683 = scmp.eq.s32.totalorder %s45, 3
      %p684 = por %p682, %p683
      %p685 = scmp.ne.s32.totalorder %s676, %s677
      %p686 = scmp.eq.s32.totalorder %s45, 0
      %p687 = por %p685, %p686
      %p688 = scmp.ne.s32.totalorder %s676, %s677
      %p689 = scmp.eq.s32.totalorder %s46, 3
      %p690 = por %p688, %p689
      %p692 = scmp.ne.s32.totalorder %s677, %s691
      %p693 = scmp.eq.s32.totalorder %s46, 0
      %p694 = por %p692, %p693
      %s696 = sadd.s32 %s695, 1
      %p699 = scmp.eq.s32.totalorder %s40, 3
      %p700 = scmp.ne.s32.totalorder %s695, %s697
      %p701 = scmp.eq.s32.totalorder %s40, 0
      %p702 = por %p700, %p701
      %p703 = scmp.ne.s32.totalorder %s695, %s697
      %p704 = scmp.eq.s32.totalorder %s45, 3
      %p705 = por %p703, %p704
      %p706 = scmp.ne.s32.totalorder %s697, %s698
      %p707 = scmp.eq.s32.totalorder %s45, 0
      %p708 = por %p706, %p707
      %p709 = scmp.ne.s32.totalorder %s697, %s698
      %p710 = scmp.eq.s32.totalorder %s46, 3
      %p711 = por %p709, %p710
      %p713 = scmp.ne.s32.totalorder %s698, %s712
      %p714 = scmp.eq.s32.totalorder %s46, 0
      %p715 = por %p713, %p714
      %s716 = ssub.s32 %s47, %s59
      %p717 = scmp.eq.s32.totalorder %s716, 0
      %s719 = sadd.s32 %s718, 1
      %s720 = scalar_select %p717, %s718, %s719
      %p723 = pneg %p717
      %p724 = scmp.eq.s32.totalorder %s40, 3
      %p725 = por %p723, %p724
      %p726 = scmp.ne.s32.totalorder %s718, %s721
      %p727 = scmp.eq.s32.totalorder %s40, 0
      %p728 = por %p726, %p727
      %p729 = scmp.ne.s32.totalorder %s718, %s721
      %p730 = scmp.eq.s32.totalorder %s45, 3
      %p731 = por %p729, %p730
      %p732 = scmp.ne.s32.totalorder %s721, %s722
      %p733 = scmp.eq.s32.totalorder %s45, 0
      %p734 = por %p732, %p733
      %p735 = scmp.ne.s32.totalorder %s721, %s722
      %p736 = scmp.eq.s32.totalorder %s46, 3
      %p737 = por %p735, %p736
      %p739 = scmp.ne.s32.totalorder %s722, %s738
      %p740 = scmp.eq.s32.totalorder %s46, 0
      %p741 = por %p739, %p740
      %p742 = scmp.le.s32.totalorder 1, %s40
      %p743 = scmp.lt.s32.totalorder %s40, 5
      %p744 = pnand %p742, %p743
      %p745 = pneg %p744
      // Predicated region
      $region9: #{_lambda_.3} parent=5 // pred_check
        _
      $region10: #{_lambda_.3} parent=5 // pred_check_branch
        %747 = sbr.rel (%p744) target = $region12
      $region11: #{_lambda_.3} parent=5 // pred_region
        %s748 = ssub.s32 %s40, 1
        // Predicated region
        $region13: #{_lambda_.3} parent=11 // pred_check
          %p749 = pneg %p125
        $region14: #{_lambda_.3} parent=11 // pred_check_branch
          %751 = sbr.rel (%p749) target = $region16
        $region15: #{_lambda_.3} parent=11 // pred_region
          _
        $region16: #{_lambda_.3} parent=11 // pred_fallthru
          _
        // Predicated region
        $region17: #{_lambda_.3} parent=11 // pred_check
          %p752 = pneg %p146
        $region18: #{_lambda_.3} parent=11 // pred_check_branch
          %754 = sbr.rel (%p752) target = $region20
        $region19: #{_lambda_.3} parent=11 // pred_region
          _
        $region20: #{_lambda_.3} parent=11 // pred_fallthru
          _
        // Predicated region
        $region21: #{_lambda_.3} parent=11 // pred_check
          %p755 = pneg %p687
        $region22: #{_lambda_.3} parent=11 // pred_check_branch
          %757 = sbr.rel (%p755) target = $region24
        $region23: #{_lambda_.3} parent=11 // pred_region
          _
        $region24: #{_lambda_.3} parent=11 // pred_fallthru
          _
        // Predicated region
        $region25: #{_lambda_.3} parent=11 // pred_check
          %p758 = pneg %p708
        $region26: #{_lambda_.3} parent=11 // pred_check_branch
          %760 = sbr.rel (%p758) target = $region28
        $region27: #{_lambda_.3} parent=11 // pred_region
          %s762 = ssub.s32 16, 16
          %763 = vsyncadd [#allocation7], %s762
          %s765 = sshll.u32 [#allocation6], 4
          %s766 = int_to_ptr.vmem [resolvable:$true] %s765
          %768 = dma.hbm_to_vmem [thread:$0]  %s26, 16, %s766, [#allocation7]
        $region28: #{_lambda_.3} parent=11 // pred_fallthru
          _
      $region12: #{_lambda_.3} parent=5 // pred_fallthru
        _
      %p769 = scmp.lt.s32.totalorder %s40, 4
      // Predicated region
      $region29: #{_lambda_.3} parent=5 // pred_check
        %p770 = pneg %p769
      $region30: #{_lambda_.3} parent=5 // pred_check_branch
        %772 = sbr.rel (%p770) target = $region32
      $region31: #{_lambda_.3} parent=5 // pred_region
        // Predicated region
        $region33: #{_lambda_.3} parent=31 // pred_check
          %p773 = pneg %p72
        $region34: #{_lambda_.3} parent=31 // pred_check_branch
          %775 = sbr.rel (%p773) target = $region36
        $region35: #{_lambda_.3} parent=31 // pred_region
          %p776 = scmp.lt.s32.totalorder %s47, 1
          %s777 = scalar_select %p776, %s47, 1
          %s778 = smul.addr %s777, 8
          %s779 = scalar_lea.vmem %s1, %s778
        $region36: #{_lambda_.3} parent=31 // pred_fallthru
          _
        // Predicated region
        $region37: #{_lambda_.3} parent=31 // pred_check
          %p780 = pneg %p98
        $region38: #{_lambda_.3} parent=31 // pred_check_branch
          %782 = sbr.rel (%p780) target = $region40
        $region39: #{_lambda_.3} parent=31 // pred_region
          %p783 = scmp.lt.s32.totalorder %s47, 1
          %s784 = scalar_select %p783, %s47, 1
          %s785 = smul.addr %s784, 8
          %s786 = scalar_lea.vmem %s2, %s785
        $region40: #{_lambda_.3} parent=31 // pred_fallthru
          _
        // Predicated region
        $region41: #{_lambda_.3} parent=31 // pred_check
          %p787 = pneg %p166
        $region42: #{_lambda_.3} parent=31 // pred_check_branch
          %789 = sbr.rel (%p787) target = $region44
        $region43: #{_lambda_.3} parent=31 // pred_region
          %p790 = scmp.lt.s32.totalorder %s48, 1
          %s791 = scalar_select %p790, %s48, 1
          %s792 = scalar_lea.vmem %s5, %s791
        $region44: #{_lambda_.3} parent=31 // pred_fallthru
          _
        // Predicated region
        $region45: #{_lambda_.3} parent=31 // pred_check
          %p793 = pneg %p192
        $region46: #{_lambda_.3} parent=31 // pred_check_branch
          %795 = sbr.rel (%p793) target = $region48
        $region47: #{_lambda_.3} parent=31 // pred_region
          %p796 = scmp.lt.s32.totalorder %s48, 1
          %s797 = scalar_select %p796, %s48, 1
          %s798 = scalar_lea.vmem %s6, %s797
        $region48: #{_lambda_.3} parent=31 // pred_fallthru
          _
        // Predicated region
        $region49: #{_lambda_.3} parent=31 // pred_check
          %p799 = pneg %p218
        $region50: #{_lambda_.3} parent=31 // pred_check_branch
          %801 = sbr.rel (%p799) target = $region52
        $region51: #{_lambda_.3} parent=31 // pred_region
          %p802 = scmp.lt.s32.totalorder %s48, 1
          %s803 = scalar_select %p802, %s48, 1
          %s804 = smul.addr %s803, 4
          %s805 = smul.addr %s804, 4
          %s806 = scalar_lea.vmem %s7, %s805
        $region52: #{_lambda_.3} parent=31 // pred_fallthru
          _
        // Predicated region
        $region53: #{_lambda_.3} parent=31 // pred_check
          %p807 = pneg %p244
        $region54: #{_lambda_.3} parent=31 // pred_check_branch
          %809 = sbr.rel (%p807) target = $region56
        $region55: #{_lambda_.3} parent=31 // pred_region
          %p810 = scmp.lt.s32.totalorder %s48, 1
          %s811 = scalar_select %p810, %s48, 1
          %s812 = scalar_lea.vmem %s8, %s811
        $region56: #{_lambda_.3} parent=31 // pred_fallthru
          _
        // Predicated region
        $region57: #{_lambda_.3} parent=31 // pred_check
          %p813 = pneg %p270
        $region58: #{_lambda_.3} parent=31 // pred_check_branch
          %815 = sbr.rel (%p813) target = $region60
        $region59: #{_lambda_.3} parent=31 // pred_region
          %p816 = scmp.lt.s32.totalorder %s48, 1
          %s817 = scalar_select %p816, %s48, 1
          %s818 = smul.addr %s817, 4
          %s819 = smul.addr %s818, 4
          %s820 = scalar_lea.vmem %s9, %s819
        $region60: #{_lambda_.3} parent=31 // pred_fallthru
          _
        // Predicated region
        $region61: #{_lambda_.3} parent=31 // pred_check
          %p821 = pneg %p296
        $region62: #{_lambda_.3} parent=31 // pred_check_branch
          %823 = sbr.rel (%p821) target = $region64
        $region63: #{_lambda_.3} parent=31 // pred_region
          %p824 = scmp.lt.s32.totalorder %s48, 1
          %s825 = scalar_select %p824, %s48, 1
          %s826 = scalar_lea.vmem %s10, %s825
        $region64: #{_lambda_.3} parent=31 // pred_fallthru
          _
        // Predicated region
        $region65: #{_lambda_.3} parent=31 // pred_check
          %p827 = pneg %p322
        $region66: #{_lambda_.3} parent=31 // pred_check_branch
          %829 = sbr.rel (%p827) target = $region68
        $region67: #{_lambda_.3} parent=31 // pred_region
          %p830 = scmp.lt.s32.totalorder %s48, 1
          %s831 = scalar_select %p830, %s48, 1
          %s832 = scalar_lea.vmem %s11, %s831
        $region68: #{_lambda_.3} parent=31 // pred_fallthru
          _
        // Predicated region
        $region69: #{_lambda_.3} parent=31 // pred_check
          %p833 = pneg %p348
        $region70: #{_lambda_.3} parent=31 // pred_check_branch
          %835 = sbr.rel (%p833) target = $region72
        $region71: #{_lambda_.3} parent=31 // pred_region
          %p836 = scmp.lt.s32.totalorder %s48, 1
          %s837 = scalar_select %p836, %s48, 1
          %s838 = scalar_lea.vmem %s12, %s837
        $region72: #{_lambda_.3} parent=31 // pred_fallthru
          _
        // Predicated region
        $region73: #{_lambda_.3} parent=31 // pred_check
          %p839 = pneg %p374
        $region74: #{_lambda_.3} parent=31 // pred_check_branch
          %841 = sbr.rel (%p839) target = $region76
        $region75: #{_lambda_.3} parent=31 // pred_region
          %p842 = scmp.lt.s32.totalorder %s48, 1
          %s843 = scalar_select %p842, %s48, 1
          %s844 = smul.addr %s843, 4
          %s845 = smul.addr %s844, 4
          %s846 = scalar_lea.vmem %s13, %s845
        $region76: #{_lambda_.3} parent=31 // pred_fallthru
          _
        // Predicated region
        $region77: #{_lambda_.3} parent=31 // pred_check
          %p847 = pneg %p400
        $region78: #{_lambda_.3} parent=31 // pred_check_branch
          %849 = sbr.rel (%p847) target = $region80
        $region79: #{_lambda_.3} parent=31 // pred_region
          %p850 = scmp.lt.s32.totalorder %s48, 1
          %s851 = scalar_select %p850, %s48, 1
          %s852 = scalar_lea.vmem %s14, %s851
        $region80: #{_lambda_.3} parent=31 // pred_fallthru
          _
        // Predicated region
        $region81: #{_lambda_.3} parent=31 // pred_check
          %p853 = pneg %p426
        $region82: #{_lambda_.3} parent=31 // pred_check_branch
          %855 = sbr.rel (%p853) target = $region84
        $region83: #{_lambda_.3} parent=31 // pred_region
          %p856 = scmp.lt.s32.totalorder %s48, 1
          %s857 = scalar_select %p856, %s48, 1
          %s858 = smul.addr %s857, 4
          %s859 = smul.addr %s858, 4
          %s860 = scalar_lea.vmem %s15, %s859
        $region84: #{_lambda_.3} parent=31 // pred_fallthru
          _
        // Predicated region
        $region85: #{_lambda_.3} parent=31 // pred_check
          %p861 = pneg %p452
        $region86: #{_lambda_.3} parent=31 // pred_check_branch
          %863 = sbr.rel (%p861) target = $region88
        $region87: #{_lambda_.3} parent=31 // pred_region
          %p864 = scmp.lt.s32.totalorder %s48, 1
          %s865 = scalar_select %p864, %s48, 1
          %s866 = scalar_lea.vmem %s16, %s865
        $region88: #{_lambda_.3} parent=31 // pred_fallthru
          _
        // Predicated region
        $region89: #{_lambda_.3} parent=31 // pred_check
          %p867 = pneg %p478
        $region90: #{_lambda_.3} parent=31 // pred_check_branch
          %869 = sbr.rel (%p867) target = $region92
        $region91: #{_lambda_.3} parent=31 // pred_region
          %p870 = scmp.lt.s32.totalorder %s48, 1
          %s871 = scalar_select %p870, %s48, 1
          %s872 = smul.addr %s871, 4
          %s873 = smul.addr %s872, 4
          %s874 = scalar_lea.vmem %s17, %s873
        $region92: #{_lambda_.3} parent=31 // pred_fallthru
          _
        // Predicated region
        $region93: #{_lambda_.3} parent=31 // pred_check
          %p875 = pneg %p504
        $region94: #{_lambda_.3} parent=31 // pred_check_branch
          %877 = sbr.rel (%p875) target = $region96
        $region95: #{_lambda_.3} parent=31 // pred_region
          %p878 = scmp.lt.s32.totalorder %s48, 1
          %s879 = scalar_select %p878, %s48, 1
          %s880 = scalar_lea.vmem %s18, %s879
        $region96: #{_lambda_.3} parent=31 // pred_fallthru
          _
        // Predicated region
        $region97: #{_lambda_.3} parent=31 // pred_check
          %p881 = pneg %p530
        $region98: #{_lambda_.3} parent=31 // pred_check_branch
          %883 = sbr.rel (%p881) target = $region100
        $region99: #{_lambda_.3} parent=31 // pred_region
          %p884 = scmp.lt.s32.totalorder %s48, 1
          %s885 = scalar_select %p884, %s48, 1
          %s886 = scalar_lea.vmem %s19, %s885
        $region100: #{_lambda_.3} parent=31 // pred_fallthru
          _
        // Predicated region
        $region101: #{_lambda_.3} parent=31 // pred_check
          %p887 = pneg %p556
        $region102: #{_lambda_.3} parent=31 // pred_check_branch
          %889 = sbr.rel (%p887) target = $region104
        $region103: #{_lambda_.3} parent=31 // pred_region
          %p890 = scmp.lt.s32.totalorder %s48, 1
          %s891 = scalar_select %p890, %s48, 1
          %s892 = scalar_lea.vmem %s20, %s891
        $region104: #{_lambda_.3} parent=31 // pred_fallthru
          _
        // Predicated region
        $region105: #{_lambda_.3} parent=31 // pred_check
          %p893 = pneg %p582
        $region106: #{_lambda_.3} parent=31 // pred_check_branch
          %895 = sbr.rel (%p893) target = $region108
        $region107: #{_lambda_.3} parent=31 // pred_region
          %p896 = scmp.lt.s32.totalorder %s48, 1
          %s897 = scalar_select %p896, %s48, 1
          %s898 = smul.addr %s897, 4
          %s899 = smul.addr %s898, 4
          %s900 = scalar_lea.vmem %s21, %s899
        $region108: #{_lambda_.3} parent=31 // pred_fallthru
          _
        // Predicated region
        $region109: #{_lambda_.3} parent=31 // pred_check
          %p901 = pneg %p608
        $region110: #{_lambda_.3} parent=31 // pred_check_branch
          %903 = sbr.rel (%p901) target = $region112
        $region111: #{_lambda_.3} parent=31 // pred_region
          %p904 = scmp.lt.s32.totalorder %s48, 1
          %s905 = scalar_select %p904, %s48, 1
          %s906 = scalar_lea.vmem %s22, %s905
        $region112: #{_lambda_.3} parent=31 // pred_fallthru
          _
        // Predicated region
        $region113: #{_lambda_.3} parent=31 // pred_check
          %p907 = pneg %p634
        $region114: #{_lambda_.3} parent=31 // pred_check_branch
          %909 = sbr.rel (%p907) target = $region116
        $region115: #{_lambda_.3} parent=31 // pred_region
          %p910 = scmp.lt.s32.totalorder %s48, 1
          %s911 = scalar_select %p910, %s48, 1
          %s912 = smul.addr %s911, 8
          %s913 = smul.addr %s912, 4
          %s914 = scalar_lea.vmem %s23, %s913
        $region116: #{_lambda_.3} parent=31 // pred_fallthru
          _
        // Predicated region
        $region117: #{_lambda_.3} parent=31 // pred_check
          %p915 = pneg %p660
        $region118: #{_lambda_.3} parent=31 // pred_check_branch
          %917 = sbr.rel (%p915) target = $region120
        $region119: #{_lambda_.3} parent=31 // pred_region
          %p918 = scmp.lt.s32.totalorder %s48, 1
          %s919 = scalar_select %p918, %s48, 1
          %s920 = scalar_lea.vmem %s24, %s919
        $region120: #{_lambda_.3} parent=31 // pred_fallthru
          _
      $region32: #{_lambda_.3} parent=5 // pred_fallthru
        _
      %p921 = scmp.le.s32.totalorder 1, %s40
      %p922 = scmp.lt.s32.totalorder %s40, 5
      %p923 = pnand %p921, %p922
      %p924 = pneg %p923
      // Predicated region
      $region121: #{_lambda_.3} parent=5 // pred_check
        _
      $region122: #{_lambda_.3} parent=5 // pred_check_branch
        %926 = sbr.rel (%p923) target = $region124
      $region123: #{_lambda_.3} parent=5 // pred_region
        %s927 = ssub.s32 %s40, 1
        // Predicated region
        $region125: #{_lambda_.3} parent=123 // pred_check
          %p928 = pneg %p708
        $region126: #{_lambda_.3} parent=123 // pred_check_branch
          %930 = sbr.rel (%p928) target = $region128
        $region127: #{_lambda_.3} parent=123 // pred_region
          %931 = dma.done [#allocation7], 16
        $region128: #{_lambda_.3} parent=123 // pred_fallthru
          _
        %p932 = scmp.lt.s32.totalorder %s49, 1
        %s933 = scalar_select %p932, %s49, 1
        %s934 = smul.addr %s933, 8
        %s935 = scalar_lea.vmem %s1, %s934
        %p936 = pneg %p78
        %p937 = pneg %p75
        %p938 = scmp.lt.s32.totalorder %s49, 1
        %s939 = scalar_select %p938, %s49, 1
        %s940 = smul.addr %s939, 8
        %s941 = scalar_lea.vmem %s2, %s940
        %p942 = pneg %p104
        %p943 = pneg %p101
        %p944 = pneg %p125
        %p945 = pneg %p122
        %p946 = pneg %p146
        %p947 = pneg %p143
        %p948 = scmp.lt.s32.totalorder %s50, 1
        %s949 = scalar_select %p948, %s50, 1
        %s950 = scalar_lea.vmem %s5, %s949
        %p951 = pneg %p172
        %p952 = pneg %p169
        %p953 = scmp.lt.s32.totalorder %s50, 1
        %s954 = scalar_select %p953, %s50, 1
        %s955 = scalar_lea.vmem %s6, %s954
        %p956 = pneg %p198
        %p957 = pneg %p195
        %p958 = scmp.lt.s32.totalorder %s50, 1
        %s959 = scalar_select %p958, %s50, 1
        %s960 = smul.addr %s959, 4
        %s961 = smul.addr %s960, 4
        %s962 = scalar_lea.vmem %s7, %s961
        %p963 = pneg %p224
        %p964 = pneg %p221
        %p965 = scmp.lt.s32.totalorder %s50, 1
        %s966 = scalar_select %p965, %s50, 1
        %s967 = scalar_lea.vmem %s8, %s966
        %p968 = pneg %p250
        %p969 = pneg %p247
        %p970 = scmp.lt.s32.totalorder %s50, 1
        %s971 = scalar_select %p970, %s50, 1
        %s972 = smul.addr %s971, 4
        %s973 = smul.addr %s972, 4
        %s974 = scalar_lea.vmem %s9, %s973
        %p975 = pneg %p276
        %p976 = pneg %p273
        %p977 = scmp.lt.s32.totalorder %s50, 1
        %s978 = scalar_select %p977, %s50, 1
        %s979 = scalar_lea.vmem %s10, %s978
        %p980 = pneg %p302
        %p981 = pneg %p299
        %p982 = scmp.lt.s32.totalorder %s50, 1
        %s983 = scalar_select %p982, %s50, 1
        %s984 = scalar_lea.vmem %s11, %s983
        %p985 = pneg %p328
        %p986 = pneg %p325
        %p987 = scmp.lt.s32.totalorder %s50, 1
        %s988 = scalar_select %p987, %s50, 1
        %s989 = scalar_lea.vmem %s12, %s988
        %p990 = pneg %p354
        %p991 = pneg %p351
        %p992 = scmp.lt.s32.totalorder %s50, 1
        %s993 = scalar_select %p992, %s50, 1
        %s994 = smul.addr %s993, 4
        %s995 = smul.addr %s994, 4
        %s996 = scalar_lea.vmem %s13, %s995
        %p997 = pneg %p380
        %p998 = pneg %p377
        %p999 = scmp.lt.s32.totalorder %s50, 1
        %s1000 = scalar_select %p999, %s50, 1
        %s1001 = scalar_lea.vmem %s14, %s1000
        %p1002 = pneg %p406
        %p1003 = pneg %p403
        %p1004 = scmp.lt.s32.totalorder %s50, 1
        %s1005 = scalar_select %p1004, %s50, 1
        %s1006 = smul.addr %s1005, 4
        %s1007 = smul.addr %s1006, 4
        %s1008 = scalar_lea.vmem %s15, %s1007
        %p1009 = pneg %p432
        %p1010 = pneg %p429
        %p1011 = scmp.lt.s32.totalorder %s50, 1
        %s1012 = scalar_select %p1011, %s50, 1
        %s1013 = scalar_lea.vmem %s16, %s1012
        %p1014 = pneg %p458
        %p1015 = pneg %p455
        %p1016 = scmp.lt.s32.totalorder %s50, 1
        %s1017 = scalar_select %p1016, %s50, 1
        %s1018 = smul.addr %s1017, 4
        %s1019 = smul.addr %s1018, 4
        %s1020 = scalar_lea.vmem %s17, %s1019
        %p1021 = pneg %p484
        %p1022 = pneg %p481
        %p1023 = scmp.lt.s32.totalorder %s50, 1
        %s1024 = scalar_select %p1023, %s50, 1
        %s1025 = scalar_lea.vmem %s18, %s1024
        %p1026 = pneg %p510
        %p1027 = pneg %p507
        %p1028 = scmp.lt.s32.totalorder %s50, 1
        %s1029 = scalar_select %p1028, %s50, 1
        %s1030 = scalar_lea.vmem %s19, %s1029
        %p1031 = pneg %p536
        %p1032 = pneg %p533
        %p1033 = scmp.lt.s32.totalorder %s50, 1
        %s1034 = scalar_select %p1033, %s50, 1
        %s1035 = scalar_lea.vmem %s20, %s1034
        %p1036 = pneg %p562
        %p1037 = pneg %p559
        %p1038 = scmp.lt.s32.totalorder %s50, 1
        %s1039 = scalar_select %p1038, %s50, 1
        %s1040 = smul.addr %s1039, 4
        %s1041 = smul.addr %s1040, 4
        %s1042 = scalar_lea.vmem %s21, %s1041
        %p1043 = pneg %p588
        %p1044 = pneg %p585
        %p1045 = scmp.lt.s32.totalorder %s50, 1
        %s1046 = scalar_select %p1045, %s50, 1
        %s1047 = scalar_lea.vmem %s22, %s1046
        %p1048 = pneg %p614
        %p1049 = pneg %p611
        %p1050 = scmp.lt.s32.totalorder %s50, 1
        %s1051 = scalar_select %p1050, %s50, 1
        %s1052 = smul.addr %s1051, 8
        %s1053 = smul.addr %s1052, 4
        %s1054 = scalar_lea.vmem %s23, %s1053
        %p1055 = pneg %p640
        %p1056 = pneg %p637
        %p1057 = scmp.lt.s32.totalorder %s50, 1
        %s1058 = scalar_select %p1057, %s50, 1
        %s1059 = scalar_lea.vmem %s24, %s1058
        %p1060 = pneg %p666
        %p1061 = pneg %p663
        %p1062 = pneg %p687
        %p1063 = pneg %p684
        %p1064 = pneg %p708
        %p1065 = pneg %p705
        %p1066 = pneg %p734
        %p1067 = pneg %p731
        %p1068 = scmp.lt.s32.totalorder %s49, 1
        %s1069 = scalar_select %p1068, %s49, 1
        %s1070 = smul.addr %s1069, 8
        %s1071 = scalar_lea.vmem %s27, %s1070
        %p1072 = scmp.lt.s32.totalorder %s49, 1
        %s1073 = scalar_select %p1072, %s49, 1
        %s1074 = smul.addr %s1073, 8
        %s1075 = scalar_lea.vmem %s1, %s1074
        %p1076 = scmp.lt.s32.totalorder %s49, 1
        %s1077 = scalar_select %p1076, %s49, 1
        %s1078 = smul.addr %s1077, 8
        %s1079 = scalar_lea.vmem %s2, %s1078
        %p1080 = scmp.lt.s32.totalorder %s50, 1
        %s1081 = scalar_select %p1080, %s50, 1
        %s1082 = scalar_lea.vmem %s5, %s1081
        %p1083 = scmp.lt.s32.totalorder %s50, 1
        %s1084 = scalar_select %p1083, %s50, 1
        %s1085 = scalar_lea.vmem %s6, %s1084
        %p1086 = scmp.lt.s32.totalorder %s50, 1
        %s1087 = scalar_select %p1086, %s50, 1
        %s1088 = smul.addr %s1087, 4
        %s1089 = smul.addr %s1088, 4
        %s1090 = scalar_lea.vmem %s7, %s1089
        %p1091 = scmp.lt.s32.totalorder %s50, 1
        %s1092 = scalar_select %p1091, %s50, 1
        %s1093 = scalar_lea.vmem %s8, %s1092
        %p1094 = scmp.lt.s32.totalorder %s50, 1
        %s1095 = scalar_select %p1094, %s50, 1
        %s1096 = smul.addr %s1095, 4
        %s1097 = smul.addr %s1096, 4
        %s1098 = scalar_lea.vmem %s9, %s1097
        %p1099 = scmp.lt.s32.totalorder %s50, 1
        %s1100 = scalar_select %p1099, %s50, 1
        %s1101 = scalar_lea.vmem %s10, %s1100
        %p1102 = scmp.lt.s32.totalorder %s50, 1
        %s1103 = scalar_select %p1102, %s50, 1
        %s1104 = scalar_lea.vmem %s11, %s1103
        %p1105 = scmp.lt.s32.totalorder %s50, 1
        %s1106 = scalar_select %p1105, %s50, 1
        %s1107 = scalar_lea.vmem %s12, %s1106
        %p1108 = scmp.lt.s32.totalorder %s50, 1
        %s1109 = scalar_select %p1108, %s50, 1
        %s1110 = smul.addr %s1109, 4
        %s1111 = smul.addr %s1110, 4
        %s1112 = scalar_lea.vmem %s13, %s1111
        %p1113 = scmp.lt.s32.totalorder %s50, 1
        %s1114 = scalar_select %p1113, %s50, 1
        %s1115 = scalar_lea.vmem %s14, %s1114
        %p1116 = scmp.lt.s32.totalorder %s50, 1
        %s1117 = scalar_select %p1116, %s50, 1
        %s1118 = smul.addr %s1117, 4
        %s1119 = smul.addr %s1118, 4
        %s1120 = scalar_lea.vmem %s15, %s1119
        %p1121 = scmp.lt.s32.totalorder %s50, 1
        %s1122 = scalar_select %p1121, %s50, 1
        %s1123 = scalar_lea.vmem %s16, %s1122
        %p1124 = scmp.lt.s32.totalorder %s50, 1
        %s1125 = scalar_select %p1124, %s50, 1
        %s1126 = smul.addr %s1125, 4
        %s1127 = smul.addr %s1126, 4
        %s1128 = scalar_lea.vmem %s17, %s1127
        %p1129 = scmp.lt.s32.totalorder %s50, 1
        %s1130 = scalar_select %p1129, %s50, 1
        %s1131 = scalar_lea.vmem %s18, %s1130
        %p1132 = scmp.lt.s32.totalorder %s50, 1
        %s1133 = scalar_select %p1132, %s50, 1
        %s1134 = scalar_lea.vmem %s19, %s1133
        %p1135 = scmp.lt.s32.totalorder %s50, 1
        %s1136 = scalar_select %p1135, %s50, 1
        %s1137 = scalar_lea.vmem %s20, %s1136
        %p1138 = scmp.lt.s32.totalorder %s50, 1
        %s1139 = scalar_select %p1138, %s50, 1
        %s1140 = smul.addr %s1139, 4
        %s1141 = smul.addr %s1140, 4
        %s1142 = scalar_lea.vmem %s21, %s1141
        %p1143 = scmp.lt.s32.totalorder %s50, 1
        %s1144 = scalar_select %p1143, %s50, 1
        %s1145 = scalar_lea.vmem %s22, %s1144
        %p1146 = scmp.lt.s32.totalorder %s50, 1
        %s1147 = scalar_select %p1146, %s50, 1
        %s1148 = smul.addr %s1147, 8
        %s1149 = smul.addr %s1148, 4
        %s1150 = scalar_lea.vmem %s23, %s1149
        %p1151 = scmp.lt.s32.totalorder %s50, 1
        %s1152 = scalar_select %p1151, %s50, 1
        %s1153 = scalar_lea.vmem %s24, %s1152
        %p1154 = scmp.lt.s32.totalorder %s49, 1
        %s1155 = scalar_select %p1154, %s49, 1
        %s1156 = smul.addr %s1155, 8
        %s1157 = scalar_lea.vmem %s27, %s1156
        %p1159 = scmp.eq.s32.totalorder %s50, 0
        // Predicated region
        $region129: #{_lambda_.3} parent=123 // pred_check
          %p1160 = pneg %p1159
        $region130: #{_lambda_.3} parent=123 // pred_check_branch
          %1162 = sbr.rel (%p1160) target = $region132
        $region131: #{_lambda_.3} parent=123 // pred_region
          %v1163 = vld [vmem:[%s1075] sm:$0xff]
          %v1164 = vld [vmem:[%s3] sm:$0x1]
          %v1165 = vld [vmem:[%s4] sm:$0x1]
          %vm1166 = vcmask 261120
          %v1167 = vsel %vm1166, %v1163, 0.0
          %1168 = vadd.xlane.f32.xlu0 %v1167
          %v1169 = vpop.xlane.xlu0 %1168
          %v1170 = vrcp.pop 32.0
          %v1171 = vmul.f32 %v1169, %v1170
          %v1172 = vsub.f32 %v1163, %v1171
          %v1173 = vmul.f32 %v1172, %v1172
          %v1174 = vsel %vm1166, %v1173, 0.0
          %1175 = vadd.xlane.f32.xlu0 %v1174
          %v1176 = vpop.xlane.xlu0 %1175
          %v1177 = vmul.f32 %v1176, %v1170
          %v1178 = vadd.f32 %v1177, 1e-05
          %v1179 = vrsqrt.pop %v1178
          %v1180 = vmul.f32 %v1172, %v1179
          %v1182 = vlaneseq
          %v1183 = vshrl.u32 %v1182, 7
          %v1184 = vsub.s32 0, %v1183
          %v1185 = vrot.slane %v1164, %v1184
          %v1187 = vmul.f32 %v1180, %v1185
          %v1189 = vlaneseq
          %v1190 = vshrl.u32 %v1189, 7
          %v1191 = vsub.s32 0, %v1190
          %v1192 = vrot.slane %v1165, %v1191
          %v1194 = vadd.f32 %v1187, %v1192
          %1195 = vst.msk [vmem:[#allocation2] sm:$0xff] %vm1166, %v1194
        $region132: #{_lambda_.3} parent=123 // pred_fallthru
          _
        %v1196 = vlaneseq
        %v1197 = vshrl.u32 %v1196, 7
        %v1198 = vlaneseq
        %v1199 = vand.u32 %v1198, 127
        %vm1200 = vcmp.le.s32.totalorder %v1199, %v1197
        %v1201 = vsel %vm1200, 0.0, -1e+09
        %s1202 = sld [smem:[#allocation5 + %s49]]
        %v1203 = vstv %s1202
        %vm1204 = vcmp.lt.s32.totalorder %v1199, %v1203
        %v1205 = vsel %vm1204, 0.0, -1e+09
        %v1206 = vld [vmem:[%s1079] sm:$0xff]
        %v1207 = vld [vmem:[#allocation2] sm:$0xff]
        %v1208 = vld [vmem:[%s1082] sm:$0x1]
        %v1209 = vld [vmem:[%s1085] sm:$0x1]
        %vm1210 = vcmask 261120
        %v1211 = vsel %vm1210, %v1207, 0.0
        %1212 = vadd.xlane.f32.xlu0 %v1211
        %v1213 = vpop.xlane.xlu0 %1212
        %v1214 = vrcp.pop 32.0
        %v1215 = vmul.f32 %v1213, %v1214
        %v1216 = vsub.f32 %v1207, %v1215
        %v1217 = vmul.f32 %v1216, %v1216
        %v1218 = vsel %vm1210, %v1217, 0.0
        %1219 = vadd.xlane.f32.xlu0 %v1218
        %v1220 = vpop.xlane.xlu0 %1219
        %v1221 = vmul.f32 %v1220, %v1214
        %v1222 = vadd.f32 %v1221, 1e-05
        %v1223 = vrsqrt.pop %v1222
        %v1224 = vmul.f32 %v1216, %v1223
        %v1226 = vlaneseq
        %v1227 = vshrl.u32 %v1226, 7
        %v1228 = vsub.s32 0, %v1227
        %v1229 = vrot.slane %v1208, %v1228
        %v1231 = vmul.f32 %v1224, %v1229
        %v1233 = vlaneseq
        %v1234 = vshrl.u32 %v1233, 7
        %v1235 = vsub.s32 0, %v1234
        %v1236 = vrot.slane %v1209, %v1235
        %v1238 = vadd.f32 %v1231, %v1236
        %v1239 = vpack.c.bf16 %v1238, %v1238
        %v1240 = vld [vmem:[%s1090] sm:$0xf]
        %v1241 = vld [vmem:[%s1090 + $0x4] sm:$0xf]
        %v1242 = vld [vmem:[%s1090 + $0x8] sm:$0xf]
        %v1243 = vld [vmem:[%s1090 + $0xc] sm:$0xf]
        %v1244 = vld [vmem:[%s1093] sm:$0x1]
        %v1246 = vlaneseq
        %v1247 = vshrl.u32 %v1246, 7
        %v1248 = vsub.s32 0, %v1247
        %v1249 = vrot.slane %v1244, %v1248
        %v1255 = vunpack.c.l.b16 %v1240
        %v1256 = vunpack.c.l.b16 %v1241
        %v1257 = vunpack.c.l.b16 %v1242
        %v1258 = vunpack.c.l.b16 %v1243
        %v1259 = vpack.c.b16 %v1256, %v1255
        %v1260 = vpack.c.b16 %v1258, %v1257
        %v1264 = vsel %vm1210, %v1239, 0
        %1266 = vmatprep.subr.bf16.mxu0 0
        %1267 = vmatpush1.bf16.msra.mxu0 %v1259
        %1268 = vmatprep.subr.bf16.mxu0 0
        %1269 = vmatpush1.bf16.msra.mxu0 %v1260
        %1270 = vmatprep.subr.bf16.mxu0 0
        %1271 = vmatpush1.bf16.msra.mxu0 0
        %1272 = vmatprep.subr.bf16.mxu0 0
        %1273 = vmatpush1.bf16.msra.mxu0 0
        %1274 = vmatprep.subr.bf16.mxu0 0
        %1275 = vmatpush1.bf16.msra.mxu0 0
        %1276 = vmatprep.subr.bf16.mxu0 0
        %1277 = vmatpush1.bf16.msra.mxu0 0
        %1278 = vmatprep.subr.bf16.mxu0 0
        %1279 = vmatpush1.bf16.msra.mxu0 0
        %1280 = vmatprep.subr.bf16.mxu0 0
        %1281 = vmatpush1.bf16.msra.mxu0 0
        %1282 = vmatprep.subr.bf16.mxu0 0
        %1283 = vmatpush1.bf16.msra.mxu0 0
        %1284 = vmatprep.subr.bf16.mxu0 0
        %1285 = vmatpush1.bf16.msra.mxu0 0
        %1286 = vmatprep.subr.bf16.mxu0 0
        %1287 = vmatpush1.bf16.msra.mxu0 0
        %1288 = vmatprep.subr.bf16.mxu0 0
        %1289 = vmatpush1.bf16.msra.mxu0 0
        %1290 = vmatprep.subr.bf16.mxu0 0
        %1291 = vmatpush1.bf16.msra.mxu0 0
        %1292 = vmatprep.subr.bf16.mxu0 0
        %1293 = vmatpush1.bf16.msra.mxu0 0
        %1294 = vmatprep.subr.bf16.mxu0 0
        %1295 = vmatpush1.bf16.msra.mxu0 0
        %1296 = vmatprep.subr.bf16.mxu0 0
        %1297 = vmatpush1.bf16.msra.mxu0 0
        %1298 = vmatprep.mubr.bf16.mxu0 0
        %1299 = vmatmul.mubr.bf16.gmra.mrb[0].mxu0 %v1264
        %v1300 = vpop.f32.mrb[0].mxu0
        %v1301 = vadd.f32 %v1249, %v1300
        %v1302 = vpop.f32.mrb[0].mxu0
        %v1303 = vpop.f32.mrb[0].mxu0
        %v1304 = vpop.f32.mrb[0].mxu0
        %1305 = vdwg.mxu0
        %v1306 = vld [vmem:[%s1098] sm:$0xf]
        %v1307 = vld [vmem:[%s1098 + $0x4] sm:$0xf]
        %v1308 = vld [vmem:[%s1098 + $0x8] sm:$0xf]
        %v1309 = vld [vmem:[%s1098 + $0xc] sm:$0xf]
        %v1310 = vld [vmem:[%s1101] sm:$0x1]
        %v1311 = vmul.f32 %v1301, 0.35355338
        %v1312 = vpack.c.bf16 %v1311, %v1311
        %v1313 = vpack.c.bf16 %v1301, %v1301
        %1315 = vrot.lane.b32.xlu0 %v1313, 96
        %v1316 = vpop.permute.xlu0 %1315
        %vm1317 = vcmask 64512
        %v1319 = vsel %vm1317, %v1312, 0
        %v1322 = vsel %vm1317, %v1316, 0
        %1324 = vmatprep.subr.bf16.mxu0 0
        %1325 = vmatpush1.bf16.xpose.msra.mxu0 %v1322
        %1326 = vmatprep.subr.bf16.mxu0 0
        %1327 = vmatpush1.bf16.xpose.msra.mxu0 0
        %1328 = vmatprep.subr.bf16.mxu0 0
        %1329 = vmatpush1.bf16.xpose.msra.mxu0 0
        %1330 = vmatprep.subr.bf16.mxu0 0
        %1331 = vmatpush1.bf16.xpose.msra.mxu0 0
        %1332 = vmatprep.subr.bf16.mxu0 0
        %1333 = vmatpush1.bf16.xpose.msra.mxu0 0
        %1334 = vmatprep.subr.bf16.mxu0 0
        %1335 = vmatpush1.bf16.xpose.msra.mxu0 0
        %1336 = vmatprep.subr.bf16.mxu0 0
        %1337 = vmatpush1.bf16.xpose.msra.mxu0 0
        %1338 = vmatprep.subr.bf16.mxu0 0
        %1339 = vmatpush1.bf16.xpose.msra.mxu0 0
        %1340 = vmatprep.subr.bf16.mxu0 0
        %1341 = vmatpush1.bf16.xpose.msra.mxu0 0
        %1342 = vmatprep.subr.bf16.mxu0 0
        %1343 = vmatpush1.bf16.xpose.msra.mxu0 0
        %1344 = vmatprep.subr.bf16.mxu0 0
        %1345 = vmatpush1.bf16.xpose.msra.mxu0 0
        %1346 = vmatprep.subr.bf16.mxu0 0
        %1347 = vmatpush1.bf16.xpose.msra.mxu0 0
        %1348 = vmatprep.subr.bf16.mxu0 0
        %1349 = vmatpush1.bf16.xpose.msra.mxu0 0
        %1350 = vmatprep.subr.bf16.mxu0 0
        %1351 = vmatpush1.bf16.xpose.msra.mxu0 0
        %1352 = vmatprep.subr.bf16.mxu0 0
        %1353 = vmatpush1.bf16.xpose.msra.mxu0 0
        %1354 = vmatprep.subr.bf16.mxu0 0
        %1355 = vmatpush1.bf16.xpose.msra.mxu0 0
        %1356 = vmatprep.mubr.bf16.mxu0 0
        %1357 = vmatmul.mubr.bf16.gmra.mrb[0].mxu0 %v1319
        %v1358 = vpop.f32.mrb[0].mxu0
        %v1359 = vadd.f32 %v1201, %v1358
        %v1360 = vpop.f32.mrb[0].mxu0
        %v1361 = vpop.f32.mrb[0].mxu0
        %v1362 = vpop.f32.mrb[0].mxu0
        %1363 = vdwg.mxu0
        %v1364 = vsel %vm1317, %v1359, -inf
        %1365 = vmax.xlane.f32.xlu0 %v1364
        %v1366 = vpop.xlane.xlu0 %1365
        %v1367 = vsub.f32 %v1359, %v1366
        %v1368 = vmul.f32 %v1367, 1.442695
        %v1369 = vpow.pop %v1368
        %v1370 = vsel %vm1317, %v1369, 0.0
        %1371 = vadd.xlane.f32.xlu0 %v1370
        %v1372 = vpop.xlane.xlu0 %1371
        %v1373 = vrcp.pop %v1372
        %v1374 = vmul.f32 %v1369, %v1373
        %v1375 = vpack.c.bf16 %v1374, %v1374
        %1376 = vrot.lane.b32.xlu0 %v1313, 64
        %v1377 = vpop.permute.xlu0 %1376
        %v1379 = vsel %vm1317, %v1375, 0
        %vm1381 = vcmask 1043456
        %v1383 = vsel %vm1381, %v1377, 0
        %1385 = vmatprep.subr.bf16.mxu0 0
        %1386 = vmatpush1.bf16.msra.mxu0 %v1383
        %1387 = vmatprep.subr.bf16.mxu0 0
        %1388 = vmatpush1.bf16.msra.mxu0 0
        %1389 = vmatprep.subr.bf16.mxu0 0
        %1390 = vmatpush1.bf16.msra.mxu0 0
        %1391 = vmatprep.subr.bf16.mxu0 0
        %1392 = vmatpush1.bf16.msra.mxu0 0
        %1393 = vmatprep.subr.bf16.mxu0 0
        %1394 = vmatpush1.bf16.msra.mxu0 0
        %1395 = vmatprep.subr.bf16.mxu0 0
        %1396 = vmatpush1.bf16.msra.mxu0 0
        %1397 = vmatprep.subr.bf16.mxu0 0
        %1398 = vmatpush1.bf16.msra.mxu0 0
        %1399 = vmatprep.subr.bf16.mxu0 0
        %1400 = vmatpush1.bf16.msra.mxu0 0
        %1401 = vmatprep.subr.bf16.mxu0 0
        %1402 = vmatpush1.bf16.msra.mxu0 0
        %1403 = vmatprep.subr.bf16.mxu0 0
        %1404 = vmatpush1.bf16.msra.mxu0 0
        %1405 = vmatprep.subr.bf16.mxu0 0
        %1406 = vmatpush1.bf16.msra.mxu0 0
        %1407 = vmatprep.subr.bf16.mxu0 0
        %1408 = vmatpush1.bf16.msra.mxu0 0
        %1409 = vmatprep.subr.bf16.mxu0 0
        %1410 = vmatpush1.bf16.msra.mxu0 0
        %1411 = vmatprep.subr.bf16.mxu0 0
        %1412 = vmatpush1.bf16.msra.mxu0 0
        %1413 = vmatprep.subr.bf16.mxu0 0
        %1414 = vmatpush1.bf16.msra.mxu0 0
        %1415 = vmatprep.subr.bf16.mxu0 0
        %1416 = vmatpush1.bf16.msra.mxu0 0
        %1417 = vmatprep.mubr.bf16.mxu0 0
        %1418 = vmatmul.mubr.bf16.gmra.mrb[0].mxu0 %v1379
        %v1419 = vpop.f32.mrb[0].mxu0
        %v1420 = vadd.f32 0.0, %v1419
        %v1421 = vpop.f32.mrb[0].mxu0
        %v1422 = vpop.f32.mrb[0].mxu0
        %v1423 = vpop.f32.mrb[0].mxu0
        %1424 = vdwg.mxu0
        %1425 = vst.msk [vmem:[#allocation3] sm:$0xff] %vm1317, %v1420
        %1427 = vrot.lane.b32.xlu0 %v1312, 120
        %v1428 = vpop.permute.xlu0 %1427
        %1429 = vrot.lane.b32.xlu0 %v1313, 88
        %v1430 = vpop.permute.xlu0 %1429
        %v1432 = vsel %vm1317, %v1428, 0
        %v1435 = vsel %vm1317, %v1430, 0
        %1437 = vmatprep.subr.bf16.mxu0 0
        %1438 = vmatpush1.bf16.xpose.msra.mxu0 %v1435
        %1439 = vmatprep.subr.bf16.mxu0 0
        %1440 = vmatpush1.bf16.xpose.msra.mxu0 0
        %1441 = vmatprep.subr.bf16.mxu0 0
        %1442 = vmatpush1.bf16.xpose.msra.mxu0 0
        %1443 = vmatprep.subr.bf16.mxu0 0
        %1444 = vmatpush1.bf16.xpose.msra.mxu0 0
        %1445 = vmatprep.subr.bf16.mxu0 0
        %1446 = vmatpush1.bf16.xpose.msra.mxu0 0
        %1447 = vmatprep.subr.bf16.mxu0 0
        %1448 = vmatpush1.bf16.xpose.msra.mxu0 0
        %1449 = vmatprep.subr.bf16.mxu0 0
        %1450 = vmatpush1.bf16.xpose.msra.mxu0 0
        %1451 = vmatprep.subr.bf16.mxu0 0
        %1452 = vmatpush1.bf16.xpose.msra.mxu0 0
        %1453 = vmatprep.subr.bf16.mxu0 0
        %1454 = vmatpush1.bf16.xpose.msra.mxu0 0
        %1455 = vmatprep.subr.bf16.mxu0 0
        %1456 = vmatpush1.bf16.xpose.msra.mxu0 0
        %1457 = vmatprep.subr.bf16.mxu0 0
        %1458 = vmatpush1.bf16.xpose.msra.mxu0 0
        %1459 = vmatprep.subr.bf16.mxu0 0
        %1460 = vmatpush1.bf16.xpose.msra.mxu0 0
        %1461 = vmatprep.subr.bf16.mxu0 0
        %1462 = vmatpush1.bf16.xpose.msra.mxu0 0
        %1463 = vmatprep.subr.bf16.mxu0 0
        %1464 = vmatpush1.bf16.xpose.msra.mxu0 0
        %1465 = vmatprep.subr.bf16.mxu0 0
        %1466 = vmatpush1.bf16.xpose.msra.mxu0 0
        %1467 = vmatprep.subr.bf16.mxu0 0
        %1468 = vmatpush1.bf16.xpose.msra.mxu0 0
        %1469 = vmatprep.mubr.bf16.mxu0 0
        %1470 = vmatmul.mubr.bf16.gmra.mrb[0].mxu0 %v1432
        %v1471 = vpop.f32.mrb[0].mxu0
        %v1472 = vadd.f32 %v1201, %v1471
        %v1473 = vpop.f32.mrb[0].mxu0
        %v1474 = vpop.f32.mrb[0].mxu0
        %v1475 = vpop.f32.mrb[0].mxu0
        %1476 = vdwg.mxu0
        %v1477 = vsel %vm1317, %v1472, -inf
        %1478 = vmax.xlane.f32.xlu0 %v1477
        %v1479 = vpop.xlane.xlu0 %1478
        %v1480 = vsub.f32 %v1472, %v1479
        %v1481 = vmul.f32 %v1480, 1.442695
        %v1482 = vpow.pop %v1481
        %v1483 = vsel %vm1317, %v1482, 0.0
        %1484 = vadd.xlane.f32.xlu0 %v1483
        %v1485 = vpop.xlane.xlu0 %1484
        %v1486 = vrcp.pop %v1485
        %v1487 = vmul.f32 %v1482, %v1486
        %v1488 = vpack.c.bf16 %v1487, %v1487
        %1489 = vrot.lane.b32.xlu0 %v1313, 56
        %v1490 = vpop.permute.xlu0 %1489
        %v1492 = vsel %vm1317, %v1488, 0
        %v1495 = vsel %vm1381, %v1490, 0
        %1497 = vmatprep.subr.bf16.mxu0 0
        %1498 = vmatpush1.bf16.msra.mxu0 %v1495
        %1499 = vmatprep.subr.bf16.mxu0 0
        %1500 = vmatpush1.bf16.msra.mxu0 0
        %1501 = vmatprep.subr.bf16.mxu0 0
        %1502 = vmatpush1.bf16.msra.mxu0 0
        %1503 = vmatprep.subr.bf16.mxu0 0
        %1504 = vmatpush1.bf16.msra.mxu0 0
        %1505 = vmatprep.subr.bf16.mxu0 0
        %1506 = vmatpush1.bf16.msra.mxu0 0
        %1507 = vmatprep.subr.bf16.mxu0 0
        %1508 = vmatpush1.bf16.msra.mxu0 0
        %1509 = vmatprep.subr.bf16.mxu0 0
        %1510 = vmatpush1.bf16.msra.mxu0 0
        %1511 = vmatprep.subr.bf16.mxu0 0
        %1512 = vmatpush1.bf16.msra.mxu0 0
        %1513 = vmatprep.subr.bf16.mxu0 0
        %1514 = vmatpush1.bf16.msra.mxu0 0
        %1515 = vmatprep.subr.bf16.mxu0 0
        %1516 = vmatpush1.bf16.msra.mxu0 0
        %1517 = vmatprep.subr.bf16.mxu0 0
        %1518 = vmatpush1.bf16.msra.mxu0 0
        %1519 = vmatprep.subr.bf16.mxu0 0
        %1520 = vmatpush1.bf16.msra.mxu0 0
        %1521 = vmatprep.subr.bf16.mxu0 0
        %1522 = vmatpush1.bf16.msra.mxu0 0
        %1523 = vmatprep.subr.bf16.mxu0 0
        %1524 = vmatpush1.bf16.msra.mxu0 0
        %1525 = vmatprep.subr.bf16.mxu0 0
        %1526 = vmatpush1.bf16.msra.mxu0 0
        %1527 = vmatprep.subr.bf16.mxu0 0
        %1528 = vmatpush1.bf16.msra.mxu0 0
        %1529 = vmatprep.mubr.bf16.mxu0 0
        %1530 = vmatmul.mubr.bf16.gmra.mrb[0].mxu0 %v1492
        %v1531 = vpop.f32.mrb[0].mxu0
        %v1532 = vadd.f32 0.0, %v1531
        %v1533 = vpop.f32.mrb[0].mxu0
        %v1534 = vpop.f32.mrb[0].mxu0
        %v1535 = vpop.f32.mrb[0].mxu0
        %1536 = vdwg.mxu0
        %1538 = vrot.lane.b32.xlu0 %v1532, 8
        %v1539 = vpop.permute.xlu0 %1538
        %vm1541 = vcmask 130112
        %1542 = vst.msk [vmem:[#allocation3] sm:$0xff] %vm1541, %v1539
        %1543 = vrot.lane.b32.xlu0 %v1312, 112
        %v1544 = vpop.permute.xlu0 %1543
        %1545 = vrot.lane.b32.xlu0 %v1313, 80
        %v1546 = vpop.permute.xlu0 %1545
        %v1548 = vsel %vm1317, %v1544, 0
        %v1551 = vsel %vm1317, %v1546, 0
        %1553 = vmatprep.subr.bf16.mxu0 0
        %1554 = vmatpush1.bf16.xpose.msra.mxu0 %v1551
        %1555 = vmatprep.subr.bf16.mxu0 0
        %1556 = vmatpush1.bf16.xpose.msra.mxu0 0
        %1557 = vmatprep.subr.bf16.mxu0 0
        %1558 = vmatpush1.bf16.xpose.msra.mxu0 0
        %1559 = vmatprep.subr.bf16.mxu0 0
        %1560 = vmatpush1.bf16.xpose.msra.mxu0 0
        %1561 = vmatprep.subr.bf16.mxu0 0
        %1562 = vmatpush1.bf16.xpose.msra.mxu0 0
        %1563 = vmatprep.subr.bf16.mxu0 0
        %1564 = vmatpush1.bf16.xpose.msra.mxu0 0
        %1565 = vmatprep.subr.bf16.mxu0 0
        %1566 = vmatpush1.bf16.xpose.msra.mxu0 0
        %1567 = vmatprep.subr.bf16.mxu0 0
        %1568 = vmatpush1.bf16.xpose.msra.mxu0 0
        %1569 = vmatprep.subr.bf16.mxu0 0
        %1570 = vmatpush1.bf16.xpose.msra.mxu0 0
        %1571 = vmatprep.subr.bf16.mxu0 0
        %1572 = vmatpush1.bf16.xpose.msra.mxu0 0
        %1573 = vmatprep.subr.bf16.mxu0 0
        %1574 = vmatpush1.bf16.xpose.msra.mxu0 0
        %1575 = vmatprep.subr.bf16.mxu0 0
        %1576 = vmatpush1.bf16.xpose.msra.mxu0 0
        %1577 = vmatprep.subr.bf16.mxu0 0
        %1578 = vmatpush1.bf16.xpose.msra.mxu0 0
        %1579 = vmatprep.subr.bf16.mxu0 0
        %1580 = vmatpush1.bf16.xpose.msra.mxu0 0
        %1581 = vmatprep.subr.bf16.mxu0 0
        %1582 = vmatpush1.bf16.xpose.msra.mxu0 0
        %1583 = vmatprep.subr.bf16.mxu0 0
        %1584 = vmatpush1.bf16.xpose.msra.mxu0 0
        %1585 = vmatprep.mubr.bf16.mxu0 0
        %1586 = vmatmul.mubr.bf16.gmra.mrb[0].mxu0 %v1548
        %v1587 = vpop.f32.mrb[0].mxu0
        %v1588 = vadd.f32 %v1201, %v1587
        %v1589 = vpop.f32.mrb[0].mxu0
        %v1590 = vpop.f32.mrb[0].mxu0
        %v1591 = vpop.f32.mrb[0].mxu0
        %1592 = vdwg.mxu0
        %v1593 = vsel %vm1317, %v1588, -inf
        %1594 = vmax.xlane.f32.xlu0 %v1593
        %v1595 = vpop.xlane.xlu0 %1594
        %v1596 = vsub.f32 %v1588, %v1595
        %v1597 = vmul.f32 %v1596, 1.442695
        %v1598 = vpow.pop %v1597
        %v1599 = vsel %vm1317, %v1598, 0.0
        %1600 = vadd.xlane.f32.xlu0 %v1599
        %v1601 = vpop.xlane.xlu0 %1600
        %v1602 = vrcp.pop %v1601
        %v1603 = vmul.f32 %v1598, %v1602
        %v1604 = vpack.c.bf16 %v1603, %v1603
        %1605 = vrot.lane.b32.xlu0 %v1313, 48
        %v1606 = vpop.permute.xlu0 %1605
        %v1608 = vsel %vm1317, %v1604, 0
        %v1611 = vsel %vm1381, %v1606, 0
        %1613 = vmatprep.subr.bf16.mxu0 0
        %1614 = vmatpush1.bf16.msra.mxu0 %v1611
        %1615 = vmatprep.subr.bf16.mxu0 0
        %1616 = vmatpush1.bf16.msra.mxu0 0
        %1617 = vmatprep.subr.bf16.mxu0 0
        %1618 = vmatpush1.bf16.msra.mxu0 0
        %1619 = vmatprep.subr.bf16.mxu0 0
        %1620 = vmatpush1.bf16.msra.mxu0 0
        %1621 = vmatprep.subr.bf16.mxu0 0
        %1622 = vmatpush1.bf16.msra.mxu0 0
        %1623 = vmatprep.subr.bf16.mxu0 0
        %1624 = vmatpush1.bf16.msra.mxu0 0
        %1625 = vmatprep.subr.bf16.mxu0 0
        %1626 = vmatpush1.bf16.msra.mxu0 0
        %1627 = vmatprep.subr.bf16.mxu0 0
        %1628 = vmatpush1.bf16.msra.mxu0 0
        %1629 = vmatprep.subr.bf16.mxu0 0
        %1630 = vmatpush1.bf16.msra.mxu0 0
        %1631 = vmatprep.subr.bf16.mxu0 0
        %1632 = vmatpush1.bf16.msra.mxu0 0
        %1633 = vmatprep.subr.bf16.mxu0 0
        %1634 = vmatpush1.bf16.msra.mxu0 0
        %1635 = vmatprep.subr.bf16.mxu0 0
        %1636 = vmatpush1.bf16.msra.mxu0 0
        %1637 = vmatprep.subr.bf16.mxu0 0
        %1638 = vmatpush1.bf16.msra.mxu0 0
        %1639 = vmatprep.subr.bf16.mxu0 0
        %1640 = vmatpush1.bf16.msra.mxu0 0
        %1641 = vmatprep.subr.bf16.mxu0 0
        %1642 = vmatpush1.bf16.msra.mxu0 0
        %1643 = vmatprep.subr.bf16.mxu0 0
        %1644 = vmatpush1.bf16.msra.mxu0 0
        %1645 = vmatprep.mubr.bf16.mxu0 0
        %1646 = vmatmul.mubr.bf16.gmra.mrb[0].mxu0 %v1608
        %v1647 = vpop.f32.mrb[0].mxu0
        %v1648 = vadd.f32 0.0, %v1647
        %v1649 = vpop.f32.mrb[0].mxu0
        %v1650 = vpop.f32.mrb[0].mxu0
        %v1651 = vpop.f32.mrb[0].mxu0
        %1652 = vdwg.mxu0
        %1654 = vrot.lane.b32.xlu0 %v1648, 16
        %v1655 = vpop.permute.xlu0 %1654
        %vm1657 = vcmask 195712
        %1658 = vst.msk [vmem:[#allocation3] sm:$0xff] %vm1657, %v1655
        %1659 = vrot.lane.b32.xlu0 %v1312, 104
        %v1660 = vpop.permute.xlu0 %1659
        %1661 = vrot.lane.b32.xlu0 %v1313, 72
        %v1662 = vpop.permute.xlu0 %1661
        %v1664 = vsel %vm1317, %v1660, 0
        %v1667 = vsel %vm1317, %v1662, 0
        %1669 = vmatprep.subr.bf16.mxu0 0
        %1670 = vmatpush1.bf16.xpose.msra.mxu0 %v1667
        %1671 = vmatprep.subr.bf16.mxu0 0
        %1672 = vmatpush1.bf16.xpose.msra.mxu0 0
        %1673 = vmatprep.subr.bf16.mxu0 0
        %1674 = vmatpush1.bf16.xpose.msra.mxu0 0
        %1675 = vmatprep.subr.bf16.mxu0 0
        %1676 = vmatpush1.bf16.xpose.msra.mxu0 0
        %1677 = vmatprep.subr.bf16.mxu0 0
        %1678 = vmatpush1.bf16.xpose.msra.mxu0 0
        %1679 = vmatprep.subr.bf16.mxu0 0
        %1680 = vmatpush1.bf16.xpose.msra.mxu0 0
        %1681 = vmatprep.subr.bf16.mxu0 0
        %1682 = vmatpush1.bf16.xpose.msra.mxu0 0
        %1683 = vmatprep.subr.bf16.mxu0 0
        %1684 = vmatpush1.bf16.xpose.msra.mxu0 0
        %1685 = vmatprep.subr.bf16.mxu0 0
        %1686 = vmatpush1.bf16.xpose.msra.mxu0 0
        %1687 = vmatprep.subr.bf16.mxu0 0
        %1688 = vmatpush1.bf16.xpose.msra.mxu0 0
        %1689 = vmatprep.subr.bf16.mxu0 0
        %1690 = vmatpush1.bf16.xpose.msra.mxu0 0
        %1691 = vmatprep.subr.bf16.mxu0 0
        %1692 = vmatpush1.bf16.xpose.msra.mxu0 0
        %1693 = vmatprep.subr.bf16.mxu0 0
        %1694 = vmatpush1.bf16.xpose.msra.mxu0 0
        %1695 = vmatprep.subr.bf16.mxu0 0
        %1696 = vmatpush1.bf16.xpose.msra.mxu0 0
        %1697 = vmatprep.subr.bf16.mxu0 0
        %1698 = vmatpush1.bf16.xpose.msra.mxu0 0
        %1699 = vmatprep.subr.bf16.mxu0 0
        %1700 = vmatpush1.bf16.xpose.msra.mxu0 0
        %1701 = vmatprep.mubr.bf16.mxu0 0
        %1702 = vmatmul.mubr.bf16.gmra.mrb[0].mxu0 %v1664
        %v1703 = vpop.f32.mrb[0].mxu0
        %v1704 = vadd.f32 %v1201, %v1703
        %v1705 = vpop.f32.mrb[0].mxu0
        %v1706 = vpop.f32.mrb[0].mxu0
        %v1707 = vpop.f32.mrb[0].mxu0
        %1708 = vdwg.mxu0
        %v1709 = vsel %vm1317, %v1704, -inf
        %1710 = vmax.xlane.f32.xlu0 %v1709
        %v1711 = vpop.xlane.xlu0 %1710
        %v1712 = vsub.f32 %v1704, %v1711
        %v1713 = vmul.f32 %v1712, 1.442695
        %v1714 = vpow.pop %v1713
        %v1715 = vsel %vm1317, %v1714, 0.0
        %1716 = vadd.xlane.f32.xlu0 %v1715
        %v1717 = vpop.xlane.xlu0 %1716
        %v1718 = vrcp.pop %v1717
        %v1719 = vmul.f32 %v1714, %v1718
        %v1720 = vpack.c.bf16 %v1719, %v1719
        %1721 = vrot.lane.b32.xlu0 %v1313, 40
        %v1722 = vpop.permute.xlu0 %1721
        %v1724 = vsel %vm1317, %v1720, 0
        %v1727 = vsel %vm1381, %v1722, 0
        %1729 = vmatprep.subr.bf16.mxu0 0
        %1730 = vmatpush1.bf16.msra.mxu0 %v1727
        %1731 = vmatprep.subr.bf16.mxu0 0
        %1732 = vmatpush1.bf16.msra.mxu0 0
        %1733 = vmatprep.subr.bf16.mxu0 0
        %1734 = vmatpush1.bf16.msra.mxu0 0
        %1735 = vmatprep.subr.bf16.mxu0 0
        %1736 = vmatpush1.bf16.msra.mxu0 0
        %1737 = vmatprep.subr.bf16.mxu0 0
        %1738 = vmatpush1.bf16.msra.mxu0 0
        %1739 = vmatprep.subr.bf16.mxu0 0
        %1740 = vmatpush1.bf16.msra.mxu0 0
        %1741 = vmatprep.subr.bf16.mxu0 0
        %1742 = vmatpush1.bf16.msra.mxu0 0
        %1743 = vmatprep.subr.bf16.mxu0 0
        %1744 = vmatpush1.bf16.msra.mxu0 0
        %1745 = vmatprep.subr.bf16.mxu0 0
        %1746 = vmatpush1.bf16.msra.mxu0 0
        %1747 = vmatprep.subr.bf16.mxu0 0
        %1748 = vmatpush1.bf16.msra.mxu0 0
        %1749 = vmatprep.subr.bf16.mxu0 0
        %1750 = vmatpush1.bf16.msra.mxu0 0
        %1751 = vmatprep.subr.bf16.mxu0 0
        %1752 = vmatpush1.bf16.msra.mxu0 0
        %1753 = vmatprep.subr.bf16.mxu0 0
        %1754 = vmatpush1.bf16.msra.mxu0 0
        %1755 = vmatprep.subr.bf16.mxu0 0
        %1756 = vmatpush1.bf16.msra.mxu0 0
        %1757 = vmatprep.subr.bf16.mxu0 0
        %1758 = vmatpush1.bf16.msra.mxu0 0
        %1759 = vmatprep.subr.bf16.mxu0 0
        %1760 = vmatpush1.bf16.msra.mxu0 0
        %1761 = vmatprep.mubr.bf16.mxu0 0
        %1762 = vmatmul.mubr.bf16.gmra.mrb[0].mxu0 %v1724
        %v1763 = vpop.f32.mrb[0].mxu0
        %v1764 = vadd.f32 0.0, %v1763
        %v1765 = vpop.f32.mrb[0].mxu0
        %v1766 = vpop.f32.mrb[0].mxu0
        %v1767 = vpop.f32.mrb[0].mxu0
        %1768 = vdwg.mxu0
        %1770 = vrot.lane.b32.xlu0 %v1764, 24
        %v1771 = vpop.permute.xlu0 %1770
        %vm1773 = vcmask 261312
        %1774 = vst.msk [vmem:[#allocation3] sm:$0xff] %vm1773, %v1771
        %v1775 = vld [vmem:[#allocation3] sm:$0xff]
        %v1776 = vpack.c.bf16 %v1775, %v1775
        %v1778 = vlaneseq
        %v1779 = vshrl.u32 %v1778, 7
        %v1780 = vsub.s32 0, %v1779
        %v1781 = vrot.slane %v1310, %v1780
        %v1787 = vunpack.c.l.b16 %v1306
        %v1788 = vunpack.c.l.b16 %v1307
        %v1789 = vunpack.c.l.b16 %v1308
        %v1790 = vunpack.c.l.b16 %v1309
        %v1791 = vpack.c.b16 %v1788, %v1787
        %v1792 = vpack.c.b16 %v1790, %v1789
        %v1796 = vsel %vm1210, %v1776, 0
        %1798 = vmatprep.subr.bf16.mxu0 0
        %1799 = vmatpush1.bf16.msra.mxu0 %v1791
        %1800 = vmatprep.subr.bf16.mxu0 0
        %1801 = vmatpush1.bf16.msra.mxu0 %v1792
        %1802 = vmatprep.subr.bf16.mxu0 0
        %1803 = vmatpush1.bf16.msra.mxu0 0
        %1804 = vmatprep.subr.bf16.mxu0 0
        %1805 = vmatpush1.bf16.msra.mxu0 0
        %1806 = vmatprep.subr.bf16.mxu0 0
        %1807 = vmatpush1.bf16.msra.mxu0 0
        %1808 = vmatprep.subr.bf16.mxu0 0
        %1809 = vmatpush1.bf16.msra.mxu0 0
        %1810 = vmatprep.subr.bf16.mxu0 0
        %1811 = vmatpush1.bf16.msra.mxu0 0
        %1812 = vmatprep.subr.bf16.mxu0 0
        %1813 = vmatpush1.bf16.msra.mxu0 0
        %1814 = vmatprep.subr.bf16.mxu0 0
        %1815 = vmatpush1.bf16.msra.mxu0 0
        %1816 = vmatprep.subr.bf16.mxu0 0
        %1817 = vmatpush1.bf16.msra.mxu0 0
        %1818 = vmatprep.subr.bf16.mxu0 0
        %1819 = vmatpush1.bf16.msra.mxu0 0
        %1820 = vmatprep.subr.bf16.mxu0 0
        %1821 = vmatpush1.bf16.msra.mxu0 0
        %1822 = vmatprep.subr.bf16.mxu0 0
        %1823 = vmatpush1.bf16.msra.mxu0 0
        %1824 = vmatprep.subr.bf16.mxu0 0
        %1825 = vmatpush1.bf16.msra.mxu0 0
        %1826 = vmatprep.subr.bf16.mxu0 0
        %1827 = vmatpush1.bf16.msra.mxu0 0
        %1828 = vmatprep.subr.bf16.mxu0 0
        %1829 = vmatpush1.bf16.msra.mxu0 0
        %1830 = vmatprep.mubr.bf16.mxu0 0
        %1831 = vmatmul.mubr.bf16.gmra.mrb[0].mxu0 %v1796
        %v1832 = vpop.f32.mrb[0].mxu0
        %v1833 = vadd.f32 %v1781, %v1832
        %v1834 = vpop.f32.mrb[0].mxu0
        %v1835 = vpop.f32.mrb[0].mxu0
        %v1836 = vpop.f32.mrb[0].mxu0
        %1837 = vdwg.mxu0
        %v1838 = vadd.f32 %v1207, %v1833
        %v1839 = vld [vmem:[%s1104] sm:$0x1]
        %v1840 = vld [vmem:[%s1107] sm:$0x1]
        %v1841 = vsel %vm1210, %v1838, 0.0
        %1842 = vadd.xlane.f32.xlu0 %v1841
        %v1843 = vpop.xlane.xlu0 %1842
        %v1844 = vmul.f32 %v1843, %v1214
        %v1845 = vsub.f32 %v1838, %v1844
        %v1846 = vmul.f32 %v1845, %v1845
        %v1847 = vsel %vm1210, %v1846, 0.0
        %1848 = vadd.xlane.f32.xlu0 %v1847
        %v1849 = vpop.xlane.xlu0 %1848
        %v1850 = vmul.f32 %v1849, %v1214
        %v1851 = vadd.f32 %v1850, 1e-05
        %v1852 = vrsqrt.pop %v1851
        %v1853 = vmul.f32 %v1845, %v1852
        %v1855 = vlaneseq
        %v1856 = vshrl.u32 %v1855, 7
        %v1857 = vsub.s32 0, %v1856
        %v1858 = vrot.slane %v1839, %v1857
        %v1860 = vmul.f32 %v1853, %v1858
        %v1862 = vlaneseq
        %v1863 = vshrl.u32 %v1862, 7
        %v1864 = vsub.s32 0, %v1863
        %v1865 = vrot.slane %v1840, %v1864
        %v1867 = vadd.f32 %v1860, %v1865
        %v1868 = vpack.c.bf16 %v1867, %v1867
        %v1869 = vld [vmem:[%s1112] sm:$0xf]
        %v1870 = vld [vmem:[%s1112 + $0x4] sm:$0xf]
        %v1871 = vld [vmem:[%s1112 + $0x8] sm:$0xf]
        %v1872 = vld [vmem:[%s1112 + $0xc] sm:$0xf]
        %v1873 = vld [vmem:[%s1115] sm:$0x1]
        %v1875 = vlaneseq
        %v1876 = vshrl.u32 %v1875, 7
        %v1877 = vsub.s32 0, %v1876
        %v1878 = vrot.slane %v1873, %v1877
        %v1884 = vunpack.c.l.b16 %v1869
        %v1885 = vunpack.c.l.b16 %v1870
        %v1886 = vunpack.c.l.b16 %v1871
        %v1887 = vunpack.c.l.b16 %v1872
        %v1888 = vpack.c.b16 %v1885, %v1884
        %v1889 = vpack.c.b16 %v1887, %v1886
        %v1893 = vsel %vm1210, %v1868, 0
        %1895 = vmatprep.subr.bf16.mxu0 0
        %1896 = vmatpush1.bf16.msra.mxu0 %v1888
        %1897 = vmatprep.subr.bf16.mxu0 0
        %1898 = vmatpush1.bf16.msra.mxu0 %v1889
        %1899 = vmatprep.subr.bf16.mxu0 0
        %1900 = vmatpush1.bf16.msra.mxu0 0
        %1901 = vmatprep.subr.bf16.mxu0 0
        %1902 = vmatpush1.bf16.msra.mxu0 0
        %1903 = vmatprep.subr.bf16.mxu0 0
        %1904 = vmatpush1.bf16.msra.mxu0 0
        %1905 = vmatprep.subr.bf16.mxu0 0
        %1906 = vmatpush1.bf16.msra.mxu0 0
        %1907 = vmatprep.subr.bf16.mxu0 0
        %1908 = vmatpush1.bf16.msra.mxu0 0
        %1909 = vmatprep.subr.bf16.mxu0 0
        %1910 = vmatpush1.bf16.msra.mxu0 0
        %1911 = vmatprep.subr.bf16.mxu0 0
        %1912 = vmatpush1.bf16.msra.mxu0 0
        %1913 = vmatprep.subr.bf16.mxu0 0
        %1914 = vmatpush1.bf16.msra.mxu0 0
        %1915 = vmatprep.subr.bf16.mxu0 0
        %1916 = vmatpush1.bf16.msra.mxu0 0
        %1917 = vmatprep.subr.bf16.mxu0 0
        %1918 = vmatpush1.bf16.msra.mxu0 0
        %1919 = vmatprep.subr.bf16.mxu0 0
        %1920 = vmatpush1.bf16.msra.mxu0 0
        %1921 = vmatprep.subr.bf16.mxu0 0
        %1922 = vmatpush1.bf16.msra.mxu0 0
        %1923 = vmatprep.subr.bf16.mxu0 0
        %1924 = vmatpush1.bf16.msra.mxu0 0
        %1925 = vmatprep.subr.bf16.mxu0 0
        %1926 = vmatpush1.bf16.msra.mxu0 0
        %1927 = vmatprep.mubr.bf16.mxu0 0
        %1928 = vmatmul.mubr.bf16.gmra.mrb[0].mxu0 %v1893
        %v1929 = vpop.f32.mrb[0].mxu0
        %v1930 = vadd.f32 %v1878, %v1929
        %v1931 = vpop.f32.mrb[0].mxu0
        %v1932 = vpop.f32.mrb[0].mxu0
        %v1933 = vpop.f32.mrb[0].mxu0
        %1934 = vdwg.mxu0
        %v1935 = vpack.c.bf16 %v1206, %v1206
        %v1936 = vld [vmem:[%s1120] sm:$0xf]
        %v1937 = vld [vmem:[%s1120 + $0x4] sm:$0xf]
        %v1938 = vld [vmem:[%s1120 + $0x8] sm:$0xf]
        %v1939 = vld [vmem:[%s1120 + $0xc] sm:$0xf]
        %v1940 = vld [vmem:[%s1123] sm:$0x1]
        %v1942 = vlaneseq
        %v1943 = vshrl.u32 %v1942, 7
        %v1944 = vsub.s32 0, %v1943
        %v1945 = vrot.slane %v1940, %v1944
        %v1951 = vunpack.c.l.b16 %v1936
        %v1952 = vunpack.c.l.b16 %v1937
        %v1953 = vunpack.c.l.b16 %v1938
        %v1954 = vunpack.c.l.b16 %v1939
        %v1955 = vpack.c.b16 %v1952, %v1951
        %v1956 = vpack.c.b16 %v1954, %v1953
        %v1960 = vsel %vm1210, %v1935, 0
        %1962 = vmatprep.subr.bf16.mxu0 0
        %1963 = vmatpush1.bf16.msra.mxu0 %v1955
        %1964 = vmatprep.subr.bf16.mxu0 0
        %1965 = vmatpush1.bf16.msra.mxu0 %v1956
        %1966 = vmatprep.subr.bf16.mxu0 0
        %1967 = vmatpush1.bf16.msra.mxu0 0
        %1968 = vmatprep.subr.bf16.mxu0 0
        %1969 = vmatpush1.bf16.msra.mxu0 0
        %1970 = vmatprep.subr.bf16.mxu0 0
        %1971 = vmatpush1.bf16.msra.mxu0 0
        %1972 = vmatprep.subr.bf16.mxu0 0
        %1973 = vmatpush1.bf16.msra.mxu0 0
        %1974 = vmatprep.subr.bf16.mxu0 0
        %1975 = vmatpush1.bf16.msra.mxu0 0
        %1976 = vmatprep.subr.bf16.mxu0 0
        %1977 = vmatpush1.bf16.msra.mxu0 0
        %1978 = vmatprep.subr.bf16.mxu0 0
        %1979 = vmatpush1.bf16.msra.mxu0 0
        %1980 = vmatprep.subr.bf16.mxu0 0
        %1981 = vmatpush1.bf16.msra.mxu0 0
        %1982 = vmatprep.subr.bf16.mxu0 0
        %1983 = vmatpush1.bf16.msra.mxu0 0
        %1984 = vmatprep.subr.bf16.mxu0 0
        %1985 = vmatpush1.bf16.msra.mxu0 0
        %1986 = vmatprep.subr.bf16.mxu0 0
        %1987 = vmatpush1.bf16.msra.mxu0 0
        %1988 = vmatprep.subr.bf16.mxu0 0
        %1989 = vmatpush1.bf16.msra.mxu0 0
        %1990 = vmatprep.subr.bf16.mxu0 0
        %1991 = vmatpush1.bf16.msra.mxu0 0
        %1992 = vmatprep.subr.bf16.mxu0 0
        %1993 = vmatpush1.bf16.msra.mxu0 0
        %1994 = vmatprep.mubr.bf16.mxu0 0
        %1995 = vmatmul.mubr.bf16.gmra.mrb[0].mxu0 %v1960
        %v1996 = vpop.f32.mrb[0].mxu0
        %v1997 = vadd.f32 %v1945, %v1996
        %v1998 = vpop.f32.mrb[0].mxu0
        %v1999 = vpop.f32.mrb[0].mxu0
        %v2000 = vpop.f32.mrb[0].mxu0
        %2001 = vdwg.mxu0
        %v2002 = vld [vmem:[%s1128] sm:$0xf]
        %v2003 = vld [vmem:[%s1128 + $0x4] sm:$0xf]
        %v2004 = vld [vmem:[%s1128 + $0x8] sm:$0xf]
        %v2005 = vld [vmem:[%s1128 + $0xc] sm:$0xf]
        %v2006 = vld [vmem:[%s1131] sm:$0x1]
        %v2007 = vmul.f32 %v1930, 0.35355338
        %v2008 = vpack.c.bf16 %v2007, %v2007
        %v2009 = vpack.c.bf16 %v1997, %v1997
        %v2011 = vsel %vm1317, %v2008, 0
        %v2014 = vsel %vm1317, %v2009, 0
        %2016 = vmatprep.subr.bf16.mxu0 0
        %2017 = vmatpush1.bf16.xpose.msra.mxu0 %v2014
        %2018 = vmatprep.subr.bf16.mxu0 0
        %2019 = vmatpush1.bf16.xpose.msra.mxu0 0
        %2020 = vmatprep.subr.bf16.mxu0 0
        %2021 = vmatpush1.bf16.xpose.msra.mxu0 0
        %2022 = vmatprep.subr.bf16.mxu0 0
        %2023 = vmatpush1.bf16.xpose.msra.mxu0 0
        %2024 = vmatprep.subr.bf16.mxu0 0
        %2025 = vmatpush1.bf16.xpose.msra.mxu0 0
        %2026 = vmatprep.subr.bf16.mxu0 0
        %2027 = vmatpush1.bf16.xpose.msra.mxu0 0
        %2028 = vmatprep.subr.bf16.mxu0 0
        %2029 = vmatpush1.bf16.xpose.msra.mxu0 0
        %2030 = vmatprep.subr.bf16.mxu0 0
        %2031 = vmatpush1.bf16.xpose.msra.mxu0 0
        %2032 = vmatprep.subr.bf16.mxu0 0
        %2033 = vmatpush1.bf16.xpose.msra.mxu0 0
        %2034 = vmatprep.subr.bf16.mxu0 0
        %2035 = vmatpush1.bf16.xpose.msra.mxu0 0
        %2036 = vmatprep.subr.bf16.mxu0 0
        %2037 = vmatpush1.bf16.xpose.msra.mxu0 0
        %2038 = vmatprep.subr.bf16.mxu0 0
        %2039 = vmatpush1.bf16.xpose.msra.mxu0 0
        %2040 = vmatprep.subr.bf16.mxu0 0
        %2041 = vmatpush1.bf16.xpose.msra.mxu0 0
        %2042 = vmatprep.subr.bf16.mxu0 0
        %2043 = vmatpush1.bf16.xpose.msra.mxu0 0
        %2044 = vmatprep.subr.bf16.mxu0 0
        %2045 = vmatpush1.bf16.xpose.msra.mxu0 0
        %2046 = vmatprep.subr.bf16.mxu0 0
        %2047 = vmatpush1.bf16.xpose.msra.mxu0 0
        %2048 = vmatprep.mubr.bf16.mxu0 0
        %2049 = vmatmul.mubr.bf16.gmra.mrb[0].mxu0 %v2011
        %v2050 = vpop.f32.mrb[0].mxu0
        %v2051 = vadd.f32 %v1205, %v2050
        %v2052 = vpop.f32.mrb[0].mxu0
        %v2053 = vpop.f32.mrb[0].mxu0
        %v2054 = vpop.f32.mrb[0].mxu0
        %2055 = vdwg.mxu0
        %v2056 = vsel %vm1317, %v2051, -inf
        %2057 = vmax.xlane.f32.xlu0 %v2056
        %v2058 = vpop.xlane.xlu0 %2057
        %v2059 = vsub.f32 %v2051, %v2058
        %v2060 = vmul.f32 %v2059, 1.442695
        %v2061 = vpow.pop %v2060
        %v2062 = vsel %vm1317, %v2061, 0.0
        %2063 = vadd.xlane.f32.xlu0 %v2062
        %v2064 = vpop.xlane.xlu0 %2063
        %v2065 = vrcp.pop %v2064
        %v2066 = vmul.f32 %v2061, %v2065
        %v2067 = vpack.c.bf16 %v2066, %v2066
        %2069 = vrot.lane.b32.xlu0 %v2009, 96
        %v2070 = vpop.permute.xlu0 %2069
        %v2072 = vsel %vm1317, %v2067, 0
        %v2075 = vsel %vm1381, %v2070, 0
        %2077 = vmatprep.subr.bf16.mxu0 0
        %2078 = vmatpush1.bf16.msra.mxu0 %v2075
        %2079 = vmatprep.subr.bf16.mxu0 0
        %2080 = vmatpush1.bf16.msra.mxu0 0
        %2081 = vmatprep.subr.bf16.mxu0 0
        %2082 = vmatpush1.bf16.msra.mxu0 0
        %2083 = vmatprep.subr.bf16.mxu0 0
        %2084 = vmatpush1.bf16.msra.mxu0 0
        %2085 = vmatprep.subr.bf16.mxu0 0
        %2086 = vmatpush1.bf16.msra.mxu0 0
        %2087 = vmatprep.subr.bf16.mxu0 0
        %2088 = vmatpush1.bf16.msra.mxu0 0
        %2089 = vmatprep.subr.bf16.mxu0 0
        %2090 = vmatpush1.bf16.msra.mxu0 0
        %2091 = vmatprep.subr.bf16.mxu0 0
        %2092 = vmatpush1.bf16.msra.mxu0 0
        %2093 = vmatprep.subr.bf16.mxu0 0
        %2094 = vmatpush1.bf16.msra.mxu0 0
        %2095 = vmatprep.subr.bf16.mxu0 0
        %2096 = vmatpush1.bf16.msra.mxu0 0
        %2097 = vmatprep.subr.bf16.mxu0 0
        %2098 = vmatpush1.bf16.msra.mxu0 0
        %2099 = vmatprep.subr.bf16.mxu0 0
        %2100 = vmatpush1.bf16.msra.mxu0 0
        %2101 = vmatprep.subr.bf16.mxu0 0
        %2102 = vmatpush1.bf16.msra.mxu0 0
        %2103 = vmatprep.subr.bf16.mxu0 0
        %2104 = vmatpush1.bf16.msra.mxu0 0
        %2105 = vmatprep.subr.bf16.mxu0 0
        %2106 = vmatpush1.bf16.msra.mxu0 0
        %2107 = vmatprep.subr.bf16.mxu0 0
        %2108 = vmatpush1.bf16.msra.mxu0 0
        %2109 = vmatprep.mubr.bf16.mxu0 0
        %2110 = vmatmul.mubr.bf16.gmra.mrb[0].mxu0 %v2072
        %v2111 = vpop.f32.mrb[0].mxu0
        %v2112 = vadd.f32 0.0, %v2111
        %v2113 = vpop.f32.mrb[0].mxu0
        %v2114 = vpop.f32.mrb[0].mxu0
        %v2115 = vpop.f32.mrb[0].mxu0
        %2116 = vdwg.mxu0
        %2117 = vst.msk [vmem:[#allocation3] sm:$0xff] %vm1317, %v2112
        %2119 = vrot.lane.b32.xlu0 %v2008, 120
        %v2120 = vpop.permute.xlu0 %2119
        %2121 = vrot.lane.b32.xlu0 %v2009, 120
        %v2122 = vpop.permute.xlu0 %2121
        %v2124 = vsel %vm1317, %v2120, 0
        %v2127 = vsel %vm1317, %v2122, 0
        %2129 = vmatprep.subr.bf16.mxu0 0
        %2130 = vmatpush1.bf16.xpose.msra.mxu0 %v2127
        %2131 = vmatprep.subr.bf16.mxu0 0
        %2132 = vmatpush1.bf16.xpose.msra.mxu0 0
        %2133 = vmatprep.subr.bf16.mxu0 0
        %2134 = vmatpush1.bf16.xpose.msra.mxu0 0
        %2135 = vmatprep.subr.bf16.mxu0 0
        %2136 = vmatpush1.bf16.xpose.msra.mxu0 0
        %2137 = vmatprep.subr.bf16.mxu0 0
        %2138 = vmatpush1.bf16.xpose.msra.mxu0 0
        %2139 = vmatprep.subr.bf16.mxu0 0
        %2140 = vmatpush1.bf16.xpose.msra.mxu0 0
        %2141 = vmatprep.subr.bf16.mxu0 0
        %2142 = vmatpush1.bf16.xpose.msra.mxu0 0
        %2143 = vmatprep.subr.bf16.mxu0 0
        %2144 = vmatpush1.bf16.xpose.msra.mxu0 0
        %2145 = vmatprep.subr.bf16.mxu0 0
        %2146 = vmatpush1.bf16.xpose.msra.mxu0 0
        %2147 = vmatprep.subr.bf16.mxu0 0
        %2148 = vmatpush1.bf16.xpose.msra.mxu0 0
        %2149 = vmatprep.subr.bf16.mxu0 0
        %2150 = vmatpush1.bf16.xpose.msra.mxu0 0
        %2151 = vmatprep.subr.bf16.mxu0 0
        %2152 = vmatpush1.bf16.xpose.msra.mxu0 0
        %2153 = vmatprep.subr.bf16.mxu0 0
        %2154 = vmatpush1.bf16.xpose.msra.mxu0 0
        %2155 = vmatprep.subr.bf16.mxu0 0
        %2156 = vmatpush1.bf16.xpose.msra.mxu0 0
        %2157 = vmatprep.subr.bf16.mxu0 0
        %2158 = vmatpush1.bf16.xpose.msra.mxu0 0
        %2159 = vmatprep.subr.bf16.mxu0 0
        %2160 = vmatpush1.bf16.xpose.msra.mxu0 0
        %2161 = vmatprep.mubr.bf16.mxu0 0
        %2162 = vmatmul.mubr.bf16.gmra.mrb[0].mxu0 %v2124
        %v2163 = vpop.f32.mrb[0].mxu0
        %v2164 = vadd.f32 %v1205, %v2163
        %v2165 = vpop.f32.mrb[0].mxu0
        %v2166 = vpop.f32.mrb[0].mxu0
        %v2167 = vpop.f32.mrb[0].mxu0
        %2168 = vdwg.mxu0
        %v2169 = vsel %vm1317, %v2164, -inf
        %2170 = vmax.xlane.f32.xlu0 %v2169
        %v2171 = vpop.xlane.xlu0 %2170
        %v2172 = vsub.f32 %v2164, %v2171
        %v2173 = vmul.f32 %v2172, 1.442695
        %v2174 = vpow.pop %v2173
        %v2175 = vsel %vm1317, %v2174, 0.0
        %2176 = vadd.xlane.f32.xlu0 %v2175
        %v2177 = vpop.xlane.xlu0 %2176
        %v2178 = vrcp.pop %v2177
        %v2179 = vmul.f32 %v2174, %v2178
        %v2180 = vpack.c.bf16 %v2179, %v2179
        %2181 = vrot.lane.b32.xlu0 %v2009, 88
        %v2182 = vpop.permute.xlu0 %2181
        %v2184 = vsel %vm1317, %v2180, 0
        %v2187 = vsel %vm1381, %v2182, 0
        %2189 = vmatprep.subr.bf16.mxu0 0
        %2190 = vmatpush1.bf16.msra.mxu0 %v2187
        %2191 = vmatprep.subr.bf16.mxu0 0
        %2192 = vmatpush1.bf16.msra.mxu0 0
        %2193 = vmatprep.subr.bf16.mxu0 0
        %2194 = vmatpush1.bf16.msra.mxu0 0
        %2195 = vmatprep.subr.bf16.mxu0 0
        %2196 = vmatpush1.bf16.msra.mxu0 0
        %2197 = vmatprep.subr.bf16.mxu0 0
        %2198 = vmatpush1.bf16.msra.mxu0 0
        %2199 = vmatprep.subr.bf16.mxu0 0
        %2200 = vmatpush1.bf16.msra.mxu0 0
        %2201 = vmatprep.subr.bf16.mxu0 0
        %2202 = vmatpush1.bf16.msra.mxu0 0
        %2203 = vmatprep.subr.bf16.mxu0 0
        %2204 = vmatpush1.bf16.msra.mxu0 0
        %2205 = vmatprep.subr.bf16.mxu0 0
        %2206 = vmatpush1.bf16.msra.mxu0 0
        %2207 = vmatprep.subr.bf16.mxu0 0
        %2208 = vmatpush1.bf16.msra.mxu0 0
        %2209 = vmatprep.subr.bf16.mxu0 0
        %2210 = vmatpush1.bf16.msra.mxu0 0
        %2211 = vmatprep.subr.bf16.mxu0 0
        %2212 = vmatpush1.bf16.msra.mxu0 0
        %2213 = vmatprep.subr.bf16.mxu0 0
        %2214 = vmatpush1.bf16.msra.mxu0 0
        %2215 = vmatprep.subr.bf16.mxu0 0
        %2216 = vmatpush1.bf16.msra.mxu0 0
        %2217 = vmatprep.subr.bf16.mxu0 0
        %2218 = vmatpush1.bf16.msra.mxu0 0
        %2219 = vmatprep.subr.bf16.mxu0 0
        %2220 = vmatpush1.bf16.msra.mxu0 0
        %2221 = vmatprep.mubr.bf16.mxu0 0
        %2222 = vmatmul.mubr.bf16.gmra.mrb[0].mxu0 %v2184
        %v2223 = vpop.f32.mrb[0].mxu0
        %v2224 = vadd.f32 0.0, %v2223
        %v2225 = vpop.f32.mrb[0].mxu0
        %v2226 = vpop.f32.mrb[0].mxu0
        %v2227 = vpop.f32.mrb[0].mxu0
        %2228 = vdwg.mxu0
        %2230 = vrot.lane.b32.xlu0 %v2224, 8
        %v2231 = vpop.permute.xlu0 %2230
        %2233 = vst.msk [vmem:[#allocation3] sm:$0xff] %vm1541, %v2231
        %2234 = vrot.lane.b32.xlu0 %v2008, 112
        %v2235 = vpop.permute.xlu0 %2234
        %2236 = vrot.lane.b32.xlu0 %v2009, 112
        %v2237 = vpop.permute.xlu0 %2236
        %v2239 = vsel %vm1317, %v2235, 0
        %v2242 = vsel %vm1317, %v2237, 0
        %2244 = vmatprep.subr.bf16.mxu0 0
        %2245 = vmatpush1.bf16.xpose.msra.mxu0 %v2242
        %2246 = vmatprep.subr.bf16.mxu0 0
        %2247 = vmatpush1.bf16.xpose.msra.mxu0 0
        %2248 = vmatprep.subr.bf16.mxu0 0
        %2249 = vmatpush1.bf16.xpose.msra.mxu0 0
        %2250 = vmatprep.subr.bf16.mxu0 0
        %2251 = vmatpush1.bf16.xpose.msra.mxu0 0
        %2252 = vmatprep.subr.bf16.mxu0 0
        %2253 = vmatpush1.bf16.xpose.msra.mxu0 0
        %2254 = vmatprep.subr.bf16.mxu0 0
        %2255 = vmatpush1.bf16.xpose.msra.mxu0 0
        %2256 = vmatprep.subr.bf16.mxu0 0
        %2257 = vmatpush1.bf16.xpose.msra.mxu0 0
        %2258 = vmatprep.subr.bf16.mxu0 0
        %2259 = vmatpush1.bf16.xpose.msra.mxu0 0
        %2260 = vmatprep.subr.bf16.mxu0 0
        %2261 = vmatpush1.bf16.xpose.msra.mxu0 0
        %2262 = vmatprep.subr.bf16.mxu0 0
        %2263 = vmatpush1.bf16.xpose.msra.mxu0 0
        %2264 = vmatprep.subr.bf16.mxu0 0
        %2265 = vmatpush1.bf16.xpose.msra.mxu0 0
        %2266 = vmatprep.subr.bf16.mxu0 0
        %2267 = vmatpush1.bf16.xpose.msra.mxu0 0
        %2268 = vmatprep.subr.bf16.mxu0 0
        %2269 = vmatpush1.bf16.xpose.msra.mxu0 0
        %2270 = vmatprep.subr.bf16.mxu0 0
        %2271 = vmatpush1.bf16.xpose.msra.mxu0 0
        %2272 = vmatprep.subr.bf16.mxu0 0
        %2273 = vmatpush1.bf16.xpose.msra.mxu0 0
        %2274 = vmatprep.subr.bf16.mxu0 0
        %2275 = vmatpush1.bf16.xpose.msra.mxu0 0
        %2276 = vmatprep.mubr.bf16.mxu0 0
        %2277 = vmatmul.mubr.bf16.gmra.mrb[0].mxu0 %v2239
        %v2278 = vpop.f32.mrb[0].mxu0
        %v2279 = vadd.f32 %v1205, %v2278
        %v2280 = vpop.f32.mrb[0].mxu0
        %v2281 = vpop.f32.mrb[0].mxu0
        %v2282 = vpop.f32.mrb[0].mxu0
        %2283 = vdwg.mxu0
        %v2284 = vsel %vm1317, %v2279, -inf
        %2285 = vmax.xlane.f32.xlu0 %v2284
        %v2286 = vpop.xlane.xlu0 %2285
        %v2287 = vsub.f32 %v2279, %v2286
        %v2288 = vmul.f32 %v2287, 1.442695
        %v2289 = vpow.pop %v2288
        %v2290 = vsel %vm1317, %v2289, 0.0
        %2291 = vadd.xlane.f32.xlu0 %v2290
        %v2292 = vpop.xlane.xlu0 %2291
        %v2293 = vrcp.pop %v2292
        %v2294 = vmul.f32 %v2289, %v2293
        %v2295 = vpack.c.bf16 %v2294, %v2294
        %2296 = vrot.lane.b32.xlu0 %v2009, 80
        %v2297 = vpop.permute.xlu0 %2296
        %v2299 = vsel %vm1317, %v2295, 0
        %v2302 = vsel %vm1381, %v2297, 0
        %2304 = vmatprep.subr.bf16.mxu0 0
        %2305 = vmatpush1.bf16.msra.mxu0 %v2302
        %2306 = vmatprep.subr.bf16.mxu0 0
        %2307 = vmatpush1.bf16.msra.mxu0 0
        %2308 = vmatprep.subr.bf16.mxu0 0
        %2309 = vmatpush1.bf16.msra.mxu0 0
        %2310 = vmatprep.subr.bf16.mxu0 0
        %2311 = vmatpush1.bf16.msra.mxu0 0
        %2312 = vmatprep.subr.bf16.mxu0 0
        %2313 = vmatpush1.bf16.msra.mxu0 0
        %2314 = vmatprep.subr.bf16.mxu0 0
        %2315 = vmatpush1.bf16.msra.mxu0 0
        %2316 = vmatprep.subr.bf16.mxu0 0
        %2317 = vmatpush1.bf16.msra.mxu0 0
        %2318 = vmatprep.subr.bf16.mxu0 0
        %2319 = vmatpush1.bf16.msra.mxu0 0
        %2320 = vmatprep.subr.bf16.mxu0 0
        %2321 = vmatpush1.bf16.msra.mxu0 0
        %2322 = vmatprep.subr.bf16.mxu0 0
        %2323 = vmatpush1.bf16.msra.mxu0 0
        %2324 = vmatprep.subr.bf16.mxu0 0
        %2325 = vmatpush1.bf16.msra.mxu0 0
        %2326 = vmatprep.subr.bf16.mxu0 0
        %2327 = vmatpush1.bf16.msra.mxu0 0
        %2328 = vmatprep.subr.bf16.mxu0 0
        %2329 = vmatpush1.bf16.msra.mxu0 0
        %2330 = vmatprep.subr.bf16.mxu0 0
        %2331 = vmatpush1.bf16.msra.mxu0 0
        %2332 = vmatprep.subr.bf16.mxu0 0
        %2333 = vmatpush1.bf16.msra.mxu0 0
        %2334 = vmatprep.subr.bf16.mxu0 0
        %2335 = vmatpush1.bf16.msra.mxu0 0
        %2336 = vmatprep.mubr.bf16.mxu0 0
        %2337 = vmatmul.mubr.bf16.gmra.mrb[0].mxu0 %v2299
        %v2338 = vpop.f32.mrb[0].mxu0
        %v2339 = vadd.f32 0.0, %v2338
        %v2340 = vpop.f32.mrb[0].mxu0
        %v2341 = vpop.f32.mrb[0].mxu0
        %v2342 = vpop.f32.mrb[0].mxu0
        %2343 = vdwg.mxu0
        %2345 = vrot.lane.b32.xlu0 %v2339, 16
        %v2346 = vpop.permute.xlu0 %2345
        %2348 = vst.msk [vmem:[#allocation3] sm:$0xff] %vm1657, %v2346
        %2349 = vrot.lane.b32.xlu0 %v2008, 104
        %v2350 = vpop.permute.xlu0 %2349
        %2351 = vrot.lane.b32.xlu0 %v2009, 104
        %v2352 = vpop.permute.xlu0 %2351
        %v2354 = vsel %vm1317, %v2350, 0
        %v2357 = vsel %vm1317, %v2352, 0
        %2359 = vmatprep.subr.bf16.mxu0 0
        %2360 = vmatpush1.bf16.xpose.msra.mxu0 %v2357
        %2361 = vmatprep.subr.bf16.mxu0 0
        %2362 = vmatpush1.bf16.xpose.msra.mxu0 0
        %2363 = vmatprep.subr.bf16.mxu0 0
        %2364 = vmatpush1.bf16.xpose.msra.mxu0 0
        %2365 = vmatprep.subr.bf16.mxu0 0
        %2366 = vmatpush1.bf16.xpose.msra.mxu0 0
        %2367 = vmatprep.subr.bf16.mxu0 0
        %2368 = vmatpush1.bf16.xpose.msra.mxu0 0
        %2369 = vmatprep.subr.bf16.mxu0 0
        %2370 = vmatpush1.bf16.xpose.msra.mxu0 0
        %2371 = vmatprep.subr.bf16.mxu0 0
        %2372 = vmatpush1.bf16.xpose.msra.mxu0 0
        %2373 = vmatprep.subr.bf16.mxu0 0
        %2374 = vmatpush1.bf16.xpose.msra.mxu0 0
        %2375 = vmatprep.subr.bf16.mxu0 0
        %2376 = vmatpush1.bf16.xpose.msra.mxu0 0
        %2377 = vmatprep.subr.bf16.mxu0 0
        %2378 = vmatpush1.bf16.xpose.msra.mxu0 0
        %2379 = vmatprep.subr.bf16.mxu0 0
        %2380 = vmatpush1.bf16.xpose.msra.mxu0 0
        %2381 = vmatprep.subr.bf16.mxu0 0
        %2382 = vmatpush1.bf16.xpose.msra.mxu0 0
        %2383 = vmatprep.subr.bf16.mxu0 0
        %2384 = vmatpush1.bf16.xpose.msra.mxu0 0
        %2385 = vmatprep.subr.bf16.mxu0 0
        %2386 = vmatpush1.bf16.xpose.msra.mxu0 0
        %2387 = vmatprep.subr.bf16.mxu0 0
        %2388 = vmatpush1.bf16.xpose.msra.mxu0 0
        %2389 = vmatprep.subr.bf16.mxu0 0
        %2390 = vmatpush1.bf16.xpose.msra.mxu0 0
        %2391 = vmatprep.mubr.bf16.mxu0 0
        %2392 = vmatmul.mubr.bf16.gmra.mrb[0].mxu0 %v2354
        %v2393 = vpop.f32.mrb[0].mxu0
        %v2394 = vadd.f32 %v1205, %v2393
        %v2395 = vpop.f32.mrb[0].mxu0
        %v2396 = vpop.f32.mrb[0].mxu0
        %v2397 = vpop.f32.mrb[0].mxu0
        %2398 = vdwg.mxu0
        %v2399 = vsel %vm1317, %v2394, -inf
        %2400 = vmax.xlane.f32.xlu0 %v2399
        %v2401 = vpop.xlane.xlu0 %2400
        %v2402 = vsub.f32 %v2394, %v2401
        %v2403 = vmul.f32 %v2402, 1.442695
        %v2404 = vpow.pop %v2403
        %v2405 = vsel %vm1317, %v2404, 0.0
        %2406 = vadd.xlane.f32.xlu0 %v2405
        %v2407 = vpop.xlane.xlu0 %2406
        %v2408 = vrcp.pop %v2407
        %v2409 = vmul.f32 %v2404, %v2408
        %v2410 = vpack.c.bf16 %v2409, %v2409
        %2411 = vrot.lane.b32.xlu0 %v2009, 72
        %v2412 = vpop.permute.xlu0 %2411
        %v2414 = vsel %vm1317, %v2410, 0
        %v2417 = vsel %vm1381, %v2412, 0
        %2419 = vmatprep.subr.bf16.mxu0 0
        %2420 = vmatpush1.bf16.msra.mxu0 %v2417
        %2421 = vmatprep.subr.bf16.mxu0 0
        %2422 = vmatpush1.bf16.msra.mxu0 0
        %2423 = vmatprep.subr.bf16.mxu0 0
        %2424 = vmatpush1.bf16.msra.mxu0 0
        %2425 = vmatprep.subr.bf16.mxu0 0
        %2426 = vmatpush1.bf16.msra.mxu0 0
        %2427 = vmatprep.subr.bf16.mxu0 0
        %2428 = vmatpush1.bf16.msra.mxu0 0
        %2429 = vmatprep.subr.bf16.mxu0 0
        %2430 = vmatpush1.bf16.msra.mxu0 0
        %2431 = vmatprep.subr.bf16.mxu0 0
        %2432 = vmatpush1.bf16.msra.mxu0 0
        %2433 = vmatprep.subr.bf16.mxu0 0
        %2434 = vmatpush1.bf16.msra.mxu0 0
        %2435 = vmatprep.subr.bf16.mxu0 0
        %2436 = vmatpush1.bf16.msra.mxu0 0
        %2437 = vmatprep.subr.bf16.mxu0 0
        %2438 = vmatpush1.bf16.msra.mxu0 0
        %2439 = vmatprep.subr.bf16.mxu0 0
        %2440 = vmatpush1.bf16.msra.mxu0 0
        %2441 = vmatprep.subr.bf16.mxu0 0
        %2442 = vmatpush1.bf16.msra.mxu0 0
        %2443 = vmatprep.subr.bf16.mxu0 0
        %2444 = vmatpush1.bf16.msra.mxu0 0
        %2445 = vmatprep.subr.bf16.mxu0 0
        %2446 = vmatpush1.bf16.msra.mxu0 0
        %2447 = vmatprep.subr.bf16.mxu0 0
        %2448 = vmatpush1.bf16.msra.mxu0 0
        %2449 = vmatprep.subr.bf16.mxu0 0
        %2450 = vmatpush1.bf16.msra.mxu0 0
        %2451 = vmatprep.mubr.bf16.mxu0 0
        %2452 = vmatmul.mubr.bf16.gmra.mrb[0].mxu0 %v2414
        %v2453 = vpop.f32.mrb[0].mxu0
        %v2454 = vadd.f32 0.0, %v2453
        %v2455 = vpop.f32.mrb[0].mxu0
        %v2456 = vpop.f32.mrb[0].mxu0
        %v2457 = vpop.f32.mrb[0].mxu0
        %2458 = vdwg.mxu0
        %2460 = vrot.lane.b32.xlu0 %v2454, 24
        %v2461 = vpop.permute.xlu0 %2460
        %2463 = vst.msk [vmem:[#allocation3] sm:$0xff] %vm1773, %v2461
        %v2464 = vld [vmem:[#allocation3] sm:$0xff]
        %v2465 = vpack.c.bf16 %v2464, %v2464
        %v2467 = vlaneseq
        %v2468 = vshrl.u32 %v2467, 7
        %v2469 = vsub.s32 0, %v2468
        %v2470 = vrot.slane %v2006, %v2469
        %v2476 = vunpack.c.l.b16 %v2002
        %v2477 = vunpack.c.l.b16 %v2003
        %v2478 = vunpack.c.l.b16 %v2004
        %v2479 = vunpack.c.l.b16 %v2005
        %v2480 = vpack.c.b16 %v2477, %v2476
        %v2481 = vpack.c.b16 %v2479, %v2478
        %v2485 = vsel %vm1210, %v2465, 0
        %2487 = vmatprep.subr.bf16.mxu0 0
        %2488 = vmatpush1.bf16.msra.mxu0 %v2480
        %2489 = vmatprep.subr.bf16.mxu0 0
        %2490 = vmatpush1.bf16.msra.mxu0 %v2481
        %2491 = vmatprep.subr.bf16.mxu0 0
        %2492 = vmatpush1.bf16.msra.mxu0 0
        %2493 = vmatprep.subr.bf16.mxu0 0
        %2494 = vmatpush1.bf16.msra.mxu0 0
        %2495 = vmatprep.subr.bf16.mxu0 0
        %2496 = vmatpush1.bf16.msra.mxu0 0
        %2497 = vmatprep.subr.bf16.mxu0 0
        %2498 = vmatpush1.bf16.msra.mxu0 0
        %2499 = vmatprep.subr.bf16.mxu0 0
        %2500 = vmatpush1.bf16.msra.mxu0 0
        %2501 = vmatprep.subr.bf16.mxu0 0
        %2502 = vmatpush1.bf16.msra.mxu0 0
        %2503 = vmatprep.subr.bf16.mxu0 0
        %2504 = vmatpush1.bf16.msra.mxu0 0
        %2505 = vmatprep.subr.bf16.mxu0 0
        %2506 = vmatpush1.bf16.msra.mxu0 0
        %2507 = vmatprep.subr.bf16.mxu0 0
        %2508 = vmatpush1.bf16.msra.mxu0 0
        %2509 = vmatprep.subr.bf16.mxu0 0
        %2510 = vmatpush1.bf16.msra.mxu0 0
        %2511 = vmatprep.subr.bf16.mxu0 0
        %2512 = vmatpush1.bf16.msra.mxu0 0
        %2513 = vmatprep.subr.bf16.mxu0 0
        %2514 = vmatpush1.bf16.msra.mxu0 0
        %2515 = vmatprep.subr.bf16.mxu0 0
        %2516 = vmatpush1.bf16.msra.mxu0 0
        %2517 = vmatprep.subr.bf16.mxu0 0
        %2518 = vmatpush1.bf16.msra.mxu0 0
        %2519 = vmatprep.mubr.bf16.mxu0 0
        %2520 = vmatmul.mubr.bf16.gmra.mrb[0].mxu0 %v2485
        %v2521 = vpop.f32.mrb[0].mxu0
        %v2522 = vadd.f32 %v2470, %v2521
        %v2523 = vpop.f32.mrb[0].mxu0
        %v2524 = vpop.f32.mrb[0].mxu0
        %v2525 = vpop.f32.mrb[0].mxu0
        %2526 = vdwg.mxu0
        %v2527 = vadd.f32 %v1838, %v2522
        %v2528 = vld [vmem:[%s1134] sm:$0x1]
        %v2529 = vld [vmem:[%s1137] sm:$0x1]
        %v2530 = vld [vmem:[%s1142] sm:$0xf]
        %v2531 = vld [vmem:[%s1142 + $0x4] sm:$0xf]
        %v2532 = vld [vmem:[%s1142 + $0x8] sm:$0xf]
        %v2533 = vld [vmem:[%s1142 + $0xc] sm:$0xf]
        %v2534 = vld [vmem:[%s1145] sm:$0x1]
        %v2535 = vld [vmem:[%s1150] sm:$0xf]
        %v2536 = vld [vmem:[%s1150 + $0x4] sm:$0xf]
        %v2537 = vld [vmem:[%s1150 + $0x8] sm:$0xf]
        %v2538 = vld [vmem:[%s1150 + $0xc] sm:$0xf]
        %v2539 = vld [vmem:[%s1150 + $0x10] sm:$0xf]
        %v2540 = vld [vmem:[%s1150 + $0x14] sm:$0xf]
        %v2541 = vld [vmem:[%s1150 + $0x18] sm:$0xf]
        %v2542 = vld [vmem:[%s1150 + $0x1c] sm:$0xf]
        %v2543 = vld [vmem:[%s1153] sm:$0x1]
        %v2544 = vsel %vm1210, %v2527, 0.0
        %2545 = vadd.xlane.f32.xlu0 %v2544
        %v2546 = vpop.xlane.xlu0 %2545
        %v2547 = vmul.f32 %v2546, %v1214
        %v2548 = vsub.f32 %v2527, %v2547
        %v2549 = vmul.f32 %v2548, %v2548
        %v2550 = vsel %vm1210, %v2549, 0.0
        %2551 = vadd.xlane.f32.xlu0 %v2550
        %v2552 = vpop.xlane.xlu0 %2551
        %v2553 = vmul.f32 %v2552, %v1214
        %v2554 = vadd.f32 %v2553, 1e-05
        %v2555 = vrsqrt.pop %v2554
        %v2556 = vmul.f32 %v2548, %v2555
        %v2558 = vlaneseq
        %v2559 = vshrl.u32 %v2558, 7
        %v2560 = vsub.s32 0, %v2559
        %v2561 = vrot.slane %v2528, %v2560
        %v2563 = vmul.f32 %v2556, %v2561
        %v2565 = vlaneseq
        %v2566 = vshrl.u32 %v2565, 7
        %v2567 = vsub.s32 0, %v2566
        %v2568 = vrot.slane %v2529, %v2567
        %v2570 = vadd.f32 %v2563, %v2568
        %v2571 = vpack.c.bf16 %v2570, %v2570
        %v2573 = vlaneseq
        %v2574 = vshrl.u32 %v2573, 7
        %v2575 = vsub.s32 0, %v2574
        %v2576 = vrot.slane %v2534, %v2575
        %v2582 = vunpack.c.l.b16 %v2530
        %v2583 = vunpack.c.l.b16 %v2531
        %v2584 = vunpack.c.l.b16 %v2532
        %v2585 = vunpack.c.l.b16 %v2533
        %v2586 = vpack.c.b16 %v2583, %v2582
        %v2587 = vpack.c.b16 %v2585, %v2584
        %v2591 = vsel %vm1210, %v2571, 0
        %2593 = vmatprep.subr.bf16.mxu0 0
        %2594 = vmatpush1.bf16.msra.mxu0 %v2586
        %2595 = vmatprep.subr.bf16.mxu0 0
        %2596 = vmatpush1.bf16.msra.mxu0 %v2587
        %2597 = vmatprep.subr.bf16.mxu0 0
        %2598 = vmatpush1.bf16.msra.mxu0 0
        %2599 = vmatprep.subr.bf16.mxu0 0
        %2600 = vmatpush1.bf16.msra.mxu0 0
        %2601 = vmatprep.subr.bf16.mxu0 0
        %2602 = vmatpush1.bf16.msra.mxu0 0
        %2603 = vmatprep.subr.bf16.mxu0 0
        %2604 = vmatpush1.bf16.msra.mxu0 0
        %2605 = vmatprep.subr.bf16.mxu0 0
        %2606 = vmatpush1.bf16.msra.mxu0 0
        %2607 = vmatprep.subr.bf16.mxu0 0
        %2608 = vmatpush1.bf16.msra.mxu0 0
        %2609 = vmatprep.subr.bf16.mxu0 0
        %2610 = vmatpush1.bf16.msra.mxu0 0
        %2611 = vmatprep.subr.bf16.mxu0 0
        %2612 = vmatpush1.bf16.msra.mxu0 0
        %2613 = vmatprep.subr.bf16.mxu0 0
        %2614 = vmatpush1.bf16.msra.mxu0 0
        %2615 = vmatprep.subr.bf16.mxu0 0
        %2616 = vmatpush1.bf16.msra.mxu0 0
        %2617 = vmatprep.subr.bf16.mxu0 0
        %2618 = vmatpush1.bf16.msra.mxu0 0
        %2619 = vmatprep.subr.bf16.mxu0 0
        %2620 = vmatpush1.bf16.msra.mxu0 0
        %2621 = vmatprep.subr.bf16.mxu0 0
        %2622 = vmatpush1.bf16.msra.mxu0 0
        %2623 = vmatprep.subr.bf16.mxu0 0
        %2624 = vmatpush1.bf16.msra.mxu0 0
        %2625 = vmatprep.mubr.bf16.mxu0 0
        %2626 = vmatmul.mubr.bf16.gmra.mrb[0].mxu0 %v2591
        %v2627 = vpop.f32.mrb[0].mxu0
        %v2628 = vadd.f32 %v2576, %v2627
        %v2629 = vpop.f32.mrb[0].mxu0
        %v2630 = vpop.f32.mrb[0].mxu0
        %v2631 = vpop.f32.mrb[0].mxu0
        %2632 = vdwg.mxu0
        %v2633 = vmul.f32 %v2628, %v2628
        %v2634 = vmul.f32 %v2628, %v2633
        %v2635 = vmul.f32 %v2634, 0.044715
        %v2636 = vadd.f32 %v2628, %v2635
        %v2637 = vmul.f32 %v2636, 0.7978846
        %v2638 = vtanh.pop %v2637
        %v2639 = vadd.f32 %v2638, 1.0
        %v2640 = vmul.f32 %v2639, 0.5
        %v2641 = vmul.f32 %v2628, %v2640
        %v2642 = vpack.c.bf16 %v2641, %v2641
        %v2644 = vlaneseq
        %v2645 = vshrl.u32 %v2644, 7
        %v2646 = vsub.s32 0, %v2645
        %v2647 = vrot.slane %v2543, %v2646
        %v2657 = vunpack.c.l.b16 %v2535
        %v2658 = vunpack.c.l.b16 %v2536
        %v2659 = vunpack.c.l.b16 %v2537
        %v2660 = vunpack.c.l.b16 %v2538
        %v2661 = vunpack.c.l.b16 %v2539
        %v2662 = vunpack.c.l.b16 %v2540
        %v2663 = vunpack.c.l.b16 %v2541
        %v2664 = vunpack.c.l.b16 %v2542
        %v2665 = vpack.c.b16 %v2658, %v2657
        %v2666 = vpack.c.b16 %v2660, %v2659
        %v2667 = vpack.c.b16 %v2662, %v2661
        %v2668 = vpack.c.b16 %v2664, %v2663
        %vm2673 = vcmask 523264
        %v2675 = vsel %vm2673, %v2642, 0
        %2677 = vmatprep.subr.bf16.mxu0 0
        %2678 = vmatpush1.bf16.msra.mxu0 %v2665
        %2679 = vmatprep.subr.bf16.mxu0 0
        %2680 = vmatpush1.bf16.msra.mxu0 %v2666
        %2681 = vmatprep.subr.bf16.mxu0 0
        %2682 = vmatpush1.bf16.msra.mxu0 %v2667
        %2683 = vmatprep.subr.bf16.mxu0 0
        %2684 = vmatpush1.bf16.msra.mxu0 %v2668
        %2685 = vmatprep.subr.bf16.mxu0 0
        %2686 = vmatpush1.bf16.msra.mxu0 0
        %2687 = vmatprep.subr.bf16.mxu0 0
        %2688 = vmatpush1.bf16.msra.mxu0 0
        %2689 = vmatprep.subr.bf16.mxu0 0
        %2690 = vmatpush1.bf16.msra.mxu0 0
        %2691 = vmatprep.subr.bf16.mxu0 0
        %2692 = vmatpush1.bf16.msra.mxu0 0
        %2693 = vmatprep.subr.bf16.mxu0 0
        %2694 = vmatpush1.bf16.msra.mxu0 0
        %2695 = vmatprep.subr.bf16.mxu0 0
        %2696 = vmatpush1.bf16.msra.mxu0 0
        %2697 = vmatprep.subr.bf16.mxu0 0
        %2698 = vmatpush1.bf16.msra.mxu0 0
        %2699 = vmatprep.subr.bf16.mxu0 0
        %2700 = vmatpush1.bf16.msra.mxu0 0
        %2701 = vmatprep.subr.bf16.mxu0 0
        %2702 = vmatpush1.bf16.msra.mxu0 0
        %2703 = vmatprep.subr.bf16.mxu0 0
        %2704 = vmatpush1.bf16.msra.mxu0 0
        %2705 = vmatprep.subr.bf16.mxu0 0
        %2706 = vmatpush1.bf16.msra.mxu0 0
        %2707 = vmatprep.subr.bf16.mxu0 0
        %2708 = vmatpush1.bf16.msra.mxu0 0
        %2709 = vmatprep.mubr.bf16.mxu0 0
        %2710 = vmatmul.mubr.bf16.gmra.mrb[0].mxu0 %v2675
        %v2711 = vpop.f32.mrb[0].mxu0
        %v2712 = vadd.f32 %v2647, %v2711
        %v2713 = vpop.f32.mrb[0].mxu0
        %v2714 = vpop.f32.mrb[0].mxu0
        %v2715 = vpop.f32.mrb[0].mxu0
        %2716 = vdwg.mxu0
        %v2717 = vadd.f32 %v2527, %v2712
        %2718 = vst.msk [vmem:[#allocation2] sm:$0xff] %vm1210, %v2717
        %p2719 = scmp.eq.s32.totalorder %s50, 1
        // Predicated region
        $region133: #{_lambda_.3} parent=123 // pred_check
          %p2720 = pneg %p2719
        $region134: #{_lambda_.3} parent=123 // pred_check_branch
          %2722 = sbr.rel (%p2720) target = $region136
        $region135: #{_lambda_.3} parent=123 // pred_region
          %v2723 = vld [vmem:[#allocation2] sm:$0xff]
          %v2724 = vld [vmem:[%s25] sm:$0x1]
          %v2725 = vld [vmem:[#allocation6] sm:$0x1]
          %v2726 = vsel %vm1210, %v2723, 0.0
          %2727 = vadd.xlane.f32.xlu0 %v2726
          %v2728 = vpop.xlane.xlu0 %2727
          %v2729 = vmul.f32 %v2728, %v1214
          %v2730 = vsub.f32 %v2723, %v2729
          %v2731 = vmul.f32 %v2730, %v2730
          %v2732 = vsel %vm1210, %v2731, 0.0
          %2733 = vadd.xlane.f32.xlu0 %v2732
          %v2734 = vpop.xlane.xlu0 %2733
          %v2735 = vmul.f32 %v2734, %v1214
          %v2736 = vadd.f32 %v2735, 1e-05
          %v2737 = vrsqrt.pop %v2736
          %v2738 = vmul.f32 %v2730, %v2737
          %v2740 = vlaneseq
          %v2741 = vshrl.u32 %v2740, 7
          %v2742 = vsub.s32 0, %v2741
          %v2743 = vrot.slane %v2724, %v2742
          %v2745 = vmul.f32 %v2738, %v2743
          %v2747 = vlaneseq
          %v2748 = vshrl.u32 %v2747, 7
          %v2749 = vsub.s32 0, %v2748
          %v2750 = vrot.slane %v2725, %v2749
          %v2752 = vadd.f32 %v2745, %v2750
          %2753 = vst.msk [vmem:[%s1157] sm:$0xff] %vm1210, %v2752
        $region136: #{_lambda_.3} parent=123 // pred_fallthru
          _
        %p2754 = scmp.lt.s32.totalorder %s49, 1
        %s2755 = scalar_select %p2754, %s49, 1
        %s2756 = smul.addr %s2755, 8
        %s2757 = scalar_lea.vmem %s27, %s2756
        // Predicated region
        $region137: #{_lambda_.3} parent=123 // pred_check
          %p2758 = pneg %p731
        $region138: #{_lambda_.3} parent=123 // pred_check_branch
          %2760 = sbr.rel (%p2758) target = $region140
        $region139: #{_lambda_.3} parent=123 // pred_region
          _
        $region140: #{_lambda_.3} parent=123 // pred_fallthru
          _
      $region124: #{_lambda_.3} parent=5 // pred_fallthru
        _
      %p2761 = scmp.le.s32.totalorder 2, %s40
      // Predicated region
      $region141: #{_lambda_.3} parent=5 // pred_check
        %p2762 = pneg %p2761
      $region142: #{_lambda_.3} parent=5 // pred_check_branch
        %2764 = sbr.rel (%p2762) target = $region144
      $region143: #{_lambda_.3} parent=5 // pred_region
        %s2765 = ssub.s32 %s40, 2
        // Predicated region
        $region145: #{_lambda_.3} parent=143 // pred_check
          %p2766 = pneg %p737
        $region146: #{_lambda_.3} parent=143 // pred_check_branch
          %2768 = sbr.rel (%p2766) target = $region148
        $region147: #{_lambda_.3} parent=143 // pred_region
          %p2769 = scmp.lt.s32.totalorder %s51, 1
          %s2770 = scalar_select %p2769, %s51, 1
          %s2771 = smul.addr %s2770, 8
          %s2772 = scalar_lea.vmem %s27, %s2771
        $region148: #{_lambda_.3} parent=143 // pred_fallthru
          _
      $region144: #{_lambda_.3} parent=5 // pred_fallthru
        _
    $region6: #{_lambda_.3} parent=1 // loop_footer
      %s44 = sadd.s32 1, %s40
    $region7: #{_lambda_.3} parent=1 // loop_footer_branch
      %39 = sbr.rel target = $region3
    $region8: #{_lambda_.3} parent=1 // loop_exit
      _
    %2773 = vsyncpa [#allocation7], 1
    %s2774 = scalar_lea.sflag [#allocation7], 1
    %2775 = vsyncpa %s2774, 1

</llo_original>
